<compile_context>
chip_gen: v5e
topology: v5e:2x2
jax: 0.10.0
libtpu: 0.0.40
codegen_flags: <defaults>
</compile_context>

<pallas_src>
import functools
import numpy as np

import jax
import jax.numpy as jnp
from jax.experimental import pallas as pl
from jax.experimental.pallas import tpu as pltpu


def _round_up(v, m):
    return ((v + m - 1) // m) * m


# --------------------------------------------------------------------------- #
# Fused Pallas kernel: y = clamp(gain * lrelu(wscale * (x @ w) + b))           #
# --------------------------------------------------------------------------- #
def _mm_bias_act_kernel(x_ref, w_ref, b_ref, o_ref, *, wscale, lrelu, gain, clamp):
    acc = jnp.dot(x_ref[...], w_ref[...], preferred_element_type=jnp.float32)
    if wscale != 1.0:                       # folded runtime weight gain (VPU, free)
        acc = acc * wscale
    acc = acc + b_ref[...]
    if lrelu:
        acc = jnp.where(acc >= 0.0, acc, 0.2 * acc)
    if gain != 1.0:
        acc = acc * gain
    if clamp is not None:
        acc = jnp.clip(acc, -clamp, clamp)
    o_ref[...] = acc


_TM = 256      # rows per grid step


def matmul_bias_act(x, w, b=None, *, act='linear', wscale=1.0, gain=1.0, clamp=None):
    """Fused wscale*(x @ w) + b -> leaky_relu -> *gain -> clamp on the MXU."""
    M, K = x.shape
    K2, N = w.shape
    assert K == K2
    xb = x.astype(jnp.bfloat16)             # bf16 MXU operands, fp32 accumulation
    wb = w.astype(jnp.bfloat16)
    if b is None:
        b = jnp.zeros((N,), jnp.float32)
    b2 = b.reshape(1, N).astype(jnp.float32)

    if M <= _TM:
        tm, Mp = M, M                       # single block == full array: always legal
    else:
        tm = _TM
        Mp = _round_up(M, _TM)              # padded-cdiv tiling keeps VMEM bounded
        if Mp != M:
            xb = jnp.pad(xb, ((0, Mp - M), (0, 0)))
    grid = (Mp // tm,)

    # Explicit VMEM budget from (padded) tile sizes with 2x double-buffer margin.
    kp_l, kp_s, np_l = _round_up(K, 128), _round_up(K, 16), _round_up(N, 128)
    tile_bytes = 2 * (tm * kp_l * 2 + kp_s * np_l * 2 + 8 * np_l * 4 + tm * np_l * 4)
    vmem_limit = int(min(max(2 * tile_bytes + (4 << 20), 32 << 20), 64 << 20))

    kernel = functools.partial(
        _mm_bias_act_kernel,
        wscale=float(wscale),
        lrelu=(act == 'lrelu'),
        gain=float(gain),
        clamp=None if clamp is None else float(clamp))
    out = pl.pallas_call(
        kernel,
        out_shape=jax.ShapeDtypeStruct((Mp, N), jnp.float32),
        grid=grid,
        in_specs=[pl.BlockSpec((tm, K), lambda i: (i, 0)),
                  pl.BlockSpec((K, N), lambda i: (0, 0)),
                  pl.BlockSpec((1, N), lambda i: (0, 0))],
        out_specs=pl.BlockSpec((tm, N), lambda i: (i, 0)),
        compiler_params=pltpu.CompilerParams(
            dimension_semantics=("parallel",),
            vmem_limit_bytes=vmem_limit),
    )(xb, wb, b2)
    return out if Mp == M else out[:M]


# --------------------------------------------------------------------------- #
# StyleGAN2 layer helpers (glue in JAX, hot path in the Pallas kernels)        #
# --------------------------------------------------------------------------- #
_FIR = np.array([1.0, 3.0, 3.0, 1.0], np.float32)
_FIR = _FIR / _FIR.sum()


def _blur2d(x, pad):
    """Separable [1,3,3,1]/8 low-pass (upfirdn2d) with zero padding, NHWC."""
    n, h, w, c = x.shape
    xp = jnp.pad(x, ((0, 0), (pad, pad), (pad, pad), (0, 0)))
    ht = h + 2 * pad - 3
    y = sum(float(_FIR[t]) * xp[:, t:t + ht, :, :] for t in range(4))
    wt = w + 2 * pad - 3
    y = sum(float(_FIR[t]) * y[:, :, t:t + wt, :] for t in range(4))
    return y


def conv2d_layer(x, w_hwio, b, *, down=1, act='lrelu', conv_clamp=None, gain=1.0):
    """StyleGAN2 Conv2dLayer forward (NHWC activations, HWIO weights)."""
    n, h, wdt, cin = x.shape
    kh, kw, cin_w, cout = w_hwio.shape
    assert cin == cin_w and kh == kw
    k = kh
    wscale = 1.0 / np.sqrt(cin * k * k)     # folded into the kernel, no HBM rewrite
    act_gain = (np.sqrt(2.0) if act == 'lrelu' else 1.0) * gain
    clamp = None if conv_clamp is None else conv_clamp * gain

    if k == 1:
        if down == 2:                                      # blur then decimate
            x = _blur2d(x, pad=1)[:, ::2, ::2, :]
        n, ho, wo, _ = x.shape
        xm = x.reshape(n * ho * wo, cin)
        y = matmul_bias_act(xm, w_hwio.reshape(cin, cout), b,
                            act=act, wscale=wscale, gain=act_gain, clamp=clamp)
        return y.reshape(n, ho, wo, cout)

    assert k == 3
    if down == 1:
        xp = jnp.pad(x, ((0, 0), (1, 1), (1, 1), (0, 0)))
        ho, wo, stride = h, wdt, 1
    else:                                                  # blur then strided conv
        xp = _blur2d(x, pad=2)
        ho, wo, stride = h // 2, wdt // 2, 2
    # TODO(synk): fuse the 9-tap im2col into the kernel's K-reduction (halo-aware
    # manual DMA / data-dependent index_map) to avoid the 9x activation
    # materialization at production resolutions; kept as bf16 XLA patch extraction.
    xp = xp.astype(jnp.bfloat16)
    patches = [xp[:, ky:ky + stride * (ho - 1) + 1:stride,
                  kx:kx + stride * (wo - 1) + 1:stride, :]
               for ky in range(3) for kx in range(3)]
    xm = jnp.concatenate(patches, axis=-1).reshape(n * ho * wo, 9 * cin)
    y = matmul_bias_act(xm, w_hwio.reshape(9 * cin, cout), b,
                        act=act, wscale=wscale, gain=act_gain, clamp=clamp)
    return y.reshape(n, ho, wo, cout)


def minibatch_std(x, group_size=4, num_channels=1):
    """MinibatchStdLayer on NHWC."""
    n, h, w, c = x.shape
    g = min(group_size, n)
    f = num_channels
    cc = c // f
    y = x.reshape(g, n // g, h, w, f, cc)
    y = y - jnp.mean(y, axis=0)
    y = jnp.mean(y * y, axis=0)
    y = jnp.sqrt(y + 1e-8)
    y = jnp.mean(y, axis=(1, 2, 4))                      # [n//g, f]
    y = jnp.tile(y.reshape(n // g, 1, 1, f), (g, h, w, 1))
    return jnp.concatenate([x, y], axis=-1)


# --------------------------------------------------------------------------- #
# Fused mapping network: embed -> normalize -> 8x lrelu FC in ONE pallas_call  #
# --------------------------------------------------------------------------- #
def _mapping_kernel(c_ref, ew_ref, eb_ref, fw_ref, fb_ref, o_ref, *,
                    num_layers, c_dim, dim):
    z = jnp.dot(c_ref[...], ew_ref[...], preferred_element_type=jnp.float32)
    z = z * float(1.0 / np.sqrt(c_dim)) + eb_ref[...]          # embed (linear)
    z = z * jax.lax.rsqrt(jnp.mean(z * z, axis=1, keepdims=True) + 1e-8)
    fc_scale = float(1.0 / np.sqrt(dim))
    sqrt2 = float(np.sqrt(2.0))
    for i in range(num_layers):              # unrolled: all weights already in VMEM
        zi = jnp.dot(z.astype(jnp.bfloat16), fw_ref[i],
                     preferred_element_type=jnp.float32)
        zi = zi * fc_scale + fb_ref[i]
        z = jnp.where(zi >= 0.0, zi, 0.2 * zi) * sqrt2
    o_ref[...] = z


def mapping_network(c, mp, *, c_dim, cmap_dim, num_layers=8):
    fw = jnp.stack([mp[f'fc{i}_w'] for i in range(num_layers)], 0).astype(jnp.bfloat16)
    fb = jnp.stack([mp[f'fc{i}_b'] for i in range(num_layers)], 0)
    fb = fb.reshape(num_layers, 1, cmap_dim).astype(jnp.float32)
    kernel = functools.partial(_mapping_kernel, num_layers=num_layers,
                               c_dim=c_dim, dim=cmap_dim)
    return pl.pallas_call(
        kernel,
        out_shape=jax.ShapeDtypeStruct((c.shape[0], cmap_dim), jnp.float32),
    )(c.astype(jnp.bfloat16),
      mp['embed_w'].astype(jnp.bfloat16),
      mp['embed_b'].reshape(1, cmap_dim).astype(jnp.float32),
      fw, fb)


# --------------------------------------------------------------------------- #
# Fused epilogue head: fc -> out -> (cmap projection) in ONE pallas_call       #
# --------------------------------------------------------------------------- #
def _epilogue_head_kernel(x_ref, fcw_ref, fcb_ref, ow_ref, ob_ref, *rest,
                          k_fc, k_out, cmap_dim):
    if cmap_dim > 0:
        cmap_ref, o_ref = rest
    else:
        (o_ref,) = rest
    h = jnp.dot(x_ref[...], fcw_ref[...], preferred_element_type=jnp.float32)
    h = h * float(1.0 / np.sqrt(k_fc)) + fcb_ref[...]
    h = jnp.where(h >= 0.0, h, 0.2 * h) * float(np.sqrt(2.0))      # lrelu fc
    h = jnp.dot(h.astype(jnp.bfloat16), ow_ref[...],
                preferred_element_type=jnp.float32)
    h = h * float(1.0 / np.sqrt(k_out)) + ob_ref[...]               # linear out
    if cmap_dim > 0:
        h = jnp.sum(h * cmap_ref[...], axis=1, keepdims=True) \
            * float(1.0 / np.sqrt(cmap_dim))
    o_ref[...] = h


def epilogue_head(xf, fc_w, fc_b, out_w, out_b, cmap, *, cmap_dim):
    B = xf.shape[0]
    out_dim = 1 if cmap_dim > 0 else out_w.shape[1]
    kernel = functools.partial(_epilogue_head_kernel, k_fc=fc_w.shape[0],
                               k_out=out_w.shape[0], cmap_dim=cmap_dim)
    args = [xf.astype(jnp.bfloat16),
            fc_w.astype(jnp.bfloat16),
            fc_b.reshape(1, -1).astype(jnp.float32),
            out_w.astype(jnp.bfloat16),
            out_b.reshape(1, -1).astype(jnp.float32)]
    if cmap_dim > 0:
        args.append(cmap.astype(jnp.float32))
    return pl.pallas_call(
        kernel,
        out_shape=jax.ShapeDtypeStruct((B, out_dim), jnp.float32),
    )(*args)


# --------------------------------------------------------------------------- #
# Parameter construction (deterministic, synthetic)                            #
# --------------------------------------------------------------------------- #
def build_dual_discriminator(key, *, c_dim=8, img_resolution=16, img_channels=3,
                             channel_base=256, channel_max=512, conv_clamp=256,
                             cmap_dim=None):
    res_log2 = int(np.log2(img_resolution))
    block_resolutions = [2 ** i for i in range(res_log2, 2, -1)]
    channels = {r: min(channel_base // r, channel_max) for r in block_resolutions + [4]}
    if cmap_dim is None:
        cmap_dim = channels[4]
    if c_dim == 0:
        cmap_dim = 0

    keys = iter(jax.random.split(key, 64))

    def nrm(shape):
        return jax.random.normal(next(keys), shape, jnp.float32)

    params = {}
    for res in block_resolutions:
        in_ch = channels[res] if res < img_resolution else 0
        tmp_ch = channels[res]
        out_ch = channels[res // 2]
        blk = {}
        if in_ch == 0:
            blk['fromrgb_w'] = nrm((1, 1, img_channels, tmp_ch))
            blk['fromrgb_b'] = jnp.zeros((tmp_ch,), jnp.float32)
        blk['conv0_w'] = nrm((3, 3, tmp_ch, tmp_ch))
        blk['conv0_b'] = jnp.zeros((tmp_ch,), jnp.float32)
        blk['conv1_w'] = nrm((3, 3, tmp_ch, out_ch))
        blk['conv1_b'] = jnp.zeros((out_ch,), jnp.float32)
        blk['skip_w'] = nrm((1, 1, tmp_ch, out_ch))       # bias=False
        params[f'b{res}'] = blk

    if c_dim > 0:
        mp = {'embed_w': nrm((c_dim, cmap_dim)),
              'embed_b': jnp.zeros((cmap_dim,), jnp.float32)}
        for i in range(8):                                # MappingNetwork num_layers=8
            mp[f'fc{i}_w'] = nrm((cmap_dim, cmap_dim))
            mp[f'fc{i}_b'] = jnp.zeros((cmap_dim,), jnp.float32)
        params['mapping'] = mp

    ch4 = channels[4]
    out_dim = cmap_dim if cmap_dim > 0 else 1
    params['b4'] = {
        'conv_w': nrm((3, 3, ch4 + 1, ch4)),              # +1 for mbstd channel
        'conv_b': jnp.zeros((ch4,), jnp.float32),
        'fc_w': nrm((ch4 * 4 * 4, ch4)),
        'fc_b': jnp.zeros((ch4,), jnp.float32),
        'out_w': nrm((ch4, out_dim)),
        'out_b': jnp.zeros((out_dim,), jnp.float32),
    }

    cfg = dict(c_dim=c_dim, img_resolution=img_resolution,
               block_resolutions=block_resolutions, channels=channels,
               conv_clamp=conv_clamp, cmap_dim=cmap_dim)
    return params, cfg


# --------------------------------------------------------------------------- #
# Forward pass (mirrors DualDiscriminator.forward with architecture='resnet')  #
# --------------------------------------------------------------------------- #
def dual_discriminator_forward(params, cfg, img_nchw, c):
    # TODO(synk): use_fp16 blocks (num_fp16_res) run as bf16-operand/fp32-accum here.
    img = jnp.transpose(img_nchw, (0, 2, 3, 1)).astype(jnp.float32)   # NCHW -> NHWC
    clamp = cfg['conv_clamp']
    x = None
    for res in cfg['block_resolutions']:
        blk = params[f'b{res}']
        in_ch = cfg['channels'][res] if res < cfg['img_resolution'] else 0
        if in_ch == 0:                                     # FromRGB (first block)
            y = conv2d_layer(img, blk['fromrgb_w'], blk['fromrgb_b'],
                             act='lrelu', conv_clamp=clamp)
            x = y if x is None else x + y
            img = None
        # resnet branch (skip blurs the block input; conv1 blurs conv0's output,
        # so the two blurs operate on different tensors and cannot be shared).
        y = conv2d_layer(x, blk['skip_w'], None, down=2, act='linear',
                         conv_clamp=None, gain=np.sqrt(0.5))
        x = conv2d_layer(x, blk['conv0_w'], blk['conv0_b'],
                         act='lrelu', conv_clamp=clamp)
        x = conv2d_layer(x, blk['conv1_w'], blk['conv1_b'], down=2,
                         act='lrelu', conv_clamp=clamp, gain=np.sqrt(0.5))
        x = y + x

    cmap = None
    if cfg['c_dim'] > 0:                                   # MappingNetwork (z_dim=0)
        cmap = mapping_network(c.astype(jnp.float32), params['mapping'],
                               c_dim=cfg['c_dim'], cmap_dim=cfg['cmap_dim'])

    # DiscriminatorEpilogue (resolution 4)
    ep = params['b4']
    x = minibatch_std(x)
    x = conv2d_layer(x, ep['conv_w'], ep['conv_b'], act='lrelu', conv_clamp=clamp)
    xf = x.reshape(x.shape[0], -1)   # flatten (H,W,C); PyTorch order (C,H,W) — synthetic weights
    return epilogue_head(xf, ep['fc_w'], ep['fc_b'], ep['out_w'], ep['out_b'],
                         cmap, cmap_dim=cfg['cmap_dim'])


# --------------------------------------------------------------------------- #
if __name__ == "__main__":
    key = jax.random.PRNGKey(0)
    kp, ki, kc = jax.random.split(key, 3)

    params, cfg = build_dual_discriminator(
        kp, c_dim=8, img_resolution=16, img_channels=3,
        channel_base=256, channel_max=512, conv_clamp=256)

    img = jax.random.normal(ki, (2, 3, 16, 16), jnp.float32)   # PyTorch NCHW input
    c = jax.random.normal(kc, (2, 8), jnp.float32)

    @jax.jit
    def run(img, c):
        return dual_discriminator_forward(params, cfg, img, c)

    out = run(img, c)
    jax.block_until_ready(out)
    assert out.shape == (2, 1), out.shape
    assert bool(jnp.all(jnp.isfinite(out)))
    print("KERNEL_OK")
</pallas_src>

<mosaic_0001>
module attributes {stable_mosaic.version = 11 : i64} {
  func.func @_mm_bias_act_kernel(%arg0: i32, %arg1: memref<256x3xbf16, #tpu.memory_space<vmem>>, %arg2: memref<3x16xbf16, #tpu.memory_space<vmem>>, %arg3: memref<1x16xf32, #tpu.memory_space<vmem>>, %arg4: memref<256x16xf32, #tpu.memory_space<vmem>>) attributes {dimension_semantics = [#tpu.dimension_semantics<parallel>], iteration_bounds = array<i64: 2>, scalar_prefetch = 0 : i64, scratch_operands = 0 : i64, tpu.core_type = #tpu.core_type<tc>, window_params = [{transform_indices = @transform_0, window_bounds = array<i64: 256, 3>}, {pipeline_mode = #tpu.pipeline_mode<synchronous>, transform_indices = @transform_1, window_bounds = array<i64: 3, 16>}, {pipeline_mode = #tpu.pipeline_mode<synchronous>, transform_indices = @transform_2, window_bounds = array<i64: 1, 16>}, {transform_indices = @transform_3, window_bounds = array<i64: 256, 16>}]} {
    %c0 = arith.constant 0 : index
    %c0_0 = arith.constant 0 : index
    %0 = vector.load %arg1[%c0, %c0_0] : memref<256x3xbf16, #tpu.memory_space<vmem>>, vector<256x3xbf16>
    %c0_1 = arith.constant 0 : index
    %c0_2 = arith.constant 0 : index
    %1 = vector.load %arg2[%c0_1, %c0_2] : memref<3x16xbf16, #tpu.memory_space<vmem>>, vector<3x16xbf16>
    %cst = arith.constant dense<0.000000e+00> : vector<256x16xf32>
    %2 = tpu.matmul %0, %1, %cst {dimension_numbers = #tpu.dot_dimension_numbers<[1], [0], [0], [1], [0, 0, 1, 1], [], []>} : vector<256x3xbf16>, vector<3x16xbf16>, vector<256x16xf32> -> vector<256x16xf32>
    %cst_3 = arith.constant 0.577350259 : f32
    %3 = vector.broadcast %cst_3 : f32 to vector<256x16xf32>
    %4 = arith.mulf %2, %3 : vector<256x16xf32>
    %c0_4 = arith.constant 0 : index
    %c0_5 = arith.constant 0 : index
    %5 = vector.load %arg3[%c0_4, %c0_5] : memref<1x16xf32, #tpu.memory_space<vmem>>, vector<1x16xf32>
    %6 = vector.broadcast %5 : vector<1x16xf32> to vector<256x16xf32>
    %7 = arith.addf %4, %6 : vector<256x16xf32>
    %cst_6 = arith.constant 0.000000e+00 : f32
    %8 = vector.broadcast %cst_6 : f32 to vector<256x16xf32>
    %9 = arith.cmpf oge, %7, %8 : vector<256x16xf32>
    %cst_7 = arith.constant 2.000000e-01 : f32
    %10 = vector.broadcast %cst_7 : f32 to vector<256x16xf32>
    %11 = arith.mulf %10, %7 : vector<256x16xf32>
    %12 = arith.select %9, %7, %11 : vector<256x16xi1>, vector<256x16xf32>
    %cst_8 = arith.constant 1.41421354 : f32
    %13 = vector.broadcast %cst_8 : f32 to vector<256x16xf32>
    %14 = arith.mulf %12, %13 : vector<256x16xf32>
    %cst_9 = arith.constant -2.560000e+02 : f32
    %cst_10 = arith.constant 2.560000e+02 : f32
    %15 = vector.broadcast %cst_9 : f32 to vector<256x16xf32>
    %16 = arith.maximumf %15, %14 : vector<256x16xf32>
    %17 = vector.broadcast %cst_10 : f32 to vector<256x16xf32>
    %18 = arith.minimumf %17, %16 : vector<256x16xf32>
    %c0_11 = arith.constant 0 : index
    %c0_12 = arith.constant 0 : index
    %19 = vector.load %arg4[%c0_11, %c0_12] : memref<256x16xf32, #tpu.memory_space<vmem>>, vector<256x16xf32>
    tpu.vector_store %arg4[%c0_11, %c0_12], %18 {strides = array<i32>} : memref<256x16xf32, #tpu.memory_space<vmem>>, vector<256x16xf32>,
    return
  }
  func.func @transform_0(%arg0: i32) -> (i32, i32) {
    %c0_i32 = arith.constant 0 : i32
    %c0_i32_0 = arith.constant 0 : i32
    return %arg0, %c0_i32 : i32, i32
  }
  func.func @transform_1(%arg0: i32) -> (i32, i32) {
    %c0_i32 = arith.constant 0 : i32
    %c0_i32_0 = arith.constant 0 : i32
    %c0_i32_1 = arith.constant 0 : i32
    return %c0_i32, %c0_i32_0 : i32, i32
  }
  func.func @transform_2(%arg0: i32) -> (i32, i32) {
    %c0_i32 = arith.constant 0 : i32
    %c0_i32_0 = arith.constant 0 : i32
    %c0_i32_1 = arith.constant 0 : i32
    return %c0_i32, %c0_i32_0 : i32, i32
  }
  func.func @transform_3(%arg0: i32) -> (i32, i32) {
    %c0_i32 = arith.constant 0 : i32
    %c0_i32_0 = arith.constant 0 : i32
    return %arg0, %c0_i32 : i32, i32
  }
}

module attributes {stable_mosaic.version = 11 : i64} {
  func.func @_mm_bias_act_kernel(%arg0: i32, %arg1: memref<128x16xbf16, #tpu.memory_space<vmem>>, %arg2: memref<16x32xbf16, #tpu.memory_space<vmem>>, %arg3: memref<1x32xf32, #tpu.memory_space<vmem>>, %arg4: memref<128x32xf32, #tpu.memory_space<vmem>>) attributes {dimension_semantics = [#tpu.dimension_semantics<parallel>], iteration_bounds = array<i64: 1>, scalar_prefetch = 0 : i64, scratch_operands = 0 : i64, tpu.core_type = #tpu.core_type<tc>, window_params = [{transform_indices = @transform_0, window_bounds = array<i64: 128, 16>}, {pipeline_mode = #tpu.pipeline_mode<synchronous>, transform_indices = @transform_1, window_bounds = array<i64: 16, 32>}, {pipeline_mode = #tpu.pipeline_mode<synchronous>, transform_indices = @transform_2, window_bounds = array<i64: 1, 32>}, {transform_indices = @transform_3, window_bounds = array<i64: 128, 32>}]} {
    %c0 = arith.constant 0 : index
    %c0_0 = arith.constant 0 : index
    %0 = vector.load %arg1[%c0, %c0_0] : memref<128x16xbf16, #tpu.memory_space<vmem>>, vector<128x16xbf16>
    %c0_1 = arith.constant 0 : index
    %c0_2 = arith.constant 0 : index
    %1 = vector.load %arg2[%c0_1, %c0_2] : memref<16x32xbf16, #tpu.memory_space<vmem>>, vector<16x32xbf16>
    %cst = arith.constant dense<0.000000e+00> : vector<128x32xf32>
    %2 = tpu.matmul %0, %1, %cst {dimension_numbers = #tpu.dot_dimension_numbers<[1], [0], [0], [1], [0, 0, 1, 1], [], []>} : vector<128x16xbf16>, vector<16x32xbf16>, vector<128x32xf32> -> vector<128x32xf32>
    %cst_3 = arith.constant 2.500000e-01 : f32
    %3 = vector.broadcast %cst_3 : f32 to vector<128x32xf32>
    %4 = arith.mulf %2, %3 : vector<128x32xf32>
    %c0_4 = arith.constant 0 : index
    %c0_5 = arith.constant 0 : index
    %5 = vector.load %arg3[%c0_4, %c0_5] : memref<1x32xf32, #tpu.memory_space<vmem>>, vector<1x32xf32>
    %6 = vector.broadcast %5 : vector<1x32xf32> to vector<128x32xf32>
    %7 = arith.addf %4, %6 : vector<128x32xf32>
    %cst_6 = arith.constant 0.707106769 : f32
    %8 = vector.broadcast %cst_6 : f32 to vector<128x32xf32>
    %9 = arith.mulf %7, %8 : vector<128x32xf32>
    %c0_7 = arith.constant 0 : index
    %c0_8 = arith.constant 0 : index
    %10 = vector.load %arg4[%c0_7, %c0_8] : memref<128x32xf32, #tpu.memory_space<vmem>>, vector<128x32xf32>
    tpu.vector_store %arg4[%c0_7, %c0_8], %9 {strides = array<i32>} : memref<128x32xf32, #tpu.memory_space<vmem>>, vector<128x32xf32>,
    return
  }
  func.func @transform_0(%arg0: i32) -> (i32, i32) {
    %c0_i32 = arith.constant 0 : i32
    %c0_i32_0 = arith.constant 0 : i32
    return %arg0, %c0_i32 : i32, i32
  }
  func.func @transform_1(%arg0: i32) -> (i32, i32) {
    %c0_i32 = arith.constant 0 : i32
    %c0_i32_0 = arith.constant 0 : i32
    %c0_i32_1 = arith.constant 0 : i32
    return %c0_i32, %c0_i32_0 : i32, i32
  }
  func.func @transform_2(%arg0: i32) -> (i32, i32) {
    %c0_i32 = arith.constant 0 : i32
    %c0_i32_0 = arith.constant 0 : i32
    %c0_i32_1 = arith.constant 0 : i32
    return %c0_i32, %c0_i32_0 : i32, i32
  }
  func.func @transform_3(%arg0: i32) -> (i32, i32) {
    %c0_i32 = arith.constant 0 : i32
    %c0_i32_0 = arith.constant 0 : i32
    return %arg0, %c0_i32 : i32, i32
  }
}

module attributes {stable_mosaic.version = 11 : i64} {
  func.func @_mm_bias_act_kernel(%arg0: i32, %arg1: memref<256x144xbf16, #tpu.memory_space<vmem>>, %arg2: memref<144x16xbf16, #tpu.memory_space<vmem>>, %arg3: memref<1x16xf32, #tpu.memory_space<vmem>>, %arg4: memref<256x16xf32, #tpu.memory_space<vmem>>) attributes {dimension_semantics = [#tpu.dimension_semantics<parallel>], iteration_bounds = array<i64: 2>, scalar_prefetch = 0 : i64, scratch_operands = 0 : i64, tpu.core_type = #tpu.core_type<tc>, window_params = [{transform_indices = @transform_0, window_bounds = array<i64: 256, 144>}, {pipeline_mode = #tpu.pipeline_mode<synchronous>, transform_indices = @transform_1, window_bounds = array<i64: 144, 16>}, {pipeline_mode = #tpu.pipeline_mode<synchronous>, transform_indices = @transform_2, window_bounds = array<i64: 1, 16>}, {transform_indices = @transform_3, window_bounds = array<i64: 256, 16>}]} {
    %c0 = arith.constant 0 : index
    %c0_0 = arith.constant 0 : index
    %0 = vector.load %arg1[%c0, %c0_0] : memref<256x144xbf16, #tpu.memory_space<vmem>>, vector<256x144xbf16>
    %c0_1 = arith.constant 0 : index
    %c0_2 = arith.constant 0 : index
    %1 = vector.load %arg2[%c0_1, %c0_2] : memref<144x16xbf16, #tpu.memory_space<vmem>>, vector<144x16xbf16>
    %cst = arith.constant dense<0.000000e+00> : vector<256x16xf32>
    %2 = tpu.matmul %0, %1, %cst {dimension_numbers = #tpu.dot_dimension_numbers<[1], [0], [0], [1], [0, 0, 1, 1], [], []>} : vector<256x144xbf16>, vector<144x16xbf16>, vector<256x16xf32> -> vector<256x16xf32>
    %cst_3 = arith.constant 0.0833333358 : f32
    %3 = vector.broadcast %cst_3 : f32 to vector<256x16xf32>
    %4 = arith.mulf %2, %3 : vector<256x16xf32>
    %c0_4 = arith.constant 0 : index
    %c0_5 = arith.constant 0 : index
    %5 = vector.load %arg3[%c0_4, %c0_5] : memref<1x16xf32, #tpu.memory_space<vmem>>, vector<1x16xf32>
    %6 = vector.broadcast %5 : vector<1x16xf32> to vector<256x16xf32>
    %7 = arith.addf %4, %6 : vector<256x16xf32>
    %cst_6 = arith.constant 0.000000e+00 : f32
    %8 = vector.broadcast %cst_6 : f32 to vector<256x16xf32>
    %9 = arith.cmpf oge, %7, %8 : vector<256x16xf32>
    %cst_7 = arith.constant 2.000000e-01 : f32
    %10 = vector.broadcast %cst_7 : f32 to vector<256x16xf32>
    %11 = arith.mulf %10, %7 : vector<256x16xf32>
    %12 = arith.select %9, %7, %11 : vector<256x16xi1>, vector<256x16xf32>
    %cst_8 = arith.constant 1.41421354 : f32
    %13 = vector.broadcast %cst_8 : f32 to vector<256x16xf32>
    %14 = arith.mulf %12, %13 : vector<256x16xf32>
    %cst_9 = arith.constant -2.560000e+02 : f32
    %cst_10 = arith.constant 2.560000e+02 : f32
    %15 = vector.broadcast %cst_9 : f32 to vector<256x16xf32>
    %16 = arith.maximumf %15, %14 : vector<256x16xf32>
    %17 = vector.broadcast %cst_10 : f32 to vector<256x16xf32>
    %18 = arith.minimumf %17, %16 : vector<256x16xf32>
    %c0_11 = arith.constant 0 : index
    %c0_12 = arith.constant 0 : index
    %19 = vector.load %arg4[%c0_11, %c0_12] : memref<256x16xf32, #tpu.memory_space<vmem>>, vector<256x16xf32>
    tpu.vector_store %arg4[%c0_11, %c0_12], %18 {strides = array<i32>} : memref<256x16xf32, #tpu.memory_space<vmem>>, vector<256x16xf32>,
    return
  }
  func.func @transform_0(%arg0: i32) -> (i32, i32) {
    %c0_i32 = arith.constant 0 : i32
    %c0_i32_0 = arith.constant 0 : i32
    return %arg0, %c0_i32 : i32, i32
  }
  func.func @transform_1(%arg0: i32) -> (i32, i32) {
    %c0_i32 = arith.constant 0 : i32
    %c0_i32_0 = arith.constant 0 : i32
    %c0_i32_1 = arith.constant 0 : i32
    return %c0_i32, %c0_i32_0 : i32, i32
  }
  func.func @transform_2(%arg0: i32) -> (i32, i32) {
    %c0_i32 = arith.constant 0 : i32
    %c0_i32_0 = arith.constant 0 : i32
    %c0_i32_1 = arith.constant 0 : i32
    return %c0_i32, %c0_i32_0 : i32, i32
  }
  func.func @transform_3(%arg0: i32) -> (i32, i32) {
    %c0_i32 = arith.constant 0 : i32
    %c0_i32_0 = arith.constant 0 : i32
    return %arg0, %c0_i32 : i32, i32
  }
}

module attributes {stable_mosaic.version = 11 : i64} {
  func.func @_mm_bias_act_kernel(%arg0: i32, %arg1: memref<128x144xbf16, #tpu.memory_space<vmem>>, %arg2: memref<144x32xbf16, #tpu.memory_space<vmem>>, %arg3: memref<1x32xf32, #tpu.memory_space<vmem>>, %arg4: memref<128x32xf32, #tpu.memory_space<vmem>>) attributes {dimension_semantics = [#tpu.dimension_semantics<parallel>], iteration_bounds = array<i64: 1>, scalar_prefetch = 0 : i64, scratch_operands = 0 : i64, tpu.core_type = #tpu.core_type<tc>, window_params = [{transform_indices = @transform_0, window_bounds = array<i64: 128, 144>}, {pipeline_mode = #tpu.pipeline_mode<synchronous>, transform_indices = @transform_1, window_bounds = array<i64: 144, 32>}, {pipeline_mode = #tpu.pipeline_mode<synchronous>, transform_indices = @transform_2, window_bounds = array<i64: 1, 32>}, {transform_indices = @transform_3, window_bounds = array<i64: 128, 32>}]} {
    %c0 = arith.constant 0 : index
    %c0_0 = arith.constant 0 : index
    %0 = vector.load %arg1[%c0, %c0_0] : memref<128x144xbf16, #tpu.memory_space<vmem>>, vector<128x144xbf16>
    %c0_1 = arith.constant 0 : index
    %c0_2 = arith.constant 0 : index
    %1 = vector.load %arg2[%c0_1, %c0_2] : memref<144x32xbf16, #tpu.memory_space<vmem>>, vector<144x32xbf16>
    %cst = arith.constant dense<0.000000e+00> : vector<128x32xf32>
    %2 = tpu.matmul %0, %1, %cst {dimension_numbers = #tpu.dot_dimension_numbers<[1], [0], [0], [1], [0, 0, 1, 1], [], []>} : vector<128x144xbf16>, vector<144x32xbf16>, vector<128x32xf32> -> vector<128x32xf32>
    %cst_3 = arith.constant 0.0833333358 : f32
    %3 = vector.broadcast %cst_3 : f32 to vector<128x32xf32>
    %4 = arith.mulf %2, %3 : vector<128x32xf32>
    %c0_4 = arith.constant 0 : index
    %c0_5 = arith.constant 0 : index
    %5 = vector.load %arg3[%c0_4, %c0_5] : memref<1x32xf32, #tpu.memory_space<vmem>>, vector<1x32xf32>
    %6 = vector.broadcast %5 : vector<1x32xf32> to vector<128x32xf32>
    %7 = arith.addf %4, %6 : vector<128x32xf32>
    %cst_6 = arith.constant 0.000000e+00 : f32
    %8 = vector.broadcast %cst_6 : f32 to vector<128x32xf32>
    %9 = arith.cmpf oge, %7, %8 : vector<128x32xf32>
    %cst_7 = arith.constant 2.000000e-01 : f32
    %10 = vector.broadcast %cst_7 : f32 to vector<128x32xf32>
    %11 = arith.mulf %10, %7 : vector<128x32xf32>
    %12 = arith.select %9, %7, %11 : vector<128x32xi1>, vector<128x32xf32>
    %cst_8 = arith.constant 1.000000e+00 : f32
    %13 = vector.broadcast %cst_8 : f32 to vector<128x32xf32>
    %14 = arith.mulf %12, %13 : vector<128x32xf32>
    %cst_9 = arith.constant -181.019333 : f32
    %cst_10 = arith.constant 181.019333 : f32
    %15 = vector.broadcast %cst_9 : f32 to vector<128x32xf32>
    %16 = arith.maximumf %15, %14 : vector<128x32xf32>
    %17 = vector.broadcast %cst_10 : f32 to vector<128x32xf32>
    %18 = arith.minimumf %17, %16 : vector<128x32xf32>
    %c0_11 = arith.constant 0 : index
    %c0_12 = arith.constant 0 : index
    %19 = vector.load %arg4[%c0_11, %c0_12] : memref<128x32xf32, #tpu.memory_space<vmem>>, vector<128x32xf32>
    tpu.vector_store %arg4[%c0_11, %c0_12], %18 {strides = array<i32>} : memref<128x32xf32, #tpu.memory_space<vmem>>, vector<128x32xf32>,
    return
  }
  func.func @transform_0(%arg0: i32) -> (i32, i32) {
    %c0_i32 = arith.constant 0 : i32
    %c0_i32_0 = arith.constant 0 : i32
    return %arg0, %c0_i32 : i32, i32
  }
  func.func @transform_1(%arg0: i32) -> (i32, i32) {
    %c0_i32 = arith.constant 0 : i32
    %c0_i32_0 = arith.constant 0 : i32
    %c0_i32_1 = arith.constant 0 : i32
    return %c0_i32, %c0_i32_0 : i32, i32
  }
  func.func @transform_2(%arg0: i32) -> (i32, i32) {
    %c0_i32 = arith.constant 0 : i32
    %c0_i32_0 = arith.constant 0 : i32
    %c0_i32_1 = arith.constant 0 : i32
    return %c0_i32, %c0_i32_0 : i32, i32
  }
  func.func @transform_3(%arg0: i32) -> (i32, i32) {
    %c0_i32 = arith.constant 0 : i32
    %c0_i32_0 = arith.constant 0 : i32
    return %arg0, %c0_i32 : i32, i32
  }
}

module attributes {stable_mosaic.version = 11 : i64} {
  func.func @_mm_bias_act_kernel(%arg0: i32, %arg1: memref<32x32xbf16, #tpu.memory_space<vmem>>, %arg2: memref<32x64xbf16, #tpu.memory_space<vmem>>, %arg3: memref<1x64xf32, #tpu.memory_space<vmem>>, %arg4: memref<32x64xf32, #tpu.memory_space<vmem>>) attributes {dimension_semantics = [#tpu.dimension_semantics<parallel>], iteration_bounds = array<i64: 1>, scalar_prefetch = 0 : i64, scratch_operands = 0 : i64, tpu.core_type = #tpu.core_type<tc>, window_params = [{transform_indices = @transform_0, window_bounds = array<i64: 32, 32>}, {pipeline_mode = #tpu.pipeline_mode<synchronous>, transform_indices = @transform_1, window_bounds = array<i64: 32, 64>}, {pipeline_mode = #tpu.pipeline_mode<synchronous>, transform_indices = @transform_2, window_bounds = array<i64: 1, 64>}, {transform_indices = @transform_3, window_bounds = array<i64: 32, 64>}]} {
    %c0 = arith.constant 0 : index
    %c0_0 = arith.constant 0 : index
    %0 = vector.load %arg1[%c0, %c0_0] : memref<32x32xbf16, #tpu.memory_space<vmem>>, vector<32x32xbf16>
    %c0_1 = arith.constant 0 : index
    %c0_2 = arith.constant 0 : index
    %1 = vector.load %arg2[%c0_1, %c0_2] : memref<32x64xbf16, #tpu.memory_space<vmem>>, vector<32x64xbf16>
    %cst = arith.constant dense<0.000000e+00> : vector<32x64xf32>
    %2 = tpu.matmul %0, %1, %cst {dimension_numbers = #tpu.dot_dimension_numbers<[1], [0], [0], [1], [0, 0, 1, 1], [], []>} : vector<32x32xbf16>, vector<32x64xbf16>, vector<32x64xf32> -> vector<32x64xf32>
    %cst_3 = arith.constant 0.176776692 : f32
    %3 = vector.broadcast %cst_3 : f32 to vector<32x64xf32>
    %4 = arith.mulf %2, %3 : vector<32x64xf32>
    %c0_4 = arith.constant 0 : index
    %c0_5 = arith.constant 0 : index
    %5 = vector.load %arg3[%c0_4, %c0_5] : memref<1x64xf32, #tpu.memory_space<vmem>>, vector<1x64xf32>
    %6 = vector.broadcast %5 : vector<1x64xf32> to vector<32x64xf32>
    %7 = arith.addf %4, %6 : vector<32x64xf32>
    %cst_6 = arith.constant 0.707106769 : f32
    %8 = vector.broadcast %cst_6 : f32 to vector<32x64xf32>
    %9 = arith.mulf %7, %8 : vector<32x64xf32>
    %c0_7 = arith.constant 0 : index
    %c0_8 = arith.constant 0 : index
    %10 = vector.load %arg4[%c0_7, %c0_8] : memref<32x64xf32, #tpu.memory_space<vmem>>, vector<32x64xf32>
    tpu.vector_store %arg4[%c0_7, %c0_8], %9 {strides = array<i32>} : memref<32x64xf32, #tpu.memory_space<vmem>>, vector<32x64xf32>,
    return
  }
  func.func @transform_0(%arg0: i32) -> (i32, i32) {
    %c0_i32 = arith.constant 0 : i32
    %c0_i32_0 = arith.constant 0 : i32
    return %arg0, %c0_i32 : i32, i32
  }
  func.func @transform_1(%arg0: i32) -> (i32, i32) {
    %c0_i32 = arith.constant 0 : i32
    %c0_i32_0 = arith.constant 0 : i32
    %c0_i32_1 = arith.constant 0 : i32
    return %c0_i32, %c0_i32_0 : i32, i32
  }
  func.func @transform_2(%arg0: i32) -> (i32, i32) {
    %c0_i32 = arith.constant 0 : i32
    %c0_i32_0 = arith.constant 0 : i32
    %c0_i32_1 = arith.constant 0 : i32
    return %c0_i32, %c0_i32_0 : i32, i32
  }
  func.func @transform_3(%arg0: i32) -> (i32, i32) {
    %c0_i32 = arith.constant 0 : i32
    %c0_i32_0 = arith.constant 0 : i32
    return %arg0, %c0_i32 : i32, i32
  }
}

module attributes {stable_mosaic.version = 11 : i64} {
  func.func @_mm_bias_act_kernel(%arg0: i32, %arg1: memref<128x288xbf16, #tpu.memory_space<vmem>>, %arg2: memref<288x32xbf16, #tpu.memory_space<vmem>>, %arg3: memref<1x32xf32, #tpu.memory_space<vmem>>, %arg4: memref<128x32xf32, #tpu.memory_space<vmem>>) attributes {dimension_semantics = [#tpu.dimension_semantics<parallel>], iteration_bounds = array<i64: 1>, scalar_prefetch = 0 : i64, scratch_operands = 0 : i64, tpu.core_type = #tpu.core_type<tc>, window_params = [{transform_indices = @transform_0, window_bounds = array<i64: 128, 288>}, {pipeline_mode = #tpu.pipeline_mode<synchronous>, transform_indices = @transform_1, window_bounds = array<i64: 288, 32>}, {pipeline_mode = #tpu.pipeline_mode<synchronous>, transform_indices = @transform_2, window_bounds = array<i64: 1, 32>}, {transform_indices = @transform_3, window_bounds = array<i64: 128, 32>}]} {
    %c0 = arith.constant 0 : index
    %c0_0 = arith.constant 0 : index
    %0 = vector.load %arg1[%c0, %c0_0] : memref<128x288xbf16, #tpu.memory_space<vmem>>, vector<128x288xbf16>
    %c0_1 = arith.constant 0 : index
    %c0_2 = arith.constant 0 : index
    %1 = vector.load %arg2[%c0_1, %c0_2] : memref<288x32xbf16, #tpu.memory_space<vmem>>, vector<288x32xbf16>
    %cst = arith.constant dense<0.000000e+00> : vector<128x32xf32>
    %2 = tpu.matmul %0, %1, %cst {dimension_numbers = #tpu.dot_dimension_numbers<[1], [0], [0], [1], [0, 0, 1, 1], [], []>} : vector<128x288xbf16>, vector<288x32xbf16>, vector<128x32xf32> -> vector<128x32xf32>
    %cst_3 = arith.constant 0.0589255653 : f32
    %3 = vector.broadcast %cst_3 : f32 to vector<128x32xf32>
    %4 = arith.mulf %2, %3 : vector<128x32xf32>
    %c0_4 = arith.constant 0 : index
    %c0_5 = arith.constant 0 : index
    %5 = vector.load %arg3[%c0_4, %c0_5] : memref<1x32xf32, #tpu.memory_space<vmem>>, vector<1x32xf32>
    %6 = vector.broadcast %5 : vector<1x32xf32> to vector<128x32xf32>
    %7 = arith.addf %4, %6 : vector<128x32xf32>
    %cst_6 = arith.constant 0.000000e+00 : f32
    %8 = vector.broadcast %cst_6 : f32 to vector<128x32xf32>
    %9 = arith.cmpf oge, %7, %8 : vector<128x32xf32>
    %cst_7 = arith.constant 2.000000e-01 : f32
    %10 = vector.broadcast %cst_7 : f32 to vector<128x32xf32>
    %11 = arith.mulf %10, %7 : vector<128x32xf32>
    %12 = arith.select %9, %7, %11 : vector<128x32xi1>, vector<128x32xf32>
    %cst_8 = arith.constant 1.41421354 : f32
    %13 = vector.broadcast %cst_8 : f32 to vector<128x32xf32>
    %14 = arith.mulf %12, %13 : vector<128x32xf32>
    %cst_9 = arith.constant -2.560000e+02 : f32
    %cst_10 = arith.constant 2.560000e+02 : f32
    %15 = vector.broadcast %cst_9 : f32 to vector<128x32xf32>
    %16 = arith.maximumf %15, %14 : vector<128x32xf32>
    %17 = vector.broadcast %cst_10 : f32 to vector<128x32xf32>
    %18 = arith.minimumf %17, %16 : vector<128x32xf32>
    %c0_11 = arith.constant 0 : index
    %c0_12 = arith.constant 0 : index
    %19 = vector.load %arg4[%c0_11, %c0_12] : memref<128x32xf32, #tpu.memory_space<vmem>>, vector<128x32xf32>
    tpu.vector_store %arg4[%c0_11, %c0_12], %18 {strides = array<i32>} : memref<128x32xf32, #tpu.memory_space<vmem>>, vector<128x32xf32>,
    return
  }
  func.func @transform_0(%arg0: i32) -> (i32, i32) {
    %c0_i32 = arith.constant 0 : i32
    %c0_i32_0 = arith.constant 0 : i32
    return %arg0, %c0_i32 : i32, i32
  }
  func.func @transform_1(%arg0: i32) -> (i32, i32) {
    %c0_i32 = arith.constant 0 : i32
    %c0_i32_0 = arith.constant 0 : i32
    %c0_i32_1 = arith.constant 0 : i32
    return %c0_i32, %c0_i32_0 : i32, i32
  }
  func.func @transform_2(%arg0: i32) -> (i32, i32) {
    %c0_i32 = arith.constant 0 : i32
    %c0_i32_0 = arith.constant 0 : i32
    %c0_i32_1 = arith.constant 0 : i32
    return %c0_i32, %c0_i32_0 : i32, i32
  }
  func.func @transform_3(%arg0: i32) -> (i32, i32) {
    %c0_i32 = arith.constant 0 : i32
    %c0_i32_0 = arith.constant 0 : i32
    return %arg0, %c0_i32 : i32, i32
  }
}

module attributes {stable_mosaic.version = 11 : i64} {
  func.func @_mm_bias_act_kernel(%arg0: i32, %arg1: memref<32x288xbf16, #tpu.memory_space<vmem>>, %arg2: memref<288x64xbf16, #tpu.memory_space<vmem>>, %arg3: memref<1x64xf32, #tpu.memory_space<vmem>>, %arg4: memref<32x64xf32, #tpu.memory_space<vmem>>) attributes {dimension_semantics = [#tpu.dimension_semantics<parallel>], iteration_bounds = array<i64: 1>, scalar_prefetch = 0 : i64, scratch_operands = 0 : i64, tpu.core_type = #tpu.core_type<tc>, window_params = [{transform_indices = @transform_0, window_bounds = array<i64: 32, 288>}, {pipeline_mode = #tpu.pipeline_mode<synchronous>, transform_indices = @transform_1, window_bounds = array<i64: 288, 64>}, {pipeline_mode = #tpu.pipeline_mode<synchronous>, transform_indices = @transform_2, window_bounds = array<i64: 1, 64>}, {transform_indices = @transform_3, window_bounds = array<i64: 32, 64>}]} {
    %c0 = arith.constant 0 : index
    %c0_0 = arith.constant 0 : index
    %0 = vector.load %arg1[%c0, %c0_0] : memref<32x288xbf16, #tpu.memory_space<vmem>>, vector<32x288xbf16>
    %c0_1 = arith.constant 0 : index
    %c0_2 = arith.constant 0 : index
    %1 = vector.load %arg2[%c0_1, %c0_2] : memref<288x64xbf16, #tpu.memory_space<vmem>>, vector<288x64xbf16>
    %cst = arith.constant dense<0.000000e+00> : vector<32x64xf32>
    %2 = tpu.matmul %0, %1, %cst {dimension_numbers = #tpu.dot_dimension_numbers<[1], [0], [0], [1], [0, 0, 1, 1], [], []>} : vector<32x288xbf16>, vector<288x64xbf16>, vector<32x64xf32> -> vector<32x64xf32>
    %cst_3 = arith.constant 0.0589255653 : f32
    %3 = vector.broadcast %cst_3 : f32 to vector<32x64xf32>
    %4 = arith.mulf %2, %3 : vector<32x64xf32>
    %c0_4 = arith.constant 0 : index
    %c0_5 = arith.constant 0 : index
    %5 = vector.load %arg3[%c0_4, %c0_5] : memref<1x64xf32, #tpu.memory_space<vmem>>, vector<1x64xf32>
    %6 = vector.broadcast %5 : vector<1x64xf32> to vector<32x64xf32>
    %7 = arith.addf %4, %6 : vector<32x64xf32>
    %cst_6 = arith.constant 0.000000e+00 : f32
    %8 = vector.broadcast %cst_6 : f32 to vector<32x64xf32>
    %9 = arith.cmpf oge, %7, %8 : vector<32x64xf32>
    %cst_7 = arith.constant 2.000000e-01 : f32
    %10 = vector.broadcast %cst_7 : f32 to vector<32x64xf32>
    %11 = arith.mulf %10, %7 : vector<32x64xf32>
    %12 = arith.select %9, %7, %11 : vector<32x64xi1>, vector<32x64xf32>
    %cst_8 = arith.constant 1.000000e+00 : f32
    %13 = vector.broadcast %cst_8 : f32 to vector<32x64xf32>
    %14 = arith.mulf %12, %13 : vector<32x64xf32>
    %cst_9 = arith.constant -181.019333 : f32
    %cst_10 = arith.constant 181.019333 : f32
    %15 = vector.broadcast %cst_9 : f32 to vector<32x64xf32>
    %16 = arith.maximumf %15, %14 : vector<32x64xf32>
    %17 = vector.broadcast %cst_10 : f32 to vector<32x64xf32>
    %18 = arith.minimumf %17, %16 : vector<32x64xf32>
    %c0_11 = arith.constant 0 : index
    %c0_12 = arith.constant 0 : index
    %19 = vector.load %arg4[%c0_11, %c0_12] : memref<32x64xf32, #tpu.memory_space<vmem>>, vector<32x64xf32>
    tpu.vector_store %arg4[%c0_11, %c0_12], %18 {strides = array<i32>} : memref<32x64xf32, #tpu.memory_space<vmem>>, vector<32x64xf32>,
    return
  }
  func.func @transform_0(%arg0: i32) -> (i32, i32) {
    %c0_i32 = arith.constant 0 : i32
    %c0_i32_0 = arith.constant 0 : i32
    return %arg0, %c0_i32 : i32, i32
  }
  func.func @transform_1(%arg0: i32) -> (i32, i32) {
    %c0_i32 = arith.constant 0 : i32
    %c0_i32_0 = arith.constant 0 : i32
    %c0_i32_1 = arith.constant 0 : i32
    return %c0_i32, %c0_i32_0 : i32, i32
  }
  func.func @transform_2(%arg0: i32) -> (i32, i32) {
    %c0_i32 = arith.constant 0 : i32
    %c0_i32_0 = arith.constant 0 : i32
    %c0_i32_1 = arith.constant 0 : i32
    return %c0_i32, %c0_i32_0 : i32, i32
  }
  func.func @transform_3(%arg0: i32) -> (i32, i32) {
    %c0_i32 = arith.constant 0 : i32
    %c0_i32_0 = arith.constant 0 : i32
    return %arg0, %c0_i32 : i32, i32
  }
}

module attributes {stable_mosaic.version = 11 : i64} {
  func.func @_mm_bias_act_kernel(%arg0: i32, %arg1: memref<32x585xbf16, #tpu.memory_space<vmem>>, %arg2: memref<585x64xbf16, #tpu.memory_space<vmem>>, %arg3: memref<1x64xf32, #tpu.memory_space<vmem>>, %arg4: memref<32x64xf32, #tpu.memory_space<vmem>>) attributes {dimension_semantics = [#tpu.dimension_semantics<parallel>], iteration_bounds = array<i64: 1>, scalar_prefetch = 0 : i64, scratch_operands = 0 : i64, tpu.core_type = #tpu.core_type<tc>, window_params = [{transform_indices = @transform_0, window_bounds = array<i64: 32, 585>}, {pipeline_mode = #tpu.pipeline_mode<synchronous>, transform_indices = @transform_1, window_bounds = array<i64: 585, 64>}, {pipeline_mode = #tpu.pipeline_mode<synchronous>, transform_indices = @transform_2, window_bounds = array<i64: 1, 64>}, {transform_indices = @transform_3, window_bounds = array<i64: 32, 64>}]} {
    %c0 = arith.constant 0 : index
    %c0_0 = arith.constant 0 : index
    %0 = vector.load %arg1[%c0, %c0_0] : memref<32x585xbf16, #tpu.memory_space<vmem>>, vector<32x585xbf16>
    %c0_1 = arith.constant 0 : index
    %c0_2 = arith.constant 0 : index
    %1 = vector.load %arg2[%c0_1, %c0_2] : memref<585x64xbf16, #tpu.memory_space<vmem>>, vector<585x64xbf16>
    %cst = arith.constant dense<0.000000e+00> : vector<32x64xf32>
    %2 = tpu.matmul %0, %1, %cst {dimension_numbers = #tpu.dot_dimension_numbers<[1], [0], [0], [1], [0, 0, 1, 1], [], []>} : vector<32x585xbf16>, vector<585x64xbf16>, vector<32x64xf32> -> vector<32x64xf32>
    %cst_3 = arith.constant 0.0413449109 : f32
    %3 = vector.broadcast %cst_3 : f32 to vector<32x64xf32>
    %4 = arith.mulf %2, %3 : vector<32x64xf32>
    %c0_4 = arith.constant 0 : index
    %c0_5 = arith.constant 0 : index
    %5 = vector.load %arg3[%c0_4, %c0_5] : memref<1x64xf32, #tpu.memory_space<vmem>>, vector<1x64xf32>
    %6 = vector.broadcast %5 : vector<1x64xf32> to vector<32x64xf32>
    %7 = arith.addf %4, %6 : vector<32x64xf32>
    %cst_6 = arith.constant 0.000000e+00 : f32
    %8 = vector.broadcast %cst_6 : f32 to vector<32x64xf32>
    %9 = arith.cmpf oge, %7, %8 : vector<32x64xf32>
    %cst_7 = arith.constant 2.000000e-01 : f32
    %10 = vector.broadcast %cst_7 : f32 to vector<32x64xf32>
    %11 = arith.mulf %10, %7 : vector<32x64xf32>
    %12 = arith.select %9, %7, %11 : vector<32x64xi1>, vector<32x64xf32>
    %cst_8 = arith.constant 1.41421354 : f32
    %13 = vector.broadcast %cst_8 : f32 to vector<32x64xf32>
    %14 = arith.mulf %12, %13 : vector<32x64xf32>
    %cst_9 = arith.constant -2.560000e+02 : f32
    %cst_10 = arith.constant 2.560000e+02 : f32
    %15 = vector.broadcast %cst_9 : f32 to vector<32x64xf32>
    %16 = arith.maximumf %15, %14 : vector<32x64xf32>
    %17 = vector.broadcast %cst_10 : f32 to vector<32x64xf32>
    %18 = arith.minimumf %17, %16 : vector<32x64xf32>
    %c0_11 = arith.constant 0 : index
    %c0_12 = arith.constant 0 : index
    %19 = vector.load %arg4[%c0_11, %c0_12] : memref<32x64xf32, #tpu.memory_space<vmem>>, vector<32x64xf32>
    tpu.vector_store %arg4[%c0_11, %c0_12], %18 {strides = array<i32>} : memref<32x64xf32, #tpu.memory_space<vmem>>, vector<32x64xf32>,
    return
  }
  func.func @transform_0(%arg0: i32) -> (i32, i32) {
    %c0_i32 = arith.constant 0 : i32
    %c0_i32_0 = arith.constant 0 : i32
    return %arg0, %c0_i32 : i32, i32
  }
  func.func @transform_1(%arg0: i32) -> (i32, i32) {
    %c0_i32 = arith.constant 0 : i32
    %c0_i32_0 = arith.constant 0 : i32
    %c0_i32_1 = arith.constant 0 : i32
    return %c0_i32, %c0_i32_0 : i32, i32
  }
  func.func @transform_2(%arg0: i32) -> (i32, i32) {
    %c0_i32 = arith.constant 0 : i32
    %c0_i32_0 = arith.constant 0 : i32
    %c0_i32_1 = arith.constant 0 : i32
    return %c0_i32, %c0_i32_0 : i32, i32
  }
  func.func @transform_3(%arg0: i32) -> (i32, i32) {
    %c0_i32 = arith.constant 0 : i32
    %c0_i32_0 = arith.constant 0 : i32
    return %arg0, %c0_i32 : i32, i32
  }
}

module attributes {stable_mosaic.version = 11 : i64} {
  func.func @_epilogue_head_kernel(%arg0: memref<2x1024xbf16, #tpu.memory_space<vmem>>, %arg1: memref<1024x64xbf16, #tpu.memory_space<vmem>>, %arg2: memref<1x64xf32, #tpu.memory_space<vmem>>, %arg3: memref<64x64xbf16, #tpu.memory_space<vmem>>, %arg4: memref<1x64xf32, #tpu.memory_space<vmem>>, %arg5: memref<2x64xf32, #tpu.memory_space<vmem>>, %arg6: memref<2x1xf32, #tpu.memory_space<vmem>>) attributes {dimension_semantics = [], scalar_prefetch = 0 : i64, scratch_operands = 0 : i64, tpu.core_type = #tpu.core_type<tc>} {
    %c0 = arith.constant 0 : index
    %c0_0 = arith.constant 0 : index
    %0 = vector.load %arg0[%c0, %c0_0] : memref<2x1024xbf16, #tpu.memory_space<vmem>>, vector<2x1024xbf16>
    %c0_1 = arith.constant 0 : index
    %c0_2 = arith.constant 0 : index
    %1 = vector.load %arg1[%c0_1, %c0_2] : memref<1024x64xbf16, #tpu.memory_space<vmem>>, vector<1024x64xbf16>
    %cst = arith.constant dense<0.000000e+00> : vector<2x64xf32>
    %2 = tpu.matmul %0, %1, %cst {dimension_numbers = #tpu.dot_dimension_numbers<[1], [0], [0], [1], [0, 0, 1, 1], [], []>} : vector<2x1024xbf16>, vector<1024x64xbf16>, vector<2x64xf32> -> vector<2x64xf32>
    %cst_3 = arith.constant 3.125000e-02 : f32
    %3 = vector.broadcast %cst_3 : f32 to vector<2x64xf32>
    %4 = arith.mulf %2, %3 : vector<2x64xf32>
    %c0_4 = arith.constant 0 : index
    %c0_5 = arith.constant 0 : index
    %5 = vector.load %arg2[%c0_4, %c0_5] : memref<1x64xf32, #tpu.memory_space<vmem>>, vector<1x64xf32>
    %6 = vector.broadcast %5 : vector<1x64xf32> to vector<2x64xf32>
    %7 = arith.addf %4, %6 : vector<2x64xf32>
    %cst_6 = arith.constant 0.000000e+00 : f32
    %8 = vector.broadcast %cst_6 : f32 to vector<2x64xf32>
    %9 = arith.cmpf oge, %7, %8 : vector<2x64xf32>
    %cst_7 = arith.constant 2.000000e-01 : f32
    %10 = vector.broadcast %cst_7 : f32 to vector<2x64xf32>
    %11 = arith.mulf %10, %7 : vector<2x64xf32>
    %12 = arith.select %9, %7, %11 : vector<2x64xi1>, vector<2x64xf32>
    %cst_8 = arith.constant 1.41421354 : f32
    %13 = vector.broadcast %cst_8 : f32 to vector<2x64xf32>
    %14 = arith.mulf %12, %13 : vector<2x64xf32>
    %15 = arith.truncf %14 : vector<2x64xf32> to vector<2x64xbf16>
    %c0_9 = arith.constant 0 : index
    %c0_10 = arith.constant 0 : index
    %16 = vector.load %arg3[%c0_9, %c0_10] : memref<64x64xbf16, #tpu.memory_space<vmem>>, vector<64x64xbf16>
    %cst_11 = arith.constant dense<0.000000e+00> : vector<2x64xf32>
    %17 = tpu.matmul %15, %16, %cst_11 {dimension_numbers = #tpu.dot_dimension_numbers<[1], [0], [0], [1], [0, 0, 1, 1], [], []>} : vector<2x64xbf16>, vector<64x64xbf16>, vector<2x64xf32> -> vector<2x64xf32>
    %cst_12 = arith.constant 1.250000e-01 : f32
    %18 = vector.broadcast %cst_12 : f32 to vector<2x64xf32>
    %19 = arith.mulf %17, %18 : vector<2x64xf32>
    %c0_13 = arith.constant 0 : index
    %c0_14 = arith.constant 0 : index
    %20 = vector.load %arg4[%c0_13, %c0_14] : memref<1x64xf32, #tpu.memory_space<vmem>>, vector<1x64xf32>
    %21 = vector.broadcast %20 : vector<1x64xf32> to vector<2x64xf32>
    %22 = arith.addf %19, %21 : vector<2x64xf32>
    %c0_15 = arith.constant 0 : index
    %c0_16 = arith.constant 0 : index
    %23 = vector.load %arg5[%c0_15, %c0_16] : memref<2x64xf32, #tpu.memory_space<vmem>>, vector<2x64xf32>
    %24 = arith.mulf %22, %23 : vector<2x64xf32>
    %cst_17 = arith.constant dense<0.000000e+00> : vector<2xf32>
    %25 = vector.multi_reduction <add>, %24, %cst_17 [1] : vector<2x64xf32> to vector<2xf32>
    %26 = vector.shape_cast %25 : vector<2xf32> to vector<2x1xf32>
    %cst_18 = arith.constant 1.250000e-01 : f32
    %27 = vector.broadcast %cst_18 : f32 to vector<2x1xf32>
    %28 = arith.mulf %26, %27 : vector<2x1xf32>
    %c0_19 = arith.constant 0 : index
    %c0_20 = arith.constant 0 : index
    %29 = vector.load %arg6[%c0_19, %c0_20] : memref<2x1xf32, #tpu.memory_space<vmem>>, vector<2x1xf32>
    tpu.vector_store %arg6[%c0_19, %c0_20], %28 {strides = array<i32>} : memref<2x1xf32, #tpu.memory_space<vmem>>, vector<2x1xf32>,
    return
  }
}

module attributes {stable_mosaic.version = 11 : i64} {
  func.func @_mapping_kernel(%arg0: memref<2x8xbf16, #tpu.memory_space<vmem>>, %arg1: memref<8x64xbf16, #tpu.memory_space<vmem>>, %arg2: memref<1x64xf32, #tpu.memory_space<vmem>>, %arg3: memref<8x64x64xbf16, #tpu.memory_space<vmem>>, %arg4: memref<8x1x64xf32, #tpu.memory_space<vmem>>, %arg5: memref<2x64xf32, #tpu.memory_space<vmem>>) attributes {dimension_semantics = [], scalar_prefetch = 0 : i64, scratch_operands = 0 : i64, tpu.core_type = #tpu.core_type<tc>} {
    %c0 = arith.constant 0 : index
    %c0_0 = arith.constant 0 : index
    %0 = vector.load %arg0[%c0, %c0_0] : memref<2x8xbf16, #tpu.memory_space<vmem>>, vector<2x8xbf16>
    %c0_1 = arith.constant 0 : index
    %c0_2 = arith.constant 0 : index
    %1 = vector.load %arg1[%c0_1, %c0_2] : memref<8x64xbf16, #tpu.memory_space<vmem>>, vector<8x64xbf16>
    %cst = arith.constant dense<0.000000e+00> : vector<2x64xf32>
    %2 = tpu.matmul %0, %1, %cst {dimension_numbers = #tpu.dot_dimension_numbers<[1], [0], [0], [1], [0, 0, 1, 1], [], []>} : vector<2x8xbf16>, vector<8x64xbf16>, vector<2x64xf32> -> vector<2x64xf32>
    %cst_3 = arith.constant 0.353553385 : f32
    %3 = vector.broadcast %cst_3 : f32 to vector<2x64xf32>
    %4 = arith.mulf %2, %3 : vector<2x64xf32>
    %c0_4 = arith.constant 0 : index
    %c0_5 = arith.constant 0 : index
    %5 = vector.load %arg2[%c0_4, %c0_5] : memref<1x64xf32, #tpu.memory_space<vmem>>, vector<1x64xf32>
    %6 = vector.broadcast %5 : vector<1x64xf32> to vector<2x64xf32>
    %7 = arith.addf %4, %6 : vector<2x64xf32>
    %8 = arith.mulf %7, %7 : vector<2x64xf32>
    %cst_6 = arith.constant dense<0.000000e+00> : vector<2xf32>
    %9 = vector.multi_reduction <add>, %8, %cst_6 [1] : vector<2x64xf32> to vector<2xf32>
    %10 = vector.shape_cast %9 : vector<2xf32> to vector<2x1xf32>
    %cst_7 = arith.constant 6.400000e+01 : f32
    %11 = vector.broadcast %cst_7 : f32 to vector<2x1xf32>
    %12 = arith.divf %10, %11 : vector<2x1xf32>
    %cst_8 = arith.constant 9.99999993E-9 : f32
    %13 = vector.broadcast %cst_8 : f32 to vector<2x1xf32>
    %14 = arith.addf %12, %13 : vector<2x1xf32>
    %15 = math.rsqrt %14 : vector<2x1xf32>
    %16 = vector.broadcast %15 : vector<2x1xf32> to vector<2x64xf32>
    %17 = arith.mulf %7, %16 : vector<2x64xf32>
    %18 = arith.truncf %17 : vector<2x64xf32> to vector<2x64xbf16>
    %c0_9 = arith.constant 0 : index
    %c0_10 = arith.constant 0 : index
    %c0_11 = arith.constant 0 : index
    %19 = vector.load %arg3[%c0_9, %c0_10, %c0_11] : memref<8x64x64xbf16, #tpu.memory_space<vmem>>, vector<1x64x64xbf16>
    %20 = vector.shape_cast %19 : vector<1x64x64xbf16> to vector<64x64xbf16>
    %cst_12 = arith.constant dense<0.000000e+00> : vector<2x64xf32>
    %21 = tpu.matmul %18, %20, %cst_12 {dimension_numbers = #tpu.dot_dimension_numbers<[1], [0], [0], [1], [0, 0, 1, 1], [], []>} : vector<2x64xbf16>, vector<64x64xbf16>, vector<2x64xf32> -> vector<2x64xf32>
    %cst_13 = arith.constant 1.250000e-01 : f32
    %22 = vector.broadcast %cst_13 : f32 to vector<2x64xf32>
    %23 = arith.mulf %21, %22 : vector<2x64xf32>
    %c0_14 = arith.constant 0 : index
    %c0_15 = arith.constant 0 : index
    %c0_16 = arith.constant 0 : index
    %24 = vector.load %arg4[%c0_14, %c0_15, %c0_16] : memref<8x1x64xf32, #tpu.memory_space<vmem>>, vector<1x1x64xf32>
    %25 = vector.shape_cast %24 : vector<1x1x64xf32> to vector<1x64xf32>
    %26 = vector.broadcast %25 : vector<1x64xf32> to vector<2x64xf32>
    %27 = arith.addf %23, %26 : vector<2x64xf32>
    %cst_17 = arith.constant 0.000000e+00 : f32
    %28 = vector.broadcast %cst_17 : f32 to vector<2x64xf32>
    %29 = arith.cmpf oge, %27, %28 : vector<2x64xf32>
    %cst_18 = arith.constant 2.000000e-01 : f32
    %30 = vector.broadcast %cst_18 : f32 to vector<2x64xf32>
    %31 = arith.mulf %30, %27 : vector<2x64xf32>
    %32 = arith.select %29, %27, %31 : vector<2x64xi1>, vector<2x64xf32>
    %cst_19 = arith.constant 1.41421354 : f32
    %33 = vector.broadcast %cst_19 : f32 to vector<2x64xf32>
    %34 = arith.mulf %32, %33 : vector<2x64xf32>
    %35 = arith.truncf %34 : vector<2x64xf32> to vector<2x64xbf16>
    %c1 = arith.constant 1 : index
    %c0_20 = arith.constant 0 : index
    %c0_21 = arith.constant 0 : index
    %36 = vector.load %arg3[%c1, %c0_20, %c0_21] : memref<8x64x64xbf16, #tpu.memory_space<vmem>>, vector<1x64x64xbf16>
    %37 = vector.shape_cast %36 : vector<1x64x64xbf16> to vector<64x64xbf16>
    %cst_22 = arith.constant dense<0.000000e+00> : vector<2x64xf32>
    %38 = tpu.matmul %35, %37, %cst_22 {dimension_numbers = #tpu.dot_dimension_numbers<[1], [0], [0], [1], [0, 0, 1, 1], [], []>} : vector<2x64xbf16>, vector<64x64xbf16>, vector<2x64xf32> -> vector<2x64xf32>
    %cst_23 = arith.constant 1.250000e-01 : f32
    %39 = vector.broadcast %cst_23 : f32 to vector<2x64xf32>
    %40 = arith.mulf %38, %39 : vector<2x64xf32>
    %c1_24 = arith.constant 1 : index
    %c0_25 = arith.constant 0 : index
    %c0_26 = arith.constant 0 : index
    %41 = vector.load %arg4[%c1_24, %c0_25, %c0_26] : memref<8x1x64xf32, #tpu.memory_space<vmem>>, vector<1x1x64xf32>
    %42 = vector.shape_cast %41 : vector<1x1x64xf32> to vector<1x64xf32>
    %43 = vector.broadcast %42 : vector<1x64xf32> to vector<2x64xf32>
    %44 = arith.addf %40, %43 : vector<2x64xf32>
    %cst_27 = arith.constant 0.000000e+00 : f32
    %45 = vector.broadcast %cst_27 : f32 to vector<2x64xf32>
    %46 = arith.cmpf oge, %44, %45 : vector<2x64xf32>
    %cst_28 = arith.constant 2.000000e-01 : f32
    %47 = vector.broadcast %cst_28 : f32 to vector<2x64xf32>
    %48 = arith.mulf %47, %44 : vector<2x64xf32>
    %49 = arith.select %46, %44, %48 : vector<2x64xi1>, vector<2x64xf32>
    %cst_29 = arith.constant 1.41421354 : f32
    %50 = vector.broadcast %cst_29 : f32 to vector<2x64xf32>
    %51 = arith.mulf %49, %50 : vector<2x64xf32>
    %52 = arith.truncf %51 : vector<2x64xf32> to vector<2x64xbf16>
    %c2 = arith.constant 2 : index
    %c0_30 = arith.constant 0 : index
    %c0_31 = arith.constant 0 : index
    %53 = vector.load %arg3[%c2, %c0_30, %c0_31] : memref<8x64x64xbf16, #tpu.memory_space<vmem>>, vector<1x64x64xbf16>
    %54 = vector.shape_cast %53 : vector<1x64x64xbf16> to vector<64x64xbf16>
    %cst_32 = arith.constant dense<0.000000e+00> : vector<2x64xf32>
    %55 = tpu.matmul %52, %54, %cst_32 {dimension_numbers = #tpu.dot_dimension_numbers<[1], [0], [0], [1], [0, 0, 1, 1], [], []>} : vector<2x64xbf16>, vector<64x64xbf16>, vector<2x64xf32> -> vector<2x64xf32>
    %cst_33 = arith.constant 1.250000e-01 : f32
    %56 = vector.broadcast %cst_33 : f32 to vector<2x64xf32>
    %57 = arith.mulf %55, %56 : vector<2x64xf32>
    %c2_34 = arith.constant 2 : index
    %c0_35 = arith.constant 0 : index
    %c0_36 = arith.constant 0 : index
    %58 = vector.load %arg4[%c2_34, %c0_35, %c0_36] : memref<8x1x64xf32, #tpu.memory_space<vmem>>, vector<1x1x64xf32>
    %59 = vector.shape_cast %58 : vector<1x1x64xf32> to vector<1x64xf32>
    %60 = vector.broadcast %59 : vector<1x64xf32> to vector<2x64xf32>
    %61 = arith.addf %57, %60 : vector<2x64xf32>
    %cst_37 = arith.constant 0.000000e+00 : f32
    %62 = vector.broadcast %cst_37 : f32 to vector<2x64xf32>
    %63 = arith.cmpf oge, %61, %62 : vector<2x64xf32>
    %cst_38 = arith.constant 2.000000e-01 : f32
    %64 = vector.broadcast %cst_38 : f32 to vector<2x64xf32>
    %65 = arith.mulf %64, %61 : vector<2x64xf32>
    %66 = arith.select %63, %61, %65 : vector<2x64xi1>, vector<2x64xf32>
    %cst_39 = arith.constant 1.41421354 : f32
    %67 = vector.broadcast %cst_39 : f32 to vector<2x64xf32>
    %68 = arith.mulf %66, %67 : vector<2x64xf32>
    %69 = arith.truncf %68 : vector<2x64xf32> to vector<2x64xbf16>
    %c3 = arith.constant 3 : index
    %c0_40 = arith.constant 0 : index
    %c0_41 = arith.constant 0 : index
    %70 = vector.load %arg3[%c3, %c0_40, %c0_41] : memref<8x64x64xbf16, #tpu.memory_space<vmem>>, vector<1x64x64xbf16>
    %71 = vector.shape_cast %70 : vector<1x64x64xbf16> to vector<64x64xbf16>
    %cst_42 = arith.constant dense<0.000000e+00> : vector<2x64xf32>
    %72 = tpu.matmul %69, %71, %cst_42 {dimension_numbers = #tpu.dot_dimension_numbers<[1], [0], [0], [1], [0, 0, 1, 1], [], []>} : vector<2x64xbf16>, vector<64x64xbf16>, vector<2x64xf32> -> vector<2x64xf32>
    %cst_43 = arith.constant 1.250000e-01 : f32
    %73 = vector.broadcast %cst_43 : f32 to vector<2x64xf32>
    %74 = arith.mulf %72, %73 : vector<2x64xf32>
    %c3_44 = arith.constant 3 : index
    %c0_45 = arith.constant 0 : index
    %c0_46 = arith.constant 0 : index
    %75 = vector.load %arg4[%c3_44, %c0_45, %c0_46] : memref<8x1x64xf32, #tpu.memory_space<vmem>>, vector<1x1x64xf32>
    %76 = vector.shape_cast %75 : vector<1x1x64xf32> to vector<1x64xf32>
    %77 = vector.broadcast %76 : vector<1x64xf32> to vector<2x64xf32>
    %78 = arith.addf %74, %77 : vector<2x64xf32>
    %cst_47 = arith.constant 0.000000e+00 : f32
    %79 = vector.broadcast %cst_47 : f32 to vector<2x64xf32>
    %80 = arith.cmpf oge, %78, %79 : vector<2x64xf32>
    %cst_48 = arith.constant 2.000000e-01 : f32
    %81 = vector.broadcast %cst_48 : f32 to vector<2x64xf32>
    %82 = arith.mulf %81, %78 : vector<2x64xf32>
    %83 = arith.select %80, %78, %82 : vector<2x64xi1>, vector<2x64xf32>
    %cst_49 = arith.constant 1.41421354 : f32
    %84 = vector.broadcast %cst_49 : f32 to vector<2x64xf32>
    %85 = arith.mulf %83, %84 : vector<2x64xf32>
    %86 = arith.truncf %85 : vector<2x64xf32> to vector<2x64xbf16>
    %c4 = arith.constant 4 : index
    %c0_50 = arith.constant 0 : index
    %c0_51 = arith.constant 0 : index
    %87 = vector.load %arg3[%c4, %c0_50, %c0_51] : memref<8x64x64xbf16, #tpu.memory_space<vmem>>, vector<1x64x64xbf16>
    %88 = vector.shape_cast %87 : vector<1x64x64xbf16> to vector<64x64xbf16>
    %cst_52 = arith.constant dense<0.000000e+00> : vector<2x64xf32>
    %89 = tpu.matmul %86, %88, %cst_52 {dimension_numbers = #tpu.dot_dimension_numbers<[1], [0], [0], [1], [0, 0, 1, 1], [], []>} : vector<2x64xbf16>, vector<64x64xbf16>, vector<2x64xf32> -> vector<2x64xf32>
    %cst_53 = arith.constant 1.250000e-01 : f32
    %90 = vector.broadcast %cst_53 : f32 to vector<2x64xf32>
    %91 = arith.mulf %89, %90 : vector<2x64xf32>
    %c4_54 = arith.constant 4 : index
    %c0_55 = arith.constant 0 : index
    %c0_56 = arith.constant 0 : index
    %92 = vector.load %arg4[%c4_54, %c0_55, %c0_56] : memref<8x1x64xf32, #tpu.memory_space<vmem>>, vector<1x1x64xf32>
    %93 = vector.shape_cast %92 : vector<1x1x64xf32> to vector<1x64xf32>
    %94 = vector.broadcast %93 : vector<1x64xf32> to vector<2x64xf32>
    %95 = arith.addf %91, %94 : vector<2x64xf32>
    %cst_57 = arith.constant 0.000000e+00 : f32
    %96 = vector.broadcast %cst_57 : f32 to vector<2x64xf32>
    %97 = arith.cmpf oge, %95, %96 : vector<2x64xf32>
    %cst_58 = arith.constant 2.000000e-01 : f32
    %98 = vector.broadcast %cst_58 : f32 to vector<2x64xf32>
    %99 = arith.mulf %98, %95 : vector<2x64xf32>
    %100 = arith.select %97, %95, %99 : vector<2x64xi1>, vector<2x64xf32>
    %cst_59 = arith.constant 1.41421354 : f32
    %101 = vector.broadcast %cst_59 : f32 to vector<2x64xf32>
    %102 = arith.mulf %100, %101 : vector<2x64xf32>
    %103 = arith.truncf %102 : vector<2x64xf32> to vector<2x64xbf16>
    %c5 = arith.constant 5 : index
    %c0_60 = arith.constant 0 : index
    %c0_61 = arith.constant 0 : index
    %104 = vector.load %arg3[%c5, %c0_60, %c0_61] : memref<8x64x64xbf16, #tpu.memory_space<vmem>>, vector<1x64x64xbf16>
    %105 = vector.shape_cast %104 : vector<1x64x64xbf16> to vector<64x64xbf16>
    %cst_62 = arith.constant dense<0.000000e+00> : vector<2x64xf32>
    %106 = tpu.matmul %103, %105, %cst_62 {dimension_numbers = #tpu.dot_dimension_numbers<[1], [0], [0], [1], [0, 0, 1, 1], [], []>} : vector<2x64xbf16>, vector<64x64xbf16>, vector<2x64xf32> -> vector<2x64xf32>
    %cst_63 = arith.constant 1.250000e-01 : f32
    %107 = vector.broadcast %cst_63 : f32 to vector<2x64xf32>
    %108 = arith.mulf %106, %107 : vector<2x64xf32>
    %c5_64 = arith.constant 5 : index
    %c0_65 = arith.constant 0 : index
    %c0_66 = arith.constant 0 : index
    %109 = vector.load %arg4[%c5_64, %c0_65, %c0_66] : memref<8x1x64xf32, #tpu.memory_space<vmem>>, vector<1x1x64xf32>
    %110 = vector.shape_cast %109 : vector<1x1x64xf32> to vector<1x64xf32>
    %111 = vector.broadcast %110 : vector<1x64xf32> to vector<2x64xf32>
    %112 = arith.addf %108, %111 : vector<2x64xf32>
    %cst_67 = arith.constant 0.000000e+00 : f32
    %113 = vector.broadcast %cst_67 : f32 to vector<2x64xf32>
    %114 = arith.cmpf oge, %112, %113 : vector<2x64xf32>
    %cst_68 = arith.constant 2.000000e-01 : f32
    %115 = vector.broadcast %cst_68 : f32 to vector<2x64xf32>
    %116 = arith.mulf %115, %112 : vector<2x64xf32>
    %117 = arith.select %114, %112, %116 : vector<2x64xi1>, vector<2x64xf32>
    %cst_69 = arith.constant 1.41421354 : f32
    %118 = vector.broadcast %cst_69 : f32 to vector<2x64xf32>
    %119 = arith.mulf %117, %118 : vector<2x64xf32>
    %120 = arith.truncf %119 : vector<2x64xf32> to vector<2x64xbf16>
    %c6 = arith.constant 6 : index
    %c0_70 = arith.constant 0 : index
    %c0_71 = arith.constant 0 : index
    %121 = vector.load %arg3[%c6, %c0_70, %c0_71] : memref<8x64x64xbf16, #tpu.memory_space<vmem>>, vector<1x64x64xbf16>
    %122 = vector.shape_cast %121 : vector<1x64x64xbf16> to vector<64x64xbf16>
    %cst_72 = arith.constant dense<0.000000e+00> : vector<2x64xf32>
    %123 = tpu.matmul %120, %122, %cst_72 {dimension_numbers = #tpu.dot_dimension_numbers<[1], [0], [0], [1], [0, 0, 1, 1], [], []>} : vector<2x64xbf16>, vector<64x64xbf16>, vector<2x64xf32> -> vector<2x64xf32>
    %cst_73 = arith.constant 1.250000e-01 : f32
    %124 = vector.broadcast %cst_73 : f32 to vector<2x64xf32>
    %125 = arith.mulf %123, %124 : vector<2x64xf32>
    %c6_74 = arith.constant 6 : index
    %c0_75 = arith.constant 0 : index
    %c0_76 = arith.constant 0 : index
    %126 = vector.load %arg4[%c6_74, %c0_75, %c0_76] : memref<8x1x64xf32, #tpu.memory_space<vmem>>, vector<1x1x64xf32>
    %127 = vector.shape_cast %126 : vector<1x1x64xf32> to vector<1x64xf32>
    %128 = vector.broadcast %127 : vector<1x64xf32> to vector<2x64xf32>
    %129 = arith.addf %125, %128 : vector<2x64xf32>
    %cst_77 = arith.constant 0.000000e+00 : f32
    %130 = vector.broadcast %cst_77 : f32 to vector<2x64xf32>
    %131 = arith.cmpf oge, %129, %130 : vector<2x64xf32>
    %cst_78 = arith.constant 2.000000e-01 : f32
    %132 = vector.broadcast %cst_78 : f32 to vector<2x64xf32>
    %133 = arith.mulf %132, %129 : vector<2x64xf32>
    %134 = arith.select %131, %129, %133 : vector<2x64xi1>, vector<2x64xf32>
    %cst_79 = arith.constant 1.41421354 : f32
    %135 = vector.broadcast %cst_79 : f32 to vector<2x64xf32>
    %136 = arith.mulf %134, %135 : vector<2x64xf32>
    %137 = arith.truncf %136 : vector<2x64xf32> to vector<2x64xbf16>
    %c7 = arith.constant 7 : index
    %c0_80 = arith.constant 0 : index
    %c0_81 = arith.constant 0 : index
    %138 = vector.load %arg3[%c7, %c0_80, %c0_81] : memref<8x64x64xbf16, #tpu.memory_space<vmem>>, vector<1x64x64xbf16>
    %139 = vector.shape_cast %138 : vector<1x64x64xbf16> to vector<64x64xbf16>
    %cst_82 = arith.constant dense<0.000000e+00> : vector<2x64xf32>
    %140 = tpu.matmul %137, %139, %cst_82 {dimension_numbers = #tpu.dot_dimension_numbers<[1], [0], [0], [1], [0, 0, 1, 1], [], []>} : vector<2x64xbf16>, vector<64x64xbf16>, vector<2x64xf32> -> vector<2x64xf32>
    %cst_83 = arith.constant 1.250000e-01 : f32
    %141 = vector.broadcast %cst_83 : f32 to vector<2x64xf32>
    %142 = arith.mulf %140, %141 : vector<2x64xf32>
    %c7_84 = arith.constant 7 : index
    %c0_85 = arith.constant 0 : index
    %c0_86 = arith.constant 0 : index
    %143 = vector.load %arg4[%c7_84, %c0_85, %c0_86] : memref<8x1x64xf32, #tpu.memory_space<vmem>>, vector<1x1x64xf32>
    %144 = vector.shape_cast %143 : vector<1x1x64xf32> to vector<1x64xf32>
    %145 = vector.broadcast %144 : vector<1x64xf32> to vector<2x64xf32>
    %146 = arith.addf %142, %145 : vector<2x64xf32>
    %cst_87 = arith.constant 0.000000e+00 : f32
    %147 = vector.broadcast %cst_87 : f32 to vector<2x64xf32>
    %148 = arith.cmpf oge, %146, %147 : vector<2x64xf32>
    %cst_88 = arith.constant 2.000000e-01 : f32
    %149 = vector.broadcast %cst_88 : f32 to vector<2x64xf32>
    %150 = arith.mulf %149, %146 : vector<2x64xf32>
    %151 = arith.select %148, %146, %150 : vector<2x64xi1>, vector<2x64xf32>
    %cst_89 = arith.constant 1.41421354 : f32
    %152 = vector.broadcast %cst_89 : f32 to vector<2x64xf32>
    %153 = arith.mulf %151, %152 : vector<2x64xf32>
    %c0_90 = arith.constant 0 : index
    %c0_91 = arith.constant 0 : index
    %154 = vector.load %arg5[%c0_90, %c0_91] : memref<2x64xf32, #tpu.memory_space<vmem>>, vector<2x64xf32>
    tpu.vector_store %arg5[%c0_90, %c0_91], %153 {strides = array<i32>} : memref<2x64xf32, #tpu.memory_space<vmem>>, vector<2x64xf32>,
    return
  }
}

</mosaic_0001>

<llo_original>
// kernel: run.10
$region0: #{run.10}
  #allocation0 [shape = 'u32[]', space=smem, size = 0x4, offset = 0x4, fixed_abs, tag = 'smem constant byte address 0x4 - core index']
  #allocation1 [shape = 'u32[72,128]{1,0:T(1,128)}', space=vmem, size = 0x9000, scoped, tag = 'internal scratch']
  %s0 = inlined_call_operand.vmem [shape: bf16[512,3], index: 0, kind: input, shape index: {}]
  %s1 = inlined_call_operand.vmem [shape: bf16[3,16], index: 1, kind: input, shape index: {}]
  %s2 = inlined_call_operand.vmem [shape: f32[1,16], index: 2, kind: input, shape index: {}]
  %s3 = inlined_call_operand.vmem [shape: f32[512,16], index: 3, kind: output, shape index: {}]
  %s4 = sld [smem:[#allocation0]]
  $region45: #{run.10} parent=0
    _
  %s6 = ssub.s32 1, %s4
  %s7 = scalar_select 0, %s6, %s4
  loop: start=0, step=1, limit=4
  $region2: #{run.10} parent=0 // loop_pre_header
    _
  $region3: #{run.10} parent=0 // loop_header
    %s9 = sphi 0, %s13
    %p10 = scmp.ge.s32.totalorder %s9, 4
    %s19 = sphi 0, %s21
    %s22 = sphi 0, %s19
    %s23 = sphi 0, %s22
    %s39 = sphi 0, %s23
    %s43 = sphi 0, %s43
    %s45 = sphi 0, %s43
    %s46 = sphi 0, %s45
    %s60 = sphi 0, %s46
    %s64 = sphi 0, %s64
    %s66 = sphi 0, %s64
    %s67 = sphi 0, %s66
    %s81 = sphi 0, %s67
    %s87 = sphi 0, %s89
    %s90 = sphi 0, %s87
    %s91 = sphi 0, %s90
    %s107 = sphi 0, %s91
  $region4: #{run.10} parent=0 // loop_header_branch
    %12 = sbr.rel (%p10) target = $region8
  $region5: #{run.10} parent=0 // loop_body
    %s14 = ssub.s32 %s9, 1
    %s15 = ssub.s32 %s9, 2
    %s16 = sadd.s32 %s9, 1
    %s17 = ssub.s32 %s9, %s16
    %p18 = scmp.eq.s32.totalorder %s17, 0
    %s20 = sadd.s32 %s19, 1
    %s21 = scalar_select %p18, %s19, %s20
    %p24 = pneg %p18
    %p25 = scmp.eq.s32.totalorder %s9, 1
    %p26 = por %p24, %p25
    %p27 = scmp.ne.s32.totalorder %s19, %s22
    %p28 = scmp.eq.s32.totalorder %s9, 0
    %p29 = por %p27, %p28
    %p30 = scmp.ne.s32.totalorder %s19, %s22
    %p31 = scmp.eq.s32.totalorder %s14, 1
    %p32 = por %p30, %p31
    %p33 = scmp.ne.s32.totalorder %s22, %s23
    %p34 = scmp.eq.s32.totalorder %s14, 0
    %p35 = por %p33, %p34
    %p36 = scmp.ne.s32.totalorder %s22, %s23
    %p37 = scmp.eq.s32.totalorder %s15, 1
    %p38 = por %p36, %p37
    %p40 = scmp.ne.s32.totalorder %s23, %s39
    %p41 = scmp.eq.s32.totalorder %s15, 0
    %p42 = por %p40, %p41
    %s44 = sadd.s32 %s43, 1
    %p47 = scmp.eq.s32.totalorder %s9, 1
    %p48 = scmp.ne.s32.totalorder %s43, %s45
    %p49 = scmp.eq.s32.totalorder %s9, 0
    %p50 = por %p48, %p49
    %p51 = scmp.ne.s32.totalorder %s43, %s45
    %p52 = scmp.eq.s32.totalorder %s14, 1
    %p53 = por %p51, %p52
    %p54 = scmp.ne.s32.totalorder %s45, %s46
    %p55 = scmp.eq.s32.totalorder %s14, 0
    %p56 = por %p54, %p55
    %p57 = scmp.ne.s32.totalorder %s45, %s46
    %p58 = scmp.eq.s32.totalorder %s15, 1
    %p59 = por %p57, %p58
    %p61 = scmp.ne.s32.totalorder %s46, %s60
    %p62 = scmp.eq.s32.totalorder %s15, 0
    %p63 = por %p61, %p62
    %s65 = sadd.s32 %s64, 1
    %p68 = scmp.eq.s32.totalorder %s9, 1
    %p69 = scmp.ne.s32.totalorder %s64, %s66
    %p70 = scmp.eq.s32.totalorder %s9, 0
    %p71 = por %p69, %p70
    %p72 = scmp.ne.s32.totalorder %s64, %s66
    %p73 = scmp.eq.s32.totalorder %s14, 1
    %p74 = por %p72, %p73
    %p75 = scmp.ne.s32.totalorder %s66, %s67
    %p76 = scmp.eq.s32.totalorder %s14, 0
    %p77 = por %p75, %p76
    %p78 = scmp.ne.s32.totalorder %s66, %s67
    %p79 = scmp.eq.s32.totalorder %s15, 1
    %p80 = por %p78, %p79
    %p82 = scmp.ne.s32.totalorder %s67, %s81
    %p83 = scmp.eq.s32.totalorder %s15, 0
    %p84 = por %p82, %p83
    %s85 = ssub.s32 %s9, %s16
    %p86 = scmp.eq.s32.totalorder %s85, 0
    %s88 = sadd.s32 %s87, 1
    %s89 = scalar_select %p86, %s87, %s88
    %p92 = pneg %p86
    %p93 = scmp.eq.s32.totalorder %s9, 1
    %p94 = por %p92, %p93
    %p95 = scmp.ne.s32.totalorder %s87, %s90
    %p96 = scmp.eq.s32.totalorder %s9, 0
    %p97 = por %p95, %p96
    %p98 = scmp.ne.s32.totalorder %s87, %s90
    %p99 = scmp.eq.s32.totalorder %s14, 1
    %p100 = por %p98, %p99
    %p101 = scmp.ne.s32.totalorder %s90, %s91
    %p102 = scmp.eq.s32.totalorder %s14, 0
    %p103 = por %p101, %p102
    %p104 = scmp.ne.s32.totalorder %s90, %s91
    %p105 = scmp.eq.s32.totalorder %s15, 1
    %p106 = por %p104, %p105
    %p108 = scmp.ne.s32.totalorder %s91, %s107
    %p109 = scmp.eq.s32.totalorder %s15, 0
    %p110 = por %p108, %p109
    %p111 = scmp.le.s32.totalorder 1, %s9
    %p112 = scmp.lt.s32.totalorder %s9, 3
    %p113 = pnand %p111, %p112
    %p114 = pneg %p113
    // Predicated region
    $region9: #{run.10} parent=5 // pred_check
      _
    $region10: #{run.10} parent=5 // pred_check_branch
      %116 = sbr.rel (%p113) target = $region12
    $region11: #{run.10} parent=5 // pred_region
      %s117 = ssub.s32 %s9, 1
      // Predicated region
      $region13: #{run.10} parent=11 // pred_check
        %p118 = pneg %p56
      $region14: #{run.10} parent=11 // pred_check_branch
        %120 = sbr.rel (%p118) target = $region16
      $region15: #{run.10} parent=11 // pred_region
        _
      $region16: #{run.10} parent=11 // pred_fallthru
        _
      // Predicated region
      $region17: #{run.10} parent=11 // pred_check
        %p121 = pneg %p77
      $region18: #{run.10} parent=11 // pred_check_branch
        %123 = sbr.rel (%p121) target = $region20
      $region19: #{run.10} parent=11 // pred_region
        _
      $region20: #{run.10} parent=11 // pred_fallthru
        _
    $region12: #{run.10} parent=5 // pred_fallthru
      _
    %p124 = scmp.lt.s32.totalorder %s9, 2
    // Predicated region
    $region21: #{run.10} parent=5 // pred_check
      %p125 = pneg %p124
    $region22: #{run.10} parent=5 // pred_check_branch
      %127 = sbr.rel (%p125) target = $region24
    $region23: #{run.10} parent=5 // pred_region
      // Predicated region
      $region25: #{run.10} parent=23 // pred_check
        %p128 = pneg %p29
      $region26: #{run.10} parent=23 // pred_check_branch
        %130 = sbr.rel (%p128) target = $region28
      $region27: #{run.10} parent=23 // pred_region
        %s131 = smul.u32 32, %s9
        %p132 = scmp.lt.s32.totalorder %s131, 63
        %s133 = scalar_select %p132, %s131, 63
        %s134 = smul.addr %s133, 4
        %s135 = scalar_lea.vmem %s0, %s134
        %s136 = smul.u32 32, %s9
      $region28: #{run.10} parent=23 // pred_fallthru
        _
    $region24: #{run.10} parent=5 // pred_fallthru
      _
    %p137 = scmp.le.s32.totalorder 1, %s9
    %p138 = scmp.lt.s32.totalorder %s9, 3
    %p139 = pnand %p137, %p138
    %p140 = pneg %p139
    // Predicated region
    $region29: #{run.10} parent=5 // pred_check
      _
    $region30: #{run.10} parent=5 // pred_check_branch
      %142 = sbr.rel (%p139) target = $region32
    $region31: #{run.10} parent=5 // pred_region
      %s143 = ssub.s32 %s9, 1
      %s144 = smul.u32 32, %s14
      %p145 = scmp.lt.s32.totalorder %s144, 63
      %s146 = scalar_select %p145, %s144, 63
      %s147 = smul.addr %s146, 4
      %s148 = scalar_lea.vmem %s0, %s147
      %p149 = pneg %p35
      %p150 = pneg %p32
      %p151 = pneg %p56
      %p152 = pneg %p53
      %p153 = pneg %p77
      %p154 = pneg %p74
      %p155 = pneg %p103
      %p156 = pneg %p100
      %s157 = smul.u32 32, %s14
      %p158 = scmp.lt.s32.totalorder %s157, 63
      %s159 = scalar_select %p158, %s157, 63
      %s160 = smul.addr %s159, 8
      %s161 = scalar_lea.vmem %s3, %s160
      %s162 = smul.u32 32, %s14
      %p163 = scmp.lt.s32.totalorder %s162, 63
      %s164 = scalar_select %p163, %s162, 63
      %s165 = smul.addr %s164, 4
      %s166 = scalar_lea.vmem %s0, %s165
      %s167 = smul.u32 32, %s14
      %s168 = smul.u32 32, %s14
      %p169 = scmp.lt.s32.totalorder %s168, 63
      %s170 = scalar_select %p169, %s168, 63
      %s171 = smul.addr %s170, 8
      %s172 = scalar_lea.vmem %s3, %s171
      %s173 = smul.u32 32, %s14
      %v175 = vld [vmem:[%s166] sm:$0xf]
      %v176 = vld [vmem:[%s166 + $0x4] sm:$0xf]
      %v177 = vld [vmem:[%s166 + $0x8] sm:$0xf]
      %v178 = vld [vmem:[%s166 + $0xc] sm:$0xf]
      %v179 = vld [vmem:[%s166 + $0x10] sm:$0xf]
      %v180 = vld [vmem:[%s166 + $0x14] sm:$0xf]
      %v181 = vld [vmem:[%s166 + $0x18] sm:$0xf]
      %v182 = vld [vmem:[%s166 + $0x1c] sm:$0xf]
      %v183 = vld [vmem:[%s166 + $0x20] sm:$0xf]
      %v184 = vld [vmem:[%s166 + $0x24] sm:$0xf]
      %v185 = vld [vmem:[%s166 + $0x28] sm:$0xf]
      %v186 = vld [vmem:[%s166 + $0x2c] sm:$0xf]
      %v187 = vld [vmem:[%s166 + $0x30] sm:$0xf]
      %v188 = vld [vmem:[%s166 + $0x34] sm:$0xf]
      %v189 = vld [vmem:[%s166 + $0x38] sm:$0xf]
      %v190 = vld [vmem:[%s166 + $0x3c] sm:$0xf]
      %v191 = vld [vmem:[%s166 + $0x40] sm:$0xf]
      %v192 = vld [vmem:[%s166 + $0x44] sm:$0xf]
      %v193 = vld [vmem:[%s166 + $0x48] sm:$0xf]
      %v194 = vld [vmem:[%s166 + $0x4c] sm:$0xf]
      %v195 = vld [vmem:[%s166 + $0x50] sm:$0xf]
      %v196 = vld [vmem:[%s166 + $0x54] sm:$0xf]
      %v197 = vld [vmem:[%s166 + $0x58] sm:$0xf]
      %v198 = vld [vmem:[%s166 + $0x5c] sm:$0xf]
      %v199 = vld [vmem:[%s166 + $0x60] sm:$0xf]
      %v200 = vld [vmem:[%s166 + $0x64] sm:$0xf]
      %v201 = vld [vmem:[%s166 + $0x68] sm:$0xf]
      %v202 = vld [vmem:[%s166 + $0x6c] sm:$0xf]
      %v203 = vld [vmem:[%s166 + $0x70] sm:$0xf]
      %v204 = vld [vmem:[%s166 + $0x74] sm:$0xf]
      %v205 = vld [vmem:[%s166 + $0x78] sm:$0xf]
      %v206 = vld [vmem:[%s166 + $0x7c] sm:$0xf]
      %v207 = vld [vmem:[%s1] sm:$0x3]
      %v240 = vunpack.c.l.b16 %v175
      %v241 = vunpack.c.l.b16 %v176
      %v242 = vunpack.c.l.b16 %v177
      %v243 = vunpack.c.l.b16 %v178
      %v244 = vunpack.c.l.b16 %v179
      %v245 = vunpack.c.l.b16 %v180
      %v246 = vunpack.c.l.b16 %v181
      %v247 = vunpack.c.l.b16 %v182
      %v248 = vunpack.c.l.b16 %v183
      %v249 = vunpack.c.l.b16 %v184
      %v250 = vunpack.c.l.b16 %v185
      %v251 = vunpack.c.l.b16 %v186
      %v252 = vunpack.c.l.b16 %v187
      %v253 = vunpack.c.l.b16 %v188
      %v254 = vunpack.c.l.b16 %v189
      %v255 = vunpack.c.l.b16 %v190
      %v256 = vunpack.c.l.b16 %v191
      %v257 = vunpack.c.l.b16 %v192
      %v258 = vunpack.c.l.b16 %v193
      %v259 = vunpack.c.l.b16 %v194
      %v260 = vunpack.c.l.b16 %v195
      %v261 = vunpack.c.l.b16 %v196
      %v262 = vunpack.c.l.b16 %v197
      %v263 = vunpack.c.l.b16 %v198
      %v264 = vunpack.c.l.b16 %v199
      %v265 = vunpack.c.l.b16 %v200
      %v266 = vunpack.c.l.b16 %v201
      %v267 = vunpack.c.l.b16 %v202
      %v268 = vunpack.c.l.b16 %v203
      %v269 = vunpack.c.l.b16 %v204
      %v270 = vunpack.c.l.b16 %v205
      %v271 = vunpack.c.l.b16 %v206
      %v272 = vpack.c.b16 %v241, %v240
      %v273 = vpack.c.b16 %v243, %v242
      %v274 = vpack.c.b16 %v245, %v244
      %v275 = vpack.c.b16 %v247, %v246
      %v276 = vpack.c.b16 %v249, %v248
      %v277 = vpack.c.b16 %v251, %v250
      %v278 = vpack.c.b16 %v253, %v252
      %v279 = vpack.c.b16 %v255, %v254
      %v280 = vpack.c.b16 %v257, %v256
      %v281 = vpack.c.b16 %v259, %v258
      %v282 = vpack.c.b16 %v261, %v260
      %v283 = vpack.c.b16 %v263, %v262
      %v284 = vpack.c.b16 %v265, %v264
      %v285 = vpack.c.b16 %v267, %v266
      %v286 = vpack.c.b16 %v269, %v268
      %v287 = vpack.c.b16 %v271, %v270
      %vm288 = vcmask 23552
      %v290 = vsel %vm288, %v272, 0
      %v293 = vsel %vm288, %v273, 0
      %v296 = vsel %vm288, %v274, 0
      %v299 = vsel %vm288, %v275, 0
      %v302 = vsel %vm288, %v276, 0
      %v305 = vsel %vm288, %v277, 0
      %v308 = vsel %vm288, %v278, 0
      %v311 = vsel %vm288, %v279, 0
      %v314 = vsel %vm288, %v280, 0
      %v317 = vsel %vm288, %v281, 0
      %v320 = vsel %vm288, %v282, 0
      %v323 = vsel %vm288, %v283, 0
      %v326 = vsel %vm288, %v284, 0
      %v329 = vsel %vm288, %v285, 0
      %v332 = vsel %vm288, %v286, 0
      %v335 = vsel %vm288, %v287, 0
      %vm337 = vcmask 1040384
      %vm338 = vcmask 1041408
      %v339 = vsel %vm337, 4294967295, 65535
      %v340 = vsel %vm338, %v339, 0
      %v342 = vand.u32 %v207, %v340
      %344 = vmatpush.bf16.msra.mxu0 0
      %345 = vmatpush.bf16.msra.mxu0 0
      %346 = vmatpush.bf16.msra.mxu0 0
      %347 = vmatpush.bf16.msra.mxu0 0
      %348 = vmatpush.bf16.msra.mxu0 0
      %349 = vmatpush.bf16.msra.mxu0 0
      %350 = vmatpush.bf16.msra.mxu0 0
      %351 = vmatpush.bf16.msra.mxu0 %v342
      %352 = vmatmul.bf16.gmra.mxu0 %v290
      %v353 = vpop.f32.mrf.mxu0
      %v354 = vadd.f32 0.0, %v353
      %v355 = vpop.f32.mrf.mxu0
      %v356 = vadd.f32 0.0, %v355
      %357 = vmatmul.bf16.gmra.mxu0 %v293
      %v358 = vpop.f32.mrf.mxu0
      %v359 = vadd.f32 0.0, %v358
      %v360 = vpop.f32.mrf.mxu0
      %v361 = vadd.f32 0.0, %v360
      %362 = vmatmul.bf16.gmra.mxu0 %v296
      %v363 = vpop.f32.mrf.mxu0
      %v364 = vadd.f32 0.0, %v363
      %v365 = vpop.f32.mrf.mxu0
      %v366 = vadd.f32 0.0, %v365
      %367 = vmatmul.bf16.gmra.mxu0 %v299
      %v368 = vpop.f32.mrf.mxu0
      %v369 = vadd.f32 0.0, %v368
      %v370 = vpop.f32.mrf.mxu0
      %v371 = vadd.f32 0.0, %v370
      %372 = vmatmul.bf16.gmra.mxu0 %v302
      %v373 = vpop.f32.mrf.mxu0
      %v374 = vadd.f32 0.0, %v373
      %v375 = vpop.f32.mrf.mxu0
      %v376 = vadd.f32 0.0, %v375
      %377 = vmatmul.bf16.gmra.mxu0 %v305
      %v378 = vpop.f32.mrf.mxu0
      %v379 = vadd.f32 0.0, %v378
      %v380 = vpop.f32.mrf.mxu0
      %v381 = vadd.f32 0.0, %v380
      %382 = vmatmul.bf16.gmra.mxu0 %v308
      %v383 = vpop.f32.mrf.mxu0
      %v384 = vadd.f32 0.0, %v383
      %v385 = vpop.f32.mrf.mxu0
      %v386 = vadd.f32 0.0, %v385
      %387 = vmatmul.bf16.gmra.mxu0 %v311
      %v388 = vpop.f32.mrf.mxu0
      %v389 = vadd.f32 0.0, %v388
      %v390 = vpop.f32.mrf.mxu0
      %v391 = vadd.f32 0.0, %v390
      %392 = vmatmul.bf16.gmra.mxu0 %v314
      %v393 = vpop.f32.mrf.mxu0
      %v394 = vadd.f32 0.0, %v393
      %v395 = vpop.f32.mrf.mxu0
      %v396 = vadd.f32 0.0, %v395
      %397 = vmatmul.bf16.gmra.mxu0 %v317
      %v398 = vpop.f32.mrf.mxu0
      %v399 = vadd.f32 0.0, %v398
      %v400 = vpop.f32.mrf.mxu0
      %v401 = vadd.f32 0.0, %v400
      %402 = vmatmul.bf16.gmra.mxu0 %v320
      %v403 = vpop.f32.mrf.mxu0
      %v404 = vadd.f32 0.0, %v403
      %v405 = vpop.f32.mrf.mxu0
      %v406 = vadd.f32 0.0, %v405
      %407 = vmatmul.bf16.gmra.mxu0 %v323
      %v408 = vpop.f32.mrf.mxu0
      %v409 = vadd.f32 0.0, %v408
      %v410 = vpop.f32.mrf.mxu0
      %v411 = vadd.f32 0.0, %v410
      %412 = vmatmul.bf16.gmra.mxu0 %v326
      %v413 = vpop.f32.mrf.mxu0
      %v414 = vadd.f32 0.0, %v413
      %v415 = vpop.f32.mrf.mxu0
      %v416 = vadd.f32 0.0, %v415
      %417 = vmatmul.bf16.gmra.mxu0 %v329
      %v418 = vpop.f32.mrf.mxu0
      %v419 = vadd.f32 0.0, %v418
      %v420 = vpop.f32.mrf.mxu0
      %v421 = vadd.f32 0.0, %v420
      %422 = vmatmul.bf16.gmra.mxu0 %v332
      %v423 = vpop.f32.mrf.mxu0
      %v424 = vadd.f32 0.0, %v423
      %v425 = vpop.f32.mrf.mxu0
      %v426 = vadd.f32 0.0, %v425
      %427 = vmatmul.bf16.gmra.mxu0 %v335
      %v428 = vpop.f32.mrf.mxu0
      %v429 = vadd.f32 0.0, %v428
      %v430 = vpop.f32.mrf.mxu0
      %v431 = vadd.f32 0.0, %v430
      %432 = vdwg.mxu0
      %v433 = vmul.f32 %v354, 0.57735026
      %v434 = vmul.f32 %v356, 0.57735026
      %v435 = vmul.f32 %v359, 0.57735026
      %v436 = vmul.f32 %v361, 0.57735026
      %v437 = vmul.f32 %v364, 0.57735026
      %v438 = vmul.f32 %v366, 0.57735026
      %v439 = vmul.f32 %v369, 0.57735026
      %v440 = vmul.f32 %v371, 0.57735026
      %v441 = vmul.f32 %v374, 0.57735026
      %v442 = vmul.f32 %v376, 0.57735026
      %v443 = vmul.f32 %v379, 0.57735026
      %v444 = vmul.f32 %v381, 0.57735026
      %v445 = vmul.f32 %v384, 0.57735026
      %v446 = vmul.f32 %v386, 0.57735026
      %v447 = vmul.f32 %v389, 0.57735026
      %v448 = vmul.f32 %v391, 0.57735026
      %v449 = vmul.f32 %v394, 0.57735026
      %v450 = vmul.f32 %v396, 0.57735026
      %v451 = vmul.f32 %v399, 0.57735026
      %v452 = vmul.f32 %v401, 0.57735026
      %v453 = vmul.f32 %v404, 0.57735026
      %v454 = vmul.f32 %v406, 0.57735026
      %v455 = vmul.f32 %v409, 0.57735026
      %v456 = vmul.f32 %v411, 0.57735026
      %v457 = vmul.f32 %v414, 0.57735026
      %v458 = vmul.f32 %v416, 0.57735026
      %v459 = vmul.f32 %v419, 0.57735026
      %v460 = vmul.f32 %v421, 0.57735026
      %v461 = vmul.f32 %v424, 0.57735026
      %v462 = vmul.f32 %v426, 0.57735026
      %v463 = vmul.f32 %v429, 0.57735026
      %v464 = vmul.f32 %v431, 0.57735026
      %v465 = vld [vmem:[%s2] sm:$0x1]
      %v467 = vperm.slane %v465, 0
      %v469 = vadd.f32 %v433, %v467
      %v470 = vadd.f32 %v434, %v467
      %v471 = vadd.f32 %v435, %v467
      %v472 = vadd.f32 %v436, %v467
      %v473 = vadd.f32 %v437, %v467
      %v474 = vadd.f32 %v438, %v467
      %v475 = vadd.f32 %v439, %v467
      %v476 = vadd.f32 %v440, %v467
      %v477 = vadd.f32 %v441, %v467
      %v478 = vadd.f32 %v442, %v467
      %v479 = vadd.f32 %v443, %v467
      %v480 = vadd.f32 %v444, %v467
      %v481 = vadd.f32 %v445, %v467
      %v482 = vadd.f32 %v446, %v467
      %v483 = vadd.f32 %v447, %v467
      %v484 = vadd.f32 %v448, %v467
      %v485 = vadd.f32 %v449, %v467
      %v486 = vadd.f32 %v450, %v467
      %v487 = vadd.f32 %v451, %v467
      %v488 = vadd.f32 %v452, %v467
      %v489 = vadd.f32 %v453, %v467
      %v490 = vadd.f32 %v454, %v467
      %v491 = vadd.f32 %v455, %v467
      %v492 = vadd.f32 %v456, %v467
      %v493 = vadd.f32 %v457, %v467
      %v494 = vadd.f32 %v458, %v467
      %v495 = vadd.f32 %v459, %v467
      %v496 = vadd.f32 %v460, %v467
      %v497 = vadd.f32 %v461, %v467
      %v498 = vadd.f32 %v462, %v467
      %v499 = vadd.f32 %v463, %v467
      %v500 = vadd.f32 %v464, %v467
      %vm501 = vcmp.ge.f32.partialorder %v469, 0.0
      %vm502 = vcmp.ge.f32.partialorder %v470, 0.0
      %vm503 = vcmp.ge.f32.partialorder %v471, 0.0
      %vm504 = vcmp.ge.f32.partialorder %v472, 0.0
      %vm505 = vcmp.ge.f32.partialorder %v473, 0.0
      %vm506 = vcmp.ge.f32.partialorder %v474, 0.0
      %vm507 = vcmp.ge.f32.partialorder %v475, 0.0
      %vm508 = vcmp.ge.f32.partialorder %v476, 0.0
      %vm509 = vcmp.ge.f32.partialorder %v477, 0.0
      %vm510 = vcmp.ge.f32.partialorder %v478, 0.0
      %vm511 = vcmp.ge.f32.partialorder %v479, 0.0
      %vm512 = vcmp.ge.f32.partialorder %v480, 0.0
      %vm513 = vcmp.ge.f32.partialorder %v481, 0.0
      %vm514 = vcmp.ge.f32.partialorder %v482, 0.0
      %vm515 = vcmp.ge.f32.partialorder %v483, 0.0
      %vm516 = vcmp.ge.f32.partialorder %v484, 0.0
      %vm517 = vcmp.ge.f32.partialorder %v485, 0.0
      %vm518 = vcmp.ge.f32.partialorder %v486, 0.0
      %vm519 = vcmp.ge.f32.partialorder %v487, 0.0
      %vm520 = vcmp.ge.f32.partialorder %v488, 0.0
      %vm521 = vcmp.ge.f32.partialorder %v489, 0.0
      %vm522 = vcmp.ge.f32.partialorder %v490, 0.0
      %vm523 = vcmp.ge.f32.partialorder %v491, 0.0
      %vm524 = vcmp.ge.f32.partialorder %v492, 0.0
      %vm525 = vcmp.ge.f32.partialorder %v493, 0.0
      %vm526 = vcmp.ge.f32.partialorder %v494, 0.0
      %vm527 = vcmp.ge.f32.partialorder %v495, 0.0
      %vm528 = vcmp.ge.f32.partialorder %v496, 0.0
      %vm529 = vcmp.ge.f32.partialorder %v497, 0.0
      %vm530 = vcmp.ge.f32.partialorder %v498, 0.0
      %vm531 = vcmp.ge.f32.partialorder %v499, 0.0
      %vm532 = vcmp.ge.f32.partialorder %v500, 0.0
      %v533 = vmul.f32 %v469, 0.2
      %v534 = vmul.f32 %v470, 0.2
      %v535 = vmul.f32 %v471, 0.2
      %v536 = vmul.f32 %v472, 0.2
      %v537 = vmul.f32 %v473, 0.2
      %v538 = vmul.f32 %v474, 0.2
      %v539 = vmul.f32 %v475, 0.2
      %v540 = vmul.f32 %v476, 0.2
      %v541 = vmul.f32 %v477, 0.2
      %v542 = vmul.f32 %v478, 0.2
      %v543 = vmul.f32 %v479, 0.2
      %v544 = vmul.f32 %v480, 0.2
      %v545 = vmul.f32 %v481, 0.2
      %v546 = vmul.f32 %v482, 0.2
      %v547 = vmul.f32 %v483, 0.2
      %v548 = vmul.f32 %v484, 0.2
      %v549 = vmul.f32 %v485, 0.2
      %v550 = vmul.f32 %v486, 0.2
      %v551 = vmul.f32 %v487, 0.2
      %v552 = vmul.f32 %v488, 0.2
      %v553 = vmul.f32 %v489, 0.2
      %v554 = vmul.f32 %v490, 0.2
      %v555 = vmul.f32 %v491, 0.2
      %v556 = vmul.f32 %v492, 0.2
      %v557 = vmul.f32 %v493, 0.2
      %v558 = vmul.f32 %v494, 0.2
      %v559 = vmul.f32 %v495, 0.2
      %v560 = vmul.f32 %v496, 0.2
      %v561 = vmul.f32 %v497, 0.2
      %v562 = vmul.f32 %v498, 0.2
      %v563 = vmul.f32 %v499, 0.2
      %v564 = vmul.f32 %v500, 0.2
      %v565 = vsel %vm501, %v469, %v533
      %v566 = vsel %vm502, %v470, %v534
      %v567 = vsel %vm503, %v471, %v535
      %v568 = vsel %vm504, %v472, %v536
      %v569 = vsel %vm505, %v473, %v537
      %v570 = vsel %vm506, %v474, %v538
      %v571 = vsel %vm507, %v475, %v539
      %v572 = vsel %vm508, %v476, %v540
      %v573 = vsel %vm509, %v477, %v541
      %v574 = vsel %vm510, %v478, %v542
      %v575 = vsel %vm511, %v479, %v543
      %v576 = vsel %vm512, %v480, %v544
      %v577 = vsel %vm513, %v481, %v545
      %v578 = vsel %vm514, %v482, %v546
      %v579 = vsel %vm515, %v483, %v547
      %v580 = vsel %vm516, %v484, %v548
      %v581 = vsel %vm517, %v485, %v549
      %v582 = vsel %vm518, %v486, %v550
      %v583 = vsel %vm519, %v487, %v551
      %v584 = vsel %vm520, %v488, %v552
      %v585 = vsel %vm521, %v489, %v553
      %v586 = vsel %vm522, %v490, %v554
      %v587 = vsel %vm523, %v491, %v555
      %v588 = vsel %vm524, %v492, %v556
      %v589 = vsel %vm525, %v493, %v557
      %v590 = vsel %vm526, %v494, %v558
      %v591 = vsel %vm527, %v495, %v559
      %v592 = vsel %vm528, %v496, %v560
      %v593 = vsel %vm529, %v497, %v561
      %v594 = vsel %vm530, %v498, %v562
      %v595 = vsel %vm531, %v499, %v563
      %v596 = vsel %vm532, %v500, %v564
      %v597 = vmul.f32 %v565, 1.4142135
      %v598 = vmul.f32 %v566, 1.4142135
      %v599 = vmul.f32 %v567, 1.4142135
      %v600 = vmul.f32 %v568, 1.4142135
      %v601 = vmul.f32 %v569, 1.4142135
      %v602 = vmul.f32 %v570, 1.4142135
      %v603 = vmul.f32 %v571, 1.4142135
      %v604 = vmul.f32 %v572, 1.4142135
      %v605 = vmul.f32 %v573, 1.4142135
      %v606 = vmul.f32 %v574, 1.4142135
      %v607 = vmul.f32 %v575, 1.4142135
      %v608 = vmul.f32 %v576, 1.4142135
      %v609 = vmul.f32 %v577, 1.4142135
      %v610 = vmul.f32 %v578, 1.4142135
      %v611 = vmul.f32 %v579, 1.4142135
      %v612 = vmul.f32 %v580, 1.4142135
      %v613 = vmul.f32 %v581, 1.4142135
      %v614 = vmul.f32 %v582, 1.4142135
      %v615 = vmul.f32 %v583, 1.4142135
      %v616 = vmul.f32 %v584, 1.4142135
      %v617 = vmul.f32 %v585, 1.4142135
      %v618 = vmul.f32 %v586, 1.4142135
      %v619 = vmul.f32 %v587, 1.4142135
      %v620 = vmul.f32 %v588, 1.4142135
      %v621 = vmul.f32 %v589, 1.4142135
      %v622 = vmul.f32 %v590, 1.4142135
      %v623 = vmul.f32 %v591, 1.4142135
      %v624 = vmul.f32 %v592, 1.4142135
      %v625 = vmul.f32 %v593, 1.4142135
      %v626 = vmul.f32 %v594, 1.4142135
      %v627 = vmul.f32 %v595, 1.4142135
      %v628 = vmul.f32 %v596, 1.4142135
      %v629 = vmax.f32 %v597, -256.0
      %v630 = vmax.f32 %v598, -256.0
      %v631 = vmax.f32 %v599, -256.0
      %v632 = vmax.f32 %v600, -256.0
      %v633 = vmax.f32 %v601, -256.0
      %v634 = vmax.f32 %v602, -256.0
      %v635 = vmax.f32 %v603, -256.0
      %v636 = vmax.f32 %v604, -256.0
      %v637 = vmax.f32 %v605, -256.0
      %v638 = vmax.f32 %v606, -256.0
      %v639 = vmax.f32 %v607, -256.0
      %v640 = vmax.f32 %v608, -256.0
      %v641 = vmax.f32 %v609, -256.0
      %v642 = vmax.f32 %v610, -256.0
      %v643 = vmax.f32 %v611, -256.0
      %v644 = vmax.f32 %v612, -256.0
      %v645 = vmax.f32 %v613, -256.0
      %v646 = vmax.f32 %v614, -256.0
      %v647 = vmax.f32 %v615, -256.0
      %v648 = vmax.f32 %v616, -256.0
      %v649 = vmax.f32 %v617, -256.0
      %v650 = vmax.f32 %v618, -256.0
      %v651 = vmax.f32 %v619, -256.0
      %v652 = vmax.f32 %v620, -256.0
      %v653 = vmax.f32 %v621, -256.0
      %v654 = vmax.f32 %v622, -256.0
      %v655 = vmax.f32 %v623, -256.0
      %v656 = vmax.f32 %v624, -256.0
      %v657 = vmax.f32 %v625, -256.0
      %v658 = vmax.f32 %v626, -256.0
      %v659 = vmax.f32 %v627, -256.0
      %v660 = vmax.f32 %v628, -256.0
      %v661 = vmin.f32 %v629, 256.0
      %v662 = vmin.f32 %v630, 256.0
      %v663 = vmin.f32 %v631, 256.0
      %v664 = vmin.f32 %v632, 256.0
      %v665 = vmin.f32 %v633, 256.0
      %v666 = vmin.f32 %v634, 256.0
      %v667 = vmin.f32 %v635, 256.0
      %v668 = vmin.f32 %v636, 256.0
      %v669 = vmin.f32 %v637, 256.0
      %v670 = vmin.f32 %v638, 256.0
      %v671 = vmin.f32 %v639, 256.0
      %v672 = vmin.f32 %v640, 256.0
      %v673 = vmin.f32 %v641, 256.0
      %v674 = vmin.f32 %v642, 256.0
      %v675 = vmin.f32 %v643, 256.0
      %v676 = vmin.f32 %v644, 256.0
      %v677 = vmin.f32 %v645, 256.0
      %v678 = vmin.f32 %v646, 256.0
      %v679 = vmin.f32 %v647, 256.0
      %v680 = vmin.f32 %v648, 256.0
      %v681 = vmin.f32 %v649, 256.0
      %v682 = vmin.f32 %v650, 256.0
      %v683 = vmin.f32 %v651, 256.0
      %v684 = vmin.f32 %v652, 256.0
      %v685 = vmin.f32 %v653, 256.0
      %v686 = vmin.f32 %v654, 256.0
      %v687 = vmin.f32 %v655, 256.0
      %v688 = vmin.f32 %v656, 256.0
      %v689 = vmin.f32 %v657, 256.0
      %v690 = vmin.f32 %v658, 256.0
      %v691 = vmin.f32 %v659, 256.0
      %v692 = vmin.f32 %v660, 256.0
      %vm693 = vcmask 130048
      %694 = vst.msk [vmem:[%s172] sm:$0xff] %vm693, %v661
      %695 = vst.msk [vmem:[%s172 + $0x8] sm:$0xff] %vm693, %v662
      %696 = vst.msk [vmem:[%s172 + $0x10] sm:$0xff] %vm693, %v663
      %697 = vst.msk [vmem:[%s172 + $0x18] sm:$0xff] %vm693, %v664
      %698 = vst.msk [vmem:[%s172 + $0x20] sm:$0xff] %vm693, %v665
      %699 = vst.msk [vmem:[%s172 + $0x28] sm:$0xff] %vm693, %v666
      %700 = vst.msk [vmem:[%s172 + $0x30] sm:$0xff] %vm693, %v667
      %701 = vst.msk [vmem:[%s172 + $0x38] sm:$0xff] %vm693, %v668
      %702 = vst.msk [vmem:[%s172 + $0x40] sm:$0xff] %vm693, %v669
      %703 = vst.msk [vmem:[%s172 + $0x48] sm:$0xff] %vm693, %v670
      %704 = vst.msk [vmem:[%s172 + $0x50] sm:$0xff] %vm693, %v671
      %705 = vst.msk [vmem:[%s172 + $0x58] sm:$0xff] %vm693, %v672
      %706 = vst.msk [vmem:[%s172 + $0x60] sm:$0xff] %vm693, %v673
      %707 = vst.msk [vmem:[%s172 + $0x68] sm:$0xff] %vm693, %v674
      %708 = vst.msk [vmem:[%s172 + $0x70] sm:$0xff] %vm693, %v675
      %709 = vst.msk [vmem:[%s172 + $0x78] sm:$0xff] %vm693, %v676
      %710 = vst.msk [vmem:[%s172 + $0x80] sm:$0xff] %vm693, %v677
      %711 = vst.msk [vmem:[%s172 + $0x88] sm:$0xff] %vm693, %v678
      %712 = vst.msk [vmem:[%s172 + $0x90] sm:$0xff] %vm693, %v679
      %713 = vst.msk [vmem:[%s172 + $0x98] sm:$0xff] %vm693, %v680
      %714 = vst.msk [vmem:[%s172 + $0xa0] sm:$0xff] %vm693, %v681
      %715 = vst.msk [vmem:[%s172 + $0xa8] sm:$0xff] %vm693, %v682
      %716 = vst.msk [vmem:[%s172 + $0xb0] sm:$0xff] %vm693, %v683
      %717 = vst.msk [vmem:[%s172 + $0xb8] sm:$0xff] %vm693, %v684
      %718 = vst.msk [vmem:[%s172 + $0xc0] sm:$0xff] %vm693, %v685
      %719 = vst.msk [vmem:[%s172 + $0xc8] sm:$0xff] %vm693, %v686
      %720 = vst.msk [vmem:[%s172 + $0xd0] sm:$0xff] %vm693, %v687
      %721 = vst.msk [vmem:[%s172 + $0xd8] sm:$0xff] %vm693, %v688
      %722 = vst.msk [vmem:[%s172 + $0xe0] sm:$0xff] %vm693, %v689
      %723 = vst.msk [vmem:[%s172 + $0xe8] sm:$0xff] %vm693, %v690
      %724 = vst.msk [vmem:[%s172 + $0xf0] sm:$0xff] %vm693, %v691
      %725 = vst.msk [vmem:[%s172 + $0xf8] sm:$0xff] %vm693, %v692
      %s726 = smul.u32 32, %s14
      %p727 = scmp.lt.s32.totalorder %s726, 63
      %s728 = scalar_select %p727, %s726, 63
      %s729 = smul.addr %s728, 8
      %s730 = scalar_lea.vmem %s3, %s729
      // Predicated region
      $region33: #{run.10} parent=31 // pred_check
        %p731 = pneg %p100
      $region34: #{run.10} parent=31 // pred_check_branch
        %733 = sbr.rel (%p731) target = $region36
      $region35: #{run.10} parent=31 // pred_region
        %s734 = smul.u32 32, %s14
      $region36: #{run.10} parent=31 // pred_fallthru
        _
    $region32: #{run.10} parent=5 // pred_fallthru
      _
    %p735 = scmp.le.s32.totalorder 2, %s9
    // Predicated region
    $region37: #{run.10} parent=5 // pred_check
      %p736 = pneg %p735
    $region38: #{run.10} parent=5 // pred_check_branch
      %738 = sbr.rel (%p736) target = $region40
    $region39: #{run.10} parent=5 // pred_region
      %s739 = ssub.s32 %s9, 2
      // Predicated region
      $region41: #{run.10} parent=39 // pred_check
        %p740 = pneg %p106
      $region42: #{run.10} parent=39 // pred_check_branch
        %742 = sbr.rel (%p740) target = $region44
      $region43: #{run.10} parent=39 // pred_region
        %s743 = smul.u32 32, %s15
        %p744 = scmp.lt.s32.totalorder %s743, 63
        %s745 = scalar_select %p744, %s743, 63
        %s746 = smul.addr %s745, 8
        %s747 = scalar_lea.vmem %s3, %s746
      $region44: #{run.10} parent=39 // pred_fallthru
        _
    $region40: #{run.10} parent=5 // pred_fallthru
      _
  $region6: #{run.10} parent=0 // loop_footer
    %s13 = sadd.s32 1, %s9
  $region7: #{run.10} parent=0 // loop_footer_branch
    %8 = sbr.rel target = $region3
  $region8: #{run.10} parent=0 // loop_exit
    _

// kernel: run.11
$region0: #{run.11}
  #allocation0 [shape = 'u32[]', space=smem, size = 0x4, offset = 0x4, fixed_abs, tag = 'smem constant byte address 0x4 - core index']
  #allocation1 [shape = 'u32[72,128]{1,0:T(1,128)}', space=vmem, size = 0x9000, scoped, tag = 'internal scratch']
  %s0 = inlined_call_operand.vmem [shape: bf16[128,16], index: 0, kind: input, shape index: {}]
  %s1 = inlined_call_operand.vmem [shape: bf16[16,32], index: 1, kind: input, shape index: {}]
  %s2 = inlined_call_operand.vmem [shape: f32[1,32], index: 2, kind: input, shape index: {}]
  %s3 = inlined_call_operand.vmem [shape: f32[128,32], index: 3, kind: output, shape index: {}]
  %s4 = sld [smem:[#allocation0]]
  $region22: #{run.11} parent=0
    _
  %s6 = ssub.s32 1, %s4
  %s7 = scalar_select 0, %s6, %s4
  // Predicated region
  $region2: #{run.11} parent=0 // pred_check
    _
  $region3: #{run.11} parent=0 // pred_check_branch
    %9 = sbr.rel (0) target = $region5
  $region4: #{run.11} parent=0 // pred_region
    _
  $region5: #{run.11} parent=0 // pred_fallthru
    _
  // Predicated region
  $region6: #{run.11} parent=0 // pred_check
    _
  $region7: #{run.11} parent=0 // pred_check_branch
    %11 = sbr.rel (0) target = $region9
  $region8: #{run.11} parent=0 // pred_region
    _
  $region9: #{run.11} parent=0 // pred_fallthru
    _
  // Predicated region
  $region10: #{run.11} parent=0 // pred_check
    _
  $region11: #{run.11} parent=0 // pred_check_branch
    %13 = sbr.rel (0) target = $region13
  $region12: #{run.11} parent=0 // pred_region
    _
  $region13: #{run.11} parent=0 // pred_fallthru
    _
  %v15 = vld [vmem:[%s0] sm:$0xf]
  %v16 = vld [vmem:[%s0 + $0x4] sm:$0xf]
  %v17 = vld [vmem:[%s0 + $0x8] sm:$0xf]
  %v18 = vld [vmem:[%s0 + $0xc] sm:$0xf]
  %v19 = vld [vmem:[%s0 + $0x10] sm:$0xf]
  %v20 = vld [vmem:[%s0 + $0x14] sm:$0xf]
  %v21 = vld [vmem:[%s0 + $0x18] sm:$0xf]
  %v22 = vld [vmem:[%s0 + $0x1c] sm:$0xf]
  %v23 = vld [vmem:[%s0 + $0x20] sm:$0xf]
  %v24 = vld [vmem:[%s0 + $0x24] sm:$0xf]
  %v25 = vld [vmem:[%s0 + $0x28] sm:$0xf]
  %v26 = vld [vmem:[%s0 + $0x2c] sm:$0xf]
  %v27 = vld [vmem:[%s0 + $0x30] sm:$0xf]
  %v28 = vld [vmem:[%s0 + $0x34] sm:$0xf]
  %v29 = vld [vmem:[%s0 + $0x38] sm:$0xf]
  %v30 = vld [vmem:[%s0 + $0x3c] sm:$0xf]
  %v31 = vld [vmem:[%s1] sm:$0xf]
  %v32 = vld [vmem:[%s1 + $0x4] sm:$0xf]
  %v49 = vunpack.c.l.b16 %v15
  %v50 = vunpack.c.l.b16 %v16
  %v51 = vunpack.c.l.b16 %v17
  %v52 = vunpack.c.l.b16 %v18
  %v53 = vunpack.c.l.b16 %v19
  %v54 = vunpack.c.l.b16 %v20
  %v55 = vunpack.c.l.b16 %v21
  %v56 = vunpack.c.l.b16 %v22
  %v57 = vunpack.c.l.b16 %v23
  %v58 = vunpack.c.l.b16 %v24
  %v59 = vunpack.c.l.b16 %v25
  %v60 = vunpack.c.l.b16 %v26
  %v61 = vunpack.c.l.b16 %v27
  %v62 = vunpack.c.l.b16 %v28
  %v63 = vunpack.c.l.b16 %v29
  %v64 = vunpack.c.l.b16 %v30
  %v65 = vpack.c.b16 %v50, %v49
  %v66 = vpack.c.b16 %v52, %v51
  %v67 = vpack.c.b16 %v54, %v53
  %v68 = vpack.c.b16 %v56, %v55
  %v69 = vpack.c.b16 %v58, %v57
  %v70 = vpack.c.b16 %v60, %v59
  %v71 = vpack.c.b16 %v62, %v61
  %v72 = vpack.c.b16 %v64, %v63
  %v75 = vunpack.c.l.b16 %v31
  %v76 = vunpack.c.l.b16 %v32
  %v77 = vpack.c.b16 %v76, %v75
  %vm79 = vcmask 130048
  %v81 = vsel %vm79, %v65, 0
  %v84 = vsel %vm79, %v66, 0
  %v87 = vsel %vm79, %v67, 0
  %v90 = vsel %vm79, %v68, 0
  %v93 = vsel %vm79, %v69, 0
  %v96 = vsel %vm79, %v70, 0
  %v99 = vsel %vm79, %v71, 0
  %v102 = vsel %vm79, %v72, 0
  %104 = vmatpush.bf16.msra.mxu0 0
  %105 = vmatpush.bf16.msra.mxu0 0
  %106 = vmatpush.bf16.msra.mxu0 0
  %107 = vmatpush.bf16.msra.mxu0 0
  %108 = vmatpush.bf16.msra.mxu0 0
  %109 = vmatpush.bf16.msra.mxu0 0
  %110 = vmatpush.bf16.msra.mxu0 0
  %111 = vmatpush.bf16.msra.mxu0 %v77
  %112 = vmatmul.bf16.gmra.mxu0 %v81
  %v113 = vpop.f32.mrf.mxu0
  %v114 = vadd.f32 0.0, %v113
  %v115 = vpop.f32.mrf.mxu0
  %v116 = vadd.f32 0.0, %v115
  %117 = vmatmul.bf16.gmra.mxu0 %v84
  %v118 = vpop.f32.mrf.mxu0
  %v119 = vadd.f32 0.0, %v118
  %v120 = vpop.f32.mrf.mxu0
  %v121 = vadd.f32 0.0, %v120
  %122 = vmatmul.bf16.gmra.mxu0 %v87
  %v123 = vpop.f32.mrf.mxu0
  %v124 = vadd.f32 0.0, %v123
  %v125 = vpop.f32.mrf.mxu0
  %v126 = vadd.f32 0.0, %v125
  %127 = vmatmul.bf16.gmra.mxu0 %v90
  %v128 = vpop.f32.mrf.mxu0
  %v129 = vadd.f32 0.0, %v128
  %v130 = vpop.f32.mrf.mxu0
  %v131 = vadd.f32 0.0, %v130
  %132 = vmatmul.bf16.gmra.mxu0 %v93
  %v133 = vpop.f32.mrf.mxu0
  %v134 = vadd.f32 0.0, %v133
  %v135 = vpop.f32.mrf.mxu0
  %v136 = vadd.f32 0.0, %v135
  %137 = vmatmul.bf16.gmra.mxu0 %v96
  %v138 = vpop.f32.mrf.mxu0
  %v139 = vadd.f32 0.0, %v138
  %v140 = vpop.f32.mrf.mxu0
  %v141 = vadd.f32 0.0, %v140
  %142 = vmatmul.bf16.gmra.mxu0 %v99
  %v143 = vpop.f32.mrf.mxu0
  %v144 = vadd.f32 0.0, %v143
  %v145 = vpop.f32.mrf.mxu0
  %v146 = vadd.f32 0.0, %v145
  %147 = vmatmul.bf16.gmra.mxu0 %v102
  %v148 = vpop.f32.mrf.mxu0
  %v149 = vadd.f32 0.0, %v148
  %v150 = vpop.f32.mrf.mxu0
  %v151 = vadd.f32 0.0, %v150
  %152 = vdwg.mxu0
  %v153 = vmul.f32 %v114, 0.25
  %v154 = vmul.f32 %v116, 0.25
  %v155 = vmul.f32 %v119, 0.25
  %v156 = vmul.f32 %v121, 0.25
  %v157 = vmul.f32 %v124, 0.25
  %v158 = vmul.f32 %v126, 0.25
  %v159 = vmul.f32 %v129, 0.25
  %v160 = vmul.f32 %v131, 0.25
  %v161 = vmul.f32 %v134, 0.25
  %v162 = vmul.f32 %v136, 0.25
  %v163 = vmul.f32 %v139, 0.25
  %v164 = vmul.f32 %v141, 0.25
  %v165 = vmul.f32 %v144, 0.25
  %v166 = vmul.f32 %v146, 0.25
  %v167 = vmul.f32 %v149, 0.25
  %v168 = vmul.f32 %v151, 0.25
  %v169 = vld [vmem:[%s2] sm:$0x1]
  %v171 = vperm.slane %v169, 0
  %v173 = vadd.f32 %v153, %v171
  %v174 = vadd.f32 %v154, %v171
  %v175 = vadd.f32 %v155, %v171
  %v176 = vadd.f32 %v156, %v171
  %v177 = vadd.f32 %v157, %v171
  %v178 = vadd.f32 %v158, %v171
  %v179 = vadd.f32 %v159, %v171
  %v180 = vadd.f32 %v160, %v171
  %v181 = vadd.f32 %v161, %v171
  %v182 = vadd.f32 %v162, %v171
  %v183 = vadd.f32 %v163, %v171
  %v184 = vadd.f32 %v164, %v171
  %v185 = vadd.f32 %v165, %v171
  %v186 = vadd.f32 %v166, %v171
  %v187 = vadd.f32 %v167, %v171
  %v188 = vadd.f32 %v168, %v171
  %v189 = vmul.f32 %v173, 0.70710677
  %v190 = vmul.f32 %v174, 0.70710677
  %v191 = vmul.f32 %v175, 0.70710677
  %v192 = vmul.f32 %v176, 0.70710677
  %v193 = vmul.f32 %v177, 0.70710677
  %v194 = vmul.f32 %v178, 0.70710677
  %v195 = vmul.f32 %v179, 0.70710677
  %v196 = vmul.f32 %v180, 0.70710677
  %v197 = vmul.f32 %v181, 0.70710677
  %v198 = vmul.f32 %v182, 0.70710677
  %v199 = vmul.f32 %v183, 0.70710677
  %v200 = vmul.f32 %v184, 0.70710677
  %v201 = vmul.f32 %v185, 0.70710677
  %v202 = vmul.f32 %v186, 0.70710677
  %v203 = vmul.f32 %v187, 0.70710677
  %v204 = vmul.f32 %v188, 0.70710677
  %vm205 = vcmask 261120
  %206 = vst.msk [vmem:[%s3] sm:$0xff] %vm205, %v189
  %207 = vst.msk [vmem:[%s3 + $0x8] sm:$0xff] %vm205, %v190
  %208 = vst.msk [vmem:[%s3 + $0x10] sm:$0xff] %vm205, %v191
  %209 = vst.msk [vmem:[%s3 + $0x18] sm:$0xff] %vm205, %v192
  %210 = vst.msk [vmem:[%s3 + $0x20] sm:$0xff] %vm205, %v193
  %211 = vst.msk [vmem:[%s3 + $0x28] sm:$0xff] %vm205, %v194
  %212 = vst.msk [vmem:[%s3 + $0x30] sm:$0xff] %vm205, %v195
  %213 = vst.msk [vmem:[%s3 + $0x38] sm:$0xff] %vm205, %v196
  %214 = vst.msk [vmem:[%s3 + $0x40] sm:$0xff] %vm205, %v197
  %215 = vst.msk [vmem:[%s3 + $0x48] sm:$0xff] %vm205, %v198
  %216 = vst.msk [vmem:[%s3 + $0x50] sm:$0xff] %vm205, %v199
  %217 = vst.msk [vmem:[%s3 + $0x58] sm:$0xff] %vm205, %v200
  %218 = vst.msk [vmem:[%s3 + $0x60] sm:$0xff] %vm205, %v201
  %219 = vst.msk [vmem:[%s3 + $0x68] sm:$0xff] %vm205, %v202
  %220 = vst.msk [vmem:[%s3 + $0x70] sm:$0xff] %vm205, %v203
  %221 = vst.msk [vmem:[%s3 + $0x78] sm:$0xff] %vm205, %v204
  // Predicated region
  $region14: #{run.11} parent=0 // pred_check
    _
  $region15: #{run.11} parent=0 // pred_check_branch
    %223 = sbr.rel (0) target = $region17
  $region16: #{run.11} parent=0 // pred_region
    _
  $region17: #{run.11} parent=0 // pred_fallthru
    _
  // Predicated region
  $region18: #{run.11} parent=0 // pred_check
    _
  $region19: #{run.11} parent=0 // pred_check_branch
    %225 = sbr.rel (0) target = $region21
  $region20: #{run.11} parent=0 // pred_region
    _
  $region21: #{run.11} parent=0 // pred_fallthru
    _

// kernel: run.12
$region0: #{run.12}
  #allocation0 [shape = 'u32[]', space=smem, size = 0x4, offset = 0x4, fixed_abs, tag = 'smem constant byte address 0x4 - core index']
  #allocation1 [shape = 'u32[72,128]{1,0:T(1,128)}', space=vmem, size = 0x9000, scoped, tag = 'internal scratch']
  %s0 = inlined_call_operand.vmem [shape: bf16[512,144], index: 0, kind: input, shape index: {}]
  %s1 = inlined_call_operand.vmem [shape: bf16[144,16], index: 1, kind: input, shape index: {}]
  %s2 = inlined_call_operand.vmem [shape: f32[1,16], index: 2, kind: input, shape index: {}]
  %s3 = inlined_call_operand.vmem [shape: f32[512,16], index: 3, kind: output, shape index: {}]
  %s4 = sld [smem:[#allocation0]]
  $region45: #{run.12} parent=0
    _
  %s6 = ssub.s32 1, %s4
  %s7 = scalar_select 0, %s6, %s4
  loop: start=0, step=1, limit=4
  $region2: #{run.12} parent=0 // loop_pre_header
    _
  $region3: #{run.12} parent=0 // loop_header
    %s9 = sphi 0, %s13
    %p10 = scmp.ge.s32.totalorder %s9, 4
    %s19 = sphi 0, %s21
    %s22 = sphi 0, %s19
    %s23 = sphi 0, %s22
    %s39 = sphi 0, %s23
    %s43 = sphi 0, %s43
    %s45 = sphi 0, %s43
    %s46 = sphi 0, %s45
    %s60 = sphi 0, %s46
    %s64 = sphi 0, %s64
    %s66 = sphi 0, %s64
    %s67 = sphi 0, %s66
    %s81 = sphi 0, %s67
    %s87 = sphi 0, %s89
    %s90 = sphi 0, %s87
    %s91 = sphi 0, %s90
    %s107 = sphi 0, %s91
  $region4: #{run.12} parent=0 // loop_header_branch
    %12 = sbr.rel (%p10) target = $region8
  $region5: #{run.12} parent=0 // loop_body
    %s14 = ssub.s32 %s9, 1
    %s15 = ssub.s32 %s9, 2
    %s16 = sadd.s32 %s9, 1
    %s17 = ssub.s32 %s9, %s16
    %p18 = scmp.eq.s32.totalorder %s17, 0
    %s20 = sadd.s32 %s19, 1
    %s21 = scalar_select %p18, %s19, %s20
    %p24 = pneg %p18
    %p25 = scmp.eq.s32.totalorder %s9, 1
    %p26 = por %p24, %p25
    %p27 = scmp.ne.s32.totalorder %s19, %s22
    %p28 = scmp.eq.s32.totalorder %s9, 0
    %p29 = por %p27, %p28
    %p30 = scmp.ne.s32.totalorder %s19, %s22
    %p31 = scmp.eq.s32.totalorder %s14, 1
    %p32 = por %p30, %p31
    %p33 = scmp.ne.s32.totalorder %s22, %s23
    %p34 = scmp.eq.s32.totalorder %s14, 0
    %p35 = por %p33, %p34
    %p36 = scmp.ne.s32.totalorder %s22, %s23
    %p37 = scmp.eq.s32.totalorder %s15, 1
    %p38 = por %p36, %p37
    %p40 = scmp.ne.s32.totalorder %s23, %s39
    %p41 = scmp.eq.s32.totalorder %s15, 0
    %p42 = por %p40, %p41
    %s44 = sadd.s32 %s43, 1
    %p47 = scmp.eq.s32.totalorder %s9, 1
    %p48 = scmp.ne.s32.totalorder %s43, %s45
    %p49 = scmp.eq.s32.totalorder %s9, 0
    %p50 = por %p48, %p49
    %p51 = scmp.ne.s32.totalorder %s43, %s45
    %p52 = scmp.eq.s32.totalorder %s14, 1
    %p53 = por %p51, %p52
    %p54 = scmp.ne.s32.totalorder %s45, %s46
    %p55 = scmp.eq.s32.totalorder %s14, 0
    %p56 = por %p54, %p55
    %p57 = scmp.ne.s32.totalorder %s45, %s46
    %p58 = scmp.eq.s32.totalorder %s15, 1
    %p59 = por %p57, %p58
    %p61 = scmp.ne.s32.totalorder %s46, %s60
    %p62 = scmp.eq.s32.totalorder %s15, 0
    %p63 = por %p61, %p62
    %s65 = sadd.s32 %s64, 1
    %p68 = scmp.eq.s32.totalorder %s9, 1
    %p69 = scmp.ne.s32.totalorder %s64, %s66
    %p70 = scmp.eq.s32.totalorder %s9, 0
    %p71 = por %p69, %p70
    %p72 = scmp.ne.s32.totalorder %s64, %s66
    %p73 = scmp.eq.s32.totalorder %s14, 1
    %p74 = por %p72, %p73
    %p75 = scmp.ne.s32.totalorder %s66, %s67
    %p76 = scmp.eq.s32.totalorder %s14, 0
    %p77 = por %p75, %p76
    %p78 = scmp.ne.s32.totalorder %s66, %s67
    %p79 = scmp.eq.s32.totalorder %s15, 1
    %p80 = por %p78, %p79
    %p82 = scmp.ne.s32.totalorder %s67, %s81
    %p83 = scmp.eq.s32.totalorder %s15, 0
    %p84 = por %p82, %p83
    %s85 = ssub.s32 %s9, %s16
    %p86 = scmp.eq.s32.totalorder %s85, 0
    %s88 = sadd.s32 %s87, 1
    %s89 = scalar_select %p86, %s87, %s88
    %p92 = pneg %p86
    %p93 = scmp.eq.s32.totalorder %s9, 1
    %p94 = por %p92, %p93
    %p95 = scmp.ne.s32.totalorder %s87, %s90
    %p96 = scmp.eq.s32.totalorder %s9, 0
    %p97 = por %p95, %p96
    %p98 = scmp.ne.s32.totalorder %s87, %s90
    %p99 = scmp.eq.s32.totalorder %s14, 1
    %p100 = por %p98, %p99
    %p101 = scmp.ne.s32.totalorder %s90, %s91
    %p102 = scmp.eq.s32.totalorder %s14, 0
    %p103 = por %p101, %p102
    %p104 = scmp.ne.s32.totalorder %s90, %s91
    %p105 = scmp.eq.s32.totalorder %s15, 1
    %p106 = por %p104, %p105
    %p108 = scmp.ne.s32.totalorder %s91, %s107
    %p109 = scmp.eq.s32.totalorder %s15, 0
    %p110 = por %p108, %p109
    %p111 = scmp.le.s32.totalorder 1, %s9
    %p112 = scmp.lt.s32.totalorder %s9, 3
    %p113 = pnand %p111, %p112
    %p114 = pneg %p113
    // Predicated region
    $region9: #{run.12} parent=5 // pred_check
      _
    $region10: #{run.12} parent=5 // pred_check_branch
      %116 = sbr.rel (%p113) target = $region12
    $region11: #{run.12} parent=5 // pred_region
      %s117 = ssub.s32 %s9, 1
      // Predicated region
      $region13: #{run.12} parent=11 // pred_check
        %p118 = pneg %p56
      $region14: #{run.12} parent=11 // pred_check_branch
        %120 = sbr.rel (%p118) target = $region16
      $region15: #{run.12} parent=11 // pred_region
        _
      $region16: #{run.12} parent=11 // pred_fallthru
        _
      // Predicated region
      $region17: #{run.12} parent=11 // pred_check
        %p121 = pneg %p77
      $region18: #{run.12} parent=11 // pred_check_branch
        %123 = sbr.rel (%p121) target = $region20
      $region19: #{run.12} parent=11 // pred_region
        _
      $region20: #{run.12} parent=11 // pred_fallthru
        _
    $region12: #{run.12} parent=5 // pred_fallthru
      _
    %p124 = scmp.lt.s32.totalorder %s9, 2
    // Predicated region
    $region21: #{run.12} parent=5 // pred_check
      %p125 = pneg %p124
    $region22: #{run.12} parent=5 // pred_check_branch
      %127 = sbr.rel (%p125) target = $region24
    $region23: #{run.12} parent=5 // pred_region
      // Predicated region
      $region25: #{run.12} parent=23 // pred_check
        %p128 = pneg %p29
      $region26: #{run.12} parent=23 // pred_check_branch
        %130 = sbr.rel (%p128) target = $region28
      $region27: #{run.12} parent=23 // pred_region
        %s131 = smul.u32 32, %s9
        %p132 = scmp.lt.s32.totalorder %s131, 63
        %s133 = scalar_select %p132, %s131, 63
        %s134 = smul.addr %s133, 2
        %s135 = smul.addr %s134, 4
        %s136 = scalar_lea.vmem %s0, %s135
        %s137 = smul.u32 32, %s9
      $region28: #{run.12} parent=23 // pred_fallthru
        _
    $region24: #{run.12} parent=5 // pred_fallthru
      _
    %p138 = scmp.le.s32.totalorder 1, %s9
    %p139 = scmp.lt.s32.totalorder %s9, 3
    %p140 = pnand %p138, %p139
    %p141 = pneg %p140
    // Predicated region
    $region29: #{run.12} parent=5 // pred_check
      _
    $region30: #{run.12} parent=5 // pred_check_branch
      %143 = sbr.rel (%p140) target = $region32
    $region31: #{run.12} parent=5 // pred_region
      %s144 = ssub.s32 %s9, 1
      %s145 = smul.u32 32, %s14
      %p146 = scmp.lt.s32.totalorder %s145, 63
      %s147 = scalar_select %p146, %s145, 63
      %s148 = smul.addr %s147, 2
      %s149 = smul.addr %s148, 4
      %s150 = scalar_lea.vmem %s0, %s149
      %p151 = pneg %p35
      %p152 = pneg %p32
      %p153 = pneg %p56
      %p154 = pneg %p53
      %p155 = pneg %p77
      %p156 = pneg %p74
      %p157 = pneg %p103
      %p158 = pneg %p100
      %s159 = smul.u32 32, %s14
      %p160 = scmp.lt.s32.totalorder %s159, 63
      %s161 = scalar_select %p160, %s159, 63
      %s162 = smul.addr %s161, 8
      %s163 = scalar_lea.vmem %s3, %s162
      %s164 = smul.u32 32, %s14
      %p165 = scmp.lt.s32.totalorder %s164, 63
      %s166 = scalar_select %p165, %s164, 63
      %s167 = smul.addr %s166, 2
      %s168 = smul.addr %s167, 4
      %s169 = scalar_lea.vmem %s0, %s168
      %s170 = smul.u32 32, %s14
      %s171 = smul.u32 32, %s14
      %p172 = scmp.lt.s32.totalorder %s171, 63
      %s173 = scalar_select %p172, %s171, 63
      %s174 = smul.addr %s173, 8
      %s175 = scalar_lea.vmem %s3, %s174
      %s176 = smul.u32 32, %s14
      %v178 = vld [vmem:[%s169] sm:$0xff]
      %v179 = vld [vmem:[%s169 + $0x8] sm:$0xff]
      %v180 = vld [vmem:[%s169 + $0x10] sm:$0xff]
      %v181 = vld [vmem:[%s169 + $0x18] sm:$0xff]
      %v182 = vld [vmem:[%s169 + $0x20] sm:$0xff]
      %v183 = vld [vmem:[%s169 + $0x28] sm:$0xff]
      %v184 = vld [vmem:[%s169 + $0x30] sm:$0xff]
      %v185 = vld [vmem:[%s169 + $0x38] sm:$0xff]
      %v186 = vld [vmem:[%s169 + $0x40] sm:$0xff]
      %v187 = vld [vmem:[%s169 + $0x48] sm:$0xff]
      %v188 = vld [vmem:[%s169 + $0x50] sm:$0xff]
      %v189 = vld [vmem:[%s169 + $0x58] sm:$0xff]
      %v190 = vld [vmem:[%s169 + $0x60] sm:$0xff]
      %v191 = vld [vmem:[%s169 + $0x68] sm:$0xff]
      %v192 = vld [vmem:[%s169 + $0x70] sm:$0xff]
      %v193 = vld [vmem:[%s169 + $0x78] sm:$0xff]
      %v194 = vld [vmem:[%s169 + $0x80] sm:$0xff]
      %v195 = vld [vmem:[%s169 + $0x88] sm:$0xff]
      %v196 = vld [vmem:[%s169 + $0x90] sm:$0xff]
      %v197 = vld [vmem:[%s169 + $0x98] sm:$0xff]
      %v198 = vld [vmem:[%s169 + $0xa0] sm:$0xff]
      %v199 = vld [vmem:[%s169 + $0xa8] sm:$0xff]
      %v200 = vld [vmem:[%s169 + $0xb0] sm:$0xff]
      %v201 = vld [vmem:[%s169 + $0xb8] sm:$0xff]
      %v202 = vld [vmem:[%s169 + $0xc0] sm:$0xff]
      %v203 = vld [vmem:[%s169 + $0xc8] sm:$0xff]
      %v204 = vld [vmem:[%s169 + $0xd0] sm:$0xff]
      %v205 = vld [vmem:[%s169 + $0xd8] sm:$0xff]
      %v206 = vld [vmem:[%s169 + $0xe0] sm:$0xff]
      %v207 = vld [vmem:[%s169 + $0xe8] sm:$0xff]
      %v208 = vld [vmem:[%s169 + $0xf0] sm:$0xff]
      %v209 = vld [vmem:[%s169 + $0xf8] sm:$0xff]
      %v210 = vld [vmem:[%s1] sm:$0xf]
      %v211 = vld [vmem:[%s1 + $0x4] sm:$0xf]
      %v212 = vld [vmem:[%s1 + $0x8] sm:$0xf]
      %v213 = vld [vmem:[%s1 + $0xc] sm:$0xf]
      %v214 = vld [vmem:[%s1 + $0x10] sm:$0xf]
      %v215 = vld [vmem:[%s1 + $0x14] sm:$0xf]
      %v216 = vld [vmem:[%s1 + $0x18] sm:$0xf]
      %v217 = vld [vmem:[%s1 + $0x1c] sm:$0xf]
      %v218 = vld [vmem:[%s1 + $0x20] sm:$0xf]
      %v219 = vld [vmem:[%s1 + $0x24] sm:$0xf]
      %v220 = vld [vmem:[%s1 + $0x28] sm:$0xf]
      %v221 = vld [vmem:[%s1 + $0x2c] sm:$0xf]
      %v222 = vld [vmem:[%s1 + $0x30] sm:$0xf]
      %v223 = vld [vmem:[%s1 + $0x34] sm:$0xf]
      %v224 = vld [vmem:[%s1 + $0x38] sm:$0xf]
      %v225 = vld [vmem:[%s1 + $0x3c] sm:$0xf]
      %v226 = vld [vmem:[%s1 + $0x40] sm:$0xf]
      %v227 = vld [vmem:[%s1 + $0x44] sm:$0xf]
      %v260 = vunpack.c.l.b16 %v178
      %v261 = vunpack.c.h.b16 %v178
      %v262 = vunpack.c.l.b16 %v179
      %v263 = vunpack.c.h.b16 %v179
      %v264 = vunpack.c.l.b16 %v180
      %v265 = vunpack.c.h.b16 %v180
      %v266 = vunpack.c.l.b16 %v181
      %v267 = vunpack.c.h.b16 %v181
      %v268 = vunpack.c.l.b16 %v182
      %v269 = vunpack.c.h.b16 %v182
      %v270 = vunpack.c.l.b16 %v183
      %v271 = vunpack.c.h.b16 %v183
      %v272 = vunpack.c.l.b16 %v184
      %v273 = vunpack.c.h.b16 %v184
      %v274 = vunpack.c.l.b16 %v185
      %v275 = vunpack.c.h.b16 %v185
      %v276 = vunpack.c.l.b16 %v186
      %v277 = vunpack.c.h.b16 %v186
      %v278 = vunpack.c.l.b16 %v187
      %v279 = vunpack.c.h.b16 %v187
      %v280 = vunpack.c.l.b16 %v188
      %v281 = vunpack.c.h.b16 %v188
      %v282 = vunpack.c.l.b16 %v189
      %v283 = vunpack.c.h.b16 %v189
      %v284 = vunpack.c.l.b16 %v190
      %v285 = vunpack.c.h.b16 %v190
      %v286 = vunpack.c.l.b16 %v191
      %v287 = vunpack.c.h.b16 %v191
      %v288 = vunpack.c.l.b16 %v192
      %v289 = vunpack.c.h.b16 %v192
      %v290 = vunpack.c.l.b16 %v193
      %v291 = vunpack.c.h.b16 %v193
      %v292 = vunpack.c.l.b16 %v194
      %v293 = vunpack.c.h.b16 %v194
      %v294 = vunpack.c.l.b16 %v195
      %v295 = vunpack.c.h.b16 %v195
      %v296 = vunpack.c.l.b16 %v196
      %v297 = vunpack.c.h.b16 %v196
      %v298 = vunpack.c.l.b16 %v197
      %v299 = vunpack.c.h.b16 %v197
      %v300 = vunpack.c.l.b16 %v198
      %v301 = vunpack.c.h.b16 %v198
      %v302 = vunpack.c.l.b16 %v199
      %v303 = vunpack.c.h.b16 %v199
      %v304 = vunpack.c.l.b16 %v200
      %v305 = vunpack.c.h.b16 %v200
      %v306 = vunpack.c.l.b16 %v201
      %v307 = vunpack.c.h.b16 %v201
      %v308 = vunpack.c.l.b16 %v202
      %v309 = vunpack.c.h.b16 %v202
      %v310 = vunpack.c.l.b16 %v203
      %v311 = vunpack.c.h.b16 %v203
      %v312 = vunpack.c.l.b16 %v204
      %v313 = vunpack.c.h.b16 %v204
      %v314 = vunpack.c.l.b16 %v205
      %v315 = vunpack.c.h.b16 %v205
      %v316 = vunpack.c.l.b16 %v206
      %v317 = vunpack.c.h.b16 %v206
      %v318 = vunpack.c.l.b16 %v207
      %v319 = vunpack.c.h.b16 %v207
      %v320 = vunpack.c.l.b16 %v208
      %v321 = vunpack.c.h.b16 %v208
      %v322 = vunpack.c.l.b16 %v209
      %v323 = vunpack.c.h.b16 %v209
      %v324 = vpack.c.b16 %v262, %v260
      %v325 = vpack.c.b16 %v263, %v261
      %v326 = vpack.c.b16 %v266, %v264
      %v327 = vpack.c.b16 %v267, %v265
      %v328 = vpack.c.b16 %v270, %v268
      %v329 = vpack.c.b16 %v271, %v269
      %v330 = vpack.c.b16 %v274, %v272
      %v331 = vpack.c.b16 %v275, %v273
      %v332 = vpack.c.b16 %v278, %v276
      %v333 = vpack.c.b16 %v279, %v277
      %v334 = vpack.c.b16 %v282, %v280
      %v335 = vpack.c.b16 %v283, %v281
      %v336 = vpack.c.b16 %v286, %v284
      %v337 = vpack.c.b16 %v287, %v285
      %v338 = vpack.c.b16 %v290, %v288
      %v339 = vpack.c.b16 %v291, %v289
      %v340 = vpack.c.b16 %v294, %v292
      %v341 = vpack.c.b16 %v295, %v293
      %v342 = vpack.c.b16 %v298, %v296
      %v343 = vpack.c.b16 %v299, %v297
      %v344 = vpack.c.b16 %v302, %v300
      %v345 = vpack.c.b16 %v303, %v301
      %v346 = vpack.c.b16 %v306, %v304
      %v347 = vpack.c.b16 %v307, %v305
      %v348 = vpack.c.b16 %v310, %v308
      %v349 = vpack.c.b16 %v311, %v309
      %v350 = vpack.c.b16 %v314, %v312
      %v351 = vpack.c.b16 %v315, %v313
      %v352 = vpack.c.b16 %v318, %v316
      %v353 = vpack.c.b16 %v319, %v317
      %v354 = vpack.c.b16 %v322, %v320
      %v355 = vpack.c.b16 %v323, %v321
      %v390 = vunpack.c.l.b16 %v210
      %v391 = vunpack.c.l.b16 %v211
      %v392 = vunpack.c.l.b16 %v212
      %v393 = vunpack.c.l.b16 %v213
      %v394 = vunpack.c.l.b16 %v214
      %v395 = vunpack.c.l.b16 %v215
      %v396 = vunpack.c.l.b16 %v216
      %v397 = vunpack.c.l.b16 %v217
      %v398 = vunpack.c.l.b16 %v218
      %v399 = vunpack.c.l.b16 %v219
      %v400 = vunpack.c.l.b16 %v220
      %v401 = vunpack.c.l.b16 %v221
      %v402 = vunpack.c.l.b16 %v222
      %v403 = vunpack.c.l.b16 %v223
      %v404 = vunpack.c.l.b16 %v224
      %v405 = vunpack.c.l.b16 %v225
      %v406 = vunpack.c.l.b16 %v226
      %v407 = vunpack.c.l.b16 %v227
      %v408 = vpack.c.b16 %v391, %v390
      %v409 = vpack.c.b16 %v393, %v392
      %v410 = vpack.c.b16 %v395, %v394
      %v411 = vpack.c.b16 %v397, %v396
      %v412 = vpack.c.b16 %v399, %v398
      %v413 = vpack.c.b16 %v401, %v400
      %v414 = vpack.c.b16 %v403, %v402
      %v415 = vpack.c.b16 %v405, %v404
      %v416 = vpack.c.b16 %v407, %v406
      %vm426 = vcmask 130048
      %v428 = vsel %vm426, %v325, 0
      %v431 = vsel %vm426, %v327, 0
      %v434 = vsel %vm426, %v329, 0
      %v437 = vsel %vm426, %v331, 0
      %v440 = vsel %vm426, %v333, 0
      %v443 = vsel %vm426, %v335, 0
      %v446 = vsel %vm426, %v337, 0
      %v449 = vsel %vm426, %v339, 0
      %v452 = vsel %vm426, %v341, 0
      %v455 = vsel %vm426, %v343, 0
      %v458 = vsel %vm426, %v345, 0
      %v461 = vsel %vm426, %v347, 0
      %v464 = vsel %vm426, %v349, 0
      %v467 = vsel %vm426, %v351, 0
      %v470 = vsel %vm426, %v353, 0
      %v473 = vsel %vm426, %v355, 0
      %475 = vmatpush.bf16.msra.mxu0 %v415
      %476 = vmatpush.bf16.msra.mxu0 %v414
      %477 = vmatpush.bf16.msra.mxu0 %v413
      %478 = vmatpush.bf16.msra.mxu0 %v412
      %479 = vmatpush.bf16.msra.mxu0 %v411
      %480 = vmatpush.bf16.msra.mxu0 %v410
      %481 = vmatpush.bf16.msra.mxu0 %v409
      %482 = vmatpush.bf16.msra.mxu0 %v408
      %483 = vmatmul.bf16.gmra.mxu0 %v324
      %v484 = vpop.f32.mrf.mxu0
      %v485 = vadd.f32 0.0, %v484
      %v486 = vpop.f32.mrf.mxu0
      %v487 = vadd.f32 0.0, %v486
      %488 = vmatmul.bf16.gmra.mxu0 %v326
      %v489 = vpop.f32.mrf.mxu0
      %v490 = vadd.f32 0.0, %v489
      %v491 = vpop.f32.mrf.mxu0
      %v492 = vadd.f32 0.0, %v491
      %493 = vmatmul.bf16.gmra.mxu0 %v328
      %v494 = vpop.f32.mrf.mxu0
      %v495 = vadd.f32 0.0, %v494
      %v496 = vpop.f32.mrf.mxu0
      %v497 = vadd.f32 0.0, %v496
      %498 = vmatmul.bf16.gmra.mxu0 %v330
      %v499 = vpop.f32.mrf.mxu0
      %v500 = vadd.f32 0.0, %v499
      %v501 = vpop.f32.mrf.mxu0
      %v502 = vadd.f32 0.0, %v501
      %503 = vmatmul.bf16.gmra.mxu0 %v332
      %v504 = vpop.f32.mrf.mxu0
      %v505 = vadd.f32 0.0, %v504
      %v506 = vpop.f32.mrf.mxu0
      %v507 = vadd.f32 0.0, %v506
      %508 = vmatmul.bf16.gmra.mxu0 %v334
      %v509 = vpop.f32.mrf.mxu0
      %v510 = vadd.f32 0.0, %v509
      %v511 = vpop.f32.mrf.mxu0
      %v512 = vadd.f32 0.0, %v511
      %513 = vmatmul.bf16.gmra.mxu0 %v336
      %v514 = vpop.f32.mrf.mxu0
      %v515 = vadd.f32 0.0, %v514
      %v516 = vpop.f32.mrf.mxu0
      %v517 = vadd.f32 0.0, %v516
      %518 = vmatmul.bf16.gmra.mxu0 %v338
      %v519 = vpop.f32.mrf.mxu0
      %v520 = vadd.f32 0.0, %v519
      %v521 = vpop.f32.mrf.mxu0
      %v522 = vadd.f32 0.0, %v521
      %523 = vmatmul.bf16.gmra.mxu0 %v340
      %v524 = vpop.f32.mrf.mxu0
      %v525 = vadd.f32 0.0, %v524
      %v526 = vpop.f32.mrf.mxu0
      %v527 = vadd.f32 0.0, %v526
      %528 = vmatmul.bf16.gmra.mxu0 %v342
      %v529 = vpop.f32.mrf.mxu0
      %v530 = vadd.f32 0.0, %v529
      %v531 = vpop.f32.mrf.mxu0
      %v532 = vadd.f32 0.0, %v531
      %533 = vmatmul.bf16.gmra.mxu0 %v344
      %v534 = vpop.f32.mrf.mxu0
      %v535 = vadd.f32 0.0, %v534
      %v536 = vpop.f32.mrf.mxu0
      %v537 = vadd.f32 0.0, %v536
      %538 = vmatmul.bf16.gmra.mxu0 %v346
      %v539 = vpop.f32.mrf.mxu0
      %v540 = vadd.f32 0.0, %v539
      %v541 = vpop.f32.mrf.mxu0
      %v542 = vadd.f32 0.0, %v541
      %543 = vmatmul.bf16.gmra.mxu0 %v348
      %v544 = vpop.f32.mrf.mxu0
      %v545 = vadd.f32 0.0, %v544
      %v546 = vpop.f32.mrf.mxu0
      %v547 = vadd.f32 0.0, %v546
      %548 = vmatmul.bf16.gmra.mxu0 %v350
      %v549 = vpop.f32.mrf.mxu0
      %v550 = vadd.f32 0.0, %v549
      %v551 = vpop.f32.mrf.mxu0
      %v552 = vadd.f32 0.0, %v551
      %553 = vmatmul.bf16.gmra.mxu0 %v352
      %v554 = vpop.f32.mrf.mxu0
      %v555 = vadd.f32 0.0, %v554
      %v556 = vpop.f32.mrf.mxu0
      %v557 = vadd.f32 0.0, %v556
      %558 = vmatmul.bf16.gmra.mxu0 %v354
      %v559 = vpop.f32.mrf.mxu0
      %v560 = vadd.f32 0.0, %v559
      %v561 = vpop.f32.mrf.mxu0
      %v562 = vadd.f32 0.0, %v561
      %563 = vdwg.mxu0
      %564 = vmatpush.bf16.msra.mxu0 0
      %565 = vmatpush.bf16.msra.mxu0 0
      %566 = vmatpush.bf16.msra.mxu0 0
      %567 = vmatpush.bf16.msra.mxu0 0
      %568 = vmatpush.bf16.msra.mxu0 0
      %569 = vmatpush.bf16.msra.mxu0 0
      %570 = vmatpush.bf16.msra.mxu0 0
      %571 = vmatpush.bf16.msra.mxu0 %v416
      %572 = vmatmul.bf16.gmra.mxu0 %v428
      %v573 = vpop.f32.mrf.mxu0
      %v574 = vadd.f32 %v485, %v573
      %v575 = vpop.f32.mrf.mxu0
      %v576 = vadd.f32 %v487, %v575
      %577 = vmatmul.bf16.gmra.mxu0 %v431
      %v578 = vpop.f32.mrf.mxu0
      %v579 = vadd.f32 %v490, %v578
      %v580 = vpop.f32.mrf.mxu0
      %v581 = vadd.f32 %v492, %v580
      %582 = vmatmul.bf16.gmra.mxu0 %v434
      %v583 = vpop.f32.mrf.mxu0
      %v584 = vadd.f32 %v495, %v583
      %v585 = vpop.f32.mrf.mxu0
      %v586 = vadd.f32 %v497, %v585
      %587 = vmatmul.bf16.gmra.mxu0 %v437
      %v588 = vpop.f32.mrf.mxu0
      %v589 = vadd.f32 %v500, %v588
      %v590 = vpop.f32.mrf.mxu0
      %v591 = vadd.f32 %v502, %v590
      %592 = vmatmul.bf16.gmra.mxu0 %v440
      %v593 = vpop.f32.mrf.mxu0
      %v594 = vadd.f32 %v505, %v593
      %v595 = vpop.f32.mrf.mxu0
      %v596 = vadd.f32 %v507, %v595
      %597 = vmatmul.bf16.gmra.mxu0 %v443
      %v598 = vpop.f32.mrf.mxu0
      %v599 = vadd.f32 %v510, %v598
      %v600 = vpop.f32.mrf.mxu0
      %v601 = vadd.f32 %v512, %v600
      %602 = vmatmul.bf16.gmra.mxu0 %v446
      %v603 = vpop.f32.mrf.mxu0
      %v604 = vadd.f32 %v515, %v603
      %v605 = vpop.f32.mrf.mxu0
      %v606 = vadd.f32 %v517, %v605
      %607 = vmatmul.bf16.gmra.mxu0 %v449
      %v608 = vpop.f32.mrf.mxu0
      %v609 = vadd.f32 %v520, %v608
      %v610 = vpop.f32.mrf.mxu0
      %v611 = vadd.f32 %v522, %v610
      %612 = vmatmul.bf16.gmra.mxu0 %v452
      %v613 = vpop.f32.mrf.mxu0
      %v614 = vadd.f32 %v525, %v613
      %v615 = vpop.f32.mrf.mxu0
      %v616 = vadd.f32 %v527, %v615
      %617 = vmatmul.bf16.gmra.mxu0 %v455
      %v618 = vpop.f32.mrf.mxu0
      %v619 = vadd.f32 %v530, %v618
      %v620 = vpop.f32.mrf.mxu0
      %v621 = vadd.f32 %v532, %v620
      %622 = vmatmul.bf16.gmra.mxu0 %v458
      %v623 = vpop.f32.mrf.mxu0
      %v624 = vadd.f32 %v535, %v623
      %v625 = vpop.f32.mrf.mxu0
      %v626 = vadd.f32 %v537, %v625
      %627 = vmatmul.bf16.gmra.mxu0 %v461
      %v628 = vpop.f32.mrf.mxu0
      %v629 = vadd.f32 %v540, %v628
      %v630 = vpop.f32.mrf.mxu0
      %v631 = vadd.f32 %v542, %v630
      %632 = vmatmul.bf16.gmra.mxu0 %v464
      %v633 = vpop.f32.mrf.mxu0
      %v634 = vadd.f32 %v545, %v633
      %v635 = vpop.f32.mrf.mxu0
      %v636 = vadd.f32 %v547, %v635
      %637 = vmatmul.bf16.gmra.mxu0 %v467
      %v638 = vpop.f32.mrf.mxu0
      %v639 = vadd.f32 %v550, %v638
      %v640 = vpop.f32.mrf.mxu0
      %v641 = vadd.f32 %v552, %v640
      %642 = vmatmul.bf16.gmra.mxu0 %v470
      %v643 = vpop.f32.mrf.mxu0
      %v644 = vadd.f32 %v555, %v643
      %v645 = vpop.f32.mrf.mxu0
      %v646 = vadd.f32 %v557, %v645
      %647 = vmatmul.bf16.gmra.mxu0 %v473
      %v648 = vpop.f32.mrf.mxu0
      %v649 = vadd.f32 %v560, %v648
      %v650 = vpop.f32.mrf.mxu0
      %v651 = vadd.f32 %v562, %v650
      %652 = vdwg.mxu0
      %v653 = vmul.f32 %v574, 0.083333336
      %v654 = vmul.f32 %v576, 0.083333336
      %v655 = vmul.f32 %v579, 0.083333336
      %v656 = vmul.f32 %v581, 0.083333336
      %v657 = vmul.f32 %v584, 0.083333336
      %v658 = vmul.f32 %v586, 0.083333336
      %v659 = vmul.f32 %v589, 0.083333336
      %v660 = vmul.f32 %v591, 0.083333336
      %v661 = vmul.f32 %v594, 0.083333336
      %v662 = vmul.f32 %v596, 0.083333336
      %v663 = vmul.f32 %v599, 0.083333336
      %v664 = vmul.f32 %v601, 0.083333336
      %v665 = vmul.f32 %v604, 0.083333336
      %v666 = vmul.f32 %v606, 0.083333336
      %v667 = vmul.f32 %v609, 0.083333336
      %v668 = vmul.f32 %v611, 0.083333336
      %v669 = vmul.f32 %v614, 0.083333336
      %v670 = vmul.f32 %v616, 0.083333336
      %v671 = vmul.f32 %v619, 0.083333336
      %v672 = vmul.f32 %v621, 0.083333336
      %v673 = vmul.f32 %v624, 0.083333336
      %v674 = vmul.f32 %v626, 0.083333336
      %v675 = vmul.f32 %v629, 0.083333336
      %v676 = vmul.f32 %v631, 0.083333336
      %v677 = vmul.f32 %v634, 0.083333336
      %v678 = vmul.f32 %v636, 0.083333336
      %v679 = vmul.f32 %v639, 0.083333336
      %v680 = vmul.f32 %v641, 0.083333336
      %v681 = vmul.f32 %v644, 0.083333336
      %v682 = vmul.f32 %v646, 0.083333336
      %v683 = vmul.f32 %v649, 0.083333336
      %v684 = vmul.f32 %v651, 0.083333336
      %v685 = vld [vmem:[%s2] sm:$0x1]
      %v687 = vperm.slane %v685, 0
      %v689 = vadd.f32 %v653, %v687
      %v690 = vadd.f32 %v654, %v687
      %v691 = vadd.f32 %v655, %v687
      %v692 = vadd.f32 %v656, %v687
      %v693 = vadd.f32 %v657, %v687
      %v694 = vadd.f32 %v658, %v687
      %v695 = vadd.f32 %v659, %v687
      %v696 = vadd.f32 %v660, %v687
      %v697 = vadd.f32 %v661, %v687
      %v698 = vadd.f32 %v662, %v687
      %v699 = vadd.f32 %v663, %v687
      %v700 = vadd.f32 %v664, %v687
      %v701 = vadd.f32 %v665, %v687
      %v702 = vadd.f32 %v666, %v687
      %v703 = vadd.f32 %v667, %v687
      %v704 = vadd.f32 %v668, %v687
      %v705 = vadd.f32 %v669, %v687
      %v706 = vadd.f32 %v670, %v687
      %v707 = vadd.f32 %v671, %v687
      %v708 = vadd.f32 %v672, %v687
      %v709 = vadd.f32 %v673, %v687
      %v710 = vadd.f32 %v674, %v687
      %v711 = vadd.f32 %v675, %v687
      %v712 = vadd.f32 %v676, %v687
      %v713 = vadd.f32 %v677, %v687
      %v714 = vadd.f32 %v678, %v687
      %v715 = vadd.f32 %v679, %v687
      %v716 = vadd.f32 %v680, %v687
      %v717 = vadd.f32 %v681, %v687
      %v718 = vadd.f32 %v682, %v687
      %v719 = vadd.f32 %v683, %v687
      %v720 = vadd.f32 %v684, %v687
      %vm721 = vcmp.ge.f32.partialorder %v689, 0.0
      %vm722 = vcmp.ge.f32.partialorder %v690, 0.0
      %vm723 = vcmp.ge.f32.partialorder %v691, 0.0
      %vm724 = vcmp.ge.f32.partialorder %v692, 0.0
      %vm725 = vcmp.ge.f32.partialorder %v693, 0.0
      %vm726 = vcmp.ge.f32.partialorder %v694, 0.0
      %vm727 = vcmp.ge.f32.partialorder %v695, 0.0
      %vm728 = vcmp.ge.f32.partialorder %v696, 0.0
      %vm729 = vcmp.ge.f32.partialorder %v697, 0.0
      %vm730 = vcmp.ge.f32.partialorder %v698, 0.0
      %vm731 = vcmp.ge.f32.partialorder %v699, 0.0
      %vm732 = vcmp.ge.f32.partialorder %v700, 0.0
      %vm733 = vcmp.ge.f32.partialorder %v701, 0.0
      %vm734 = vcmp.ge.f32.partialorder %v702, 0.0
      %vm735 = vcmp.ge.f32.partialorder %v703, 0.0
      %vm736 = vcmp.ge.f32.partialorder %v704, 0.0
      %vm737 = vcmp.ge.f32.partialorder %v705, 0.0
      %vm738 = vcmp.ge.f32.partialorder %v706, 0.0
      %vm739 = vcmp.ge.f32.partialorder %v707, 0.0
      %vm740 = vcmp.ge.f32.partialorder %v708, 0.0
      %vm741 = vcmp.ge.f32.partialorder %v709, 0.0
      %vm742 = vcmp.ge.f32.partialorder %v710, 0.0
      %vm743 = vcmp.ge.f32.partialorder %v711, 0.0
      %vm744 = vcmp.ge.f32.partialorder %v712, 0.0
      %vm745 = vcmp.ge.f32.partialorder %v713, 0.0
      %vm746 = vcmp.ge.f32.partialorder %v714, 0.0
      %vm747 = vcmp.ge.f32.partialorder %v715, 0.0
      %vm748 = vcmp.ge.f32.partialorder %v716, 0.0
      %vm749 = vcmp.ge.f32.partialorder %v717, 0.0
      %vm750 = vcmp.ge.f32.partialorder %v718, 0.0
      %vm751 = vcmp.ge.f32.partialorder %v719, 0.0
      %vm752 = vcmp.ge.f32.partialorder %v720, 0.0
      %v753 = vmul.f32 %v689, 0.2
      %v754 = vmul.f32 %v690, 0.2
      %v755 = vmul.f32 %v691, 0.2
      %v756 = vmul.f32 %v692, 0.2
      %v757 = vmul.f32 %v693, 0.2
      %v758 = vmul.f32 %v694, 0.2
      %v759 = vmul.f32 %v695, 0.2
      %v760 = vmul.f32 %v696, 0.2
      %v761 = vmul.f32 %v697, 0.2
      %v762 = vmul.f32 %v698, 0.2
      %v763 = vmul.f32 %v699, 0.2
      %v764 = vmul.f32 %v700, 0.2
      %v765 = vmul.f32 %v701, 0.2
      %v766 = vmul.f32 %v702, 0.2
      %v767 = vmul.f32 %v703, 0.2
      %v768 = vmul.f32 %v704, 0.2
      %v769 = vmul.f32 %v705, 0.2
      %v770 = vmul.f32 %v706, 0.2
      %v771 = vmul.f32 %v707, 0.2
      %v772 = vmul.f32 %v708, 0.2
      %v773 = vmul.f32 %v709, 0.2
      %v774 = vmul.f32 %v710, 0.2
      %v775 = vmul.f32 %v711, 0.2
      %v776 = vmul.f32 %v712, 0.2
      %v777 = vmul.f32 %v713, 0.2
      %v778 = vmul.f32 %v714, 0.2
      %v779 = vmul.f32 %v715, 0.2
      %v780 = vmul.f32 %v716, 0.2
      %v781 = vmul.f32 %v717, 0.2
      %v782 = vmul.f32 %v718, 0.2
      %v783 = vmul.f32 %v719, 0.2
      %v784 = vmul.f32 %v720, 0.2
      %v785 = vsel %vm721, %v689, %v753
      %v786 = vsel %vm722, %v690, %v754
      %v787 = vsel %vm723, %v691, %v755
      %v788 = vsel %vm724, %v692, %v756
      %v789 = vsel %vm725, %v693, %v757
      %v790 = vsel %vm726, %v694, %v758
      %v791 = vsel %vm727, %v695, %v759
      %v792 = vsel %vm728, %v696, %v760
      %v793 = vsel %vm729, %v697, %v761
      %v794 = vsel %vm730, %v698, %v762
      %v795 = vsel %vm731, %v699, %v763
      %v796 = vsel %vm732, %v700, %v764
      %v797 = vsel %vm733, %v701, %v765
      %v798 = vsel %vm734, %v702, %v766
      %v799 = vsel %vm735, %v703, %v767
      %v800 = vsel %vm736, %v704, %v768
      %v801 = vsel %vm737, %v705, %v769
      %v802 = vsel %vm738, %v706, %v770
      %v803 = vsel %vm739, %v707, %v771
      %v804 = vsel %vm740, %v708, %v772
      %v805 = vsel %vm741, %v709, %v773
      %v806 = vsel %vm742, %v710, %v774
      %v807 = vsel %vm743, %v711, %v775
      %v808 = vsel %vm744, %v712, %v776
      %v809 = vsel %vm745, %v713, %v777
      %v810 = vsel %vm746, %v714, %v778
      %v811 = vsel %vm747, %v715, %v779
      %v812 = vsel %vm748, %v716, %v780
      %v813 = vsel %vm749, %v717, %v781
      %v814 = vsel %vm750, %v718, %v782
      %v815 = vsel %vm751, %v719, %v783
      %v816 = vsel %vm752, %v720, %v784
      %v817 = vmul.f32 %v785, 1.4142135
      %v818 = vmul.f32 %v786, 1.4142135
      %v819 = vmul.f32 %v787, 1.4142135
      %v820 = vmul.f32 %v788, 1.4142135
      %v821 = vmul.f32 %v789, 1.4142135
      %v822 = vmul.f32 %v790, 1.4142135
      %v823 = vmul.f32 %v791, 1.4142135
      %v824 = vmul.f32 %v792, 1.4142135
      %v825 = vmul.f32 %v793, 1.4142135
      %v826 = vmul.f32 %v794, 1.4142135
      %v827 = vmul.f32 %v795, 1.4142135
      %v828 = vmul.f32 %v796, 1.4142135
      %v829 = vmul.f32 %v797, 1.4142135
      %v830 = vmul.f32 %v798, 1.4142135
      %v831 = vmul.f32 %v799, 1.4142135
      %v832 = vmul.f32 %v800, 1.4142135
      %v833 = vmul.f32 %v801, 1.4142135
      %v834 = vmul.f32 %v802, 1.4142135
      %v835 = vmul.f32 %v803, 1.4142135
      %v836 = vmul.f32 %v804, 1.4142135
      %v837 = vmul.f32 %v805, 1.4142135
      %v838 = vmul.f32 %v806, 1.4142135
      %v839 = vmul.f32 %v807, 1.4142135
      %v840 = vmul.f32 %v808, 1.4142135
      %v841 = vmul.f32 %v809, 1.4142135
      %v842 = vmul.f32 %v810, 1.4142135
      %v843 = vmul.f32 %v811, 1.4142135
      %v844 = vmul.f32 %v812, 1.4142135
      %v845 = vmul.f32 %v813, 1.4142135
      %v846 = vmul.f32 %v814, 1.4142135
      %v847 = vmul.f32 %v815, 1.4142135
      %v848 = vmul.f32 %v816, 1.4142135
      %v849 = vmax.f32 %v817, -256.0
      %v850 = vmax.f32 %v818, -256.0
      %v851 = vmax.f32 %v819, -256.0
      %v852 = vmax.f32 %v820, -256.0
      %v853 = vmax.f32 %v821, -256.0
      %v854 = vmax.f32 %v822, -256.0
      %v855 = vmax.f32 %v823, -256.0
      %v856 = vmax.f32 %v824, -256.0
      %v857 = vmax.f32 %v825, -256.0
      %v858 = vmax.f32 %v826, -256.0
      %v859 = vmax.f32 %v827, -256.0
      %v860 = vmax.f32 %v828, -256.0
      %v861 = vmax.f32 %v829, -256.0
      %v862 = vmax.f32 %v830, -256.0
      %v863 = vmax.f32 %v831, -256.0
      %v864 = vmax.f32 %v832, -256.0
      %v865 = vmax.f32 %v833, -256.0
      %v866 = vmax.f32 %v834, -256.0
      %v867 = vmax.f32 %v835, -256.0
      %v868 = vmax.f32 %v836, -256.0
      %v869 = vmax.f32 %v837, -256.0
      %v870 = vmax.f32 %v838, -256.0
      %v871 = vmax.f32 %v839, -256.0
      %v872 = vmax.f32 %v840, -256.0
      %v873 = vmax.f32 %v841, -256.0
      %v874 = vmax.f32 %v842, -256.0
      %v875 = vmax.f32 %v843, -256.0
      %v876 = vmax.f32 %v844, -256.0
      %v877 = vmax.f32 %v845, -256.0
      %v878 = vmax.f32 %v846, -256.0
      %v879 = vmax.f32 %v847, -256.0
      %v880 = vmax.f32 %v848, -256.0
      %v881 = vmin.f32 %v849, 256.0
      %v882 = vmin.f32 %v850, 256.0
      %v883 = vmin.f32 %v851, 256.0
      %v884 = vmin.f32 %v852, 256.0
      %v885 = vmin.f32 %v853, 256.0
      %v886 = vmin.f32 %v854, 256.0
      %v887 = vmin.f32 %v855, 256.0
      %v888 = vmin.f32 %v856, 256.0
      %v889 = vmin.f32 %v857, 256.0
      %v890 = vmin.f32 %v858, 256.0
      %v891 = vmin.f32 %v859, 256.0
      %v892 = vmin.f32 %v860, 256.0
      %v893 = vmin.f32 %v861, 256.0
      %v894 = vmin.f32 %v862, 256.0
      %v895 = vmin.f32 %v863, 256.0
      %v896 = vmin.f32 %v864, 256.0
      %v897 = vmin.f32 %v865, 256.0
      %v898 = vmin.f32 %v866, 256.0
      %v899 = vmin.f32 %v867, 256.0
      %v900 = vmin.f32 %v868, 256.0
      %v901 = vmin.f32 %v869, 256.0
      %v902 = vmin.f32 %v870, 256.0
      %v903 = vmin.f32 %v871, 256.0
      %v904 = vmin.f32 %v872, 256.0
      %v905 = vmin.f32 %v873, 256.0
      %v906 = vmin.f32 %v874, 256.0
      %v907 = vmin.f32 %v875, 256.0
      %v908 = vmin.f32 %v876, 256.0
      %v909 = vmin.f32 %v877, 256.0
      %v910 = vmin.f32 %v878, 256.0
      %v911 = vmin.f32 %v879, 256.0
      %v912 = vmin.f32 %v880, 256.0
      %913 = vst.msk [vmem:[%s175] sm:$0xff] %vm426, %v881
      %914 = vst.msk [vmem:[%s175 + $0x8] sm:$0xff] %vm426, %v882
      %915 = vst.msk [vmem:[%s175 + $0x10] sm:$0xff] %vm426, %v883
      %916 = vst.msk [vmem:[%s175 + $0x18] sm:$0xff] %vm426, %v884
      %917 = vst.msk [vmem:[%s175 + $0x20] sm:$0xff] %vm426, %v885
      %918 = vst.msk [vmem:[%s175 + $0x28] sm:$0xff] %vm426, %v886
      %919 = vst.msk [vmem:[%s175 + $0x30] sm:$0xff] %vm426, %v887
      %920 = vst.msk [vmem:[%s175 + $0x38] sm:$0xff] %vm426, %v888
      %921 = vst.msk [vmem:[%s175 + $0x40] sm:$0xff] %vm426, %v889
      %922 = vst.msk [vmem:[%s175 + $0x48] sm:$0xff] %vm426, %v890
      %923 = vst.msk [vmem:[%s175 + $0x50] sm:$0xff] %vm426, %v891
      %924 = vst.msk [vmem:[%s175 + $0x58] sm:$0xff] %vm426, %v892
      %925 = vst.msk [vmem:[%s175 + $0x60] sm:$0xff] %vm426, %v893
      %926 = vst.msk [vmem:[%s175 + $0x68] sm:$0xff] %vm426, %v894
      %927 = vst.msk [vmem:[%s175 + $0x70] sm:$0xff] %vm426, %v895
      %928 = vst.msk [vmem:[%s175 + $0x78] sm:$0xff] %vm426, %v896
      %929 = vst.msk [vmem:[%s175 + $0x80] sm:$0xff] %vm426, %v897
      %930 = vst.msk [vmem:[%s175 + $0x88] sm:$0xff] %vm426, %v898
      %931 = vst.msk [vmem:[%s175 + $0x90] sm:$0xff] %vm426, %v899
      %932 = vst.msk [vmem:[%s175 + $0x98] sm:$0xff] %vm426, %v900
      %933 = vst.msk [vmem:[%s175 + $0xa0] sm:$0xff] %vm426, %v901
      %934 = vst.msk [vmem:[%s175 + $0xa8] sm:$0xff] %vm426, %v902
      %935 = vst.msk [vmem:[%s175 + $0xb0] sm:$0xff] %vm426, %v903
      %936 = vst.msk [vmem:[%s175 + $0xb8] sm:$0xff] %vm426, %v904
      %937 = vst.msk [vmem:[%s175 + $0xc0] sm:$0xff] %vm426, %v905
      %938 = vst.msk [vmem:[%s175 + $0xc8] sm:$0xff] %vm426, %v906
      %939 = vst.msk [vmem:[%s175 + $0xd0] sm:$0xff] %vm426, %v907
      %940 = vst.msk [vmem:[%s175 + $0xd8] sm:$0xff] %vm426, %v908
      %941 = vst.msk [vmem:[%s175 + $0xe0] sm:$0xff] %vm426, %v909
      %942 = vst.msk [vmem:[%s175 + $0xe8] sm:$0xff] %vm426, %v910
      %943 = vst.msk [vmem:[%s175 + $0xf0] sm:$0xff] %vm426, %v911
      %944 = vst.msk [vmem:[%s175 + $0xf8] sm:$0xff] %vm426, %v912
      %s945 = smul.u32 32, %s14
      %p946 = scmp.lt.s32.totalorder %s945, 63
      %s947 = scalar_select %p946, %s945, 63
      %s948 = smul.addr %s947, 8
      %s949 = scalar_lea.vmem %s3, %s948
      // Predicated region
      $region33: #{run.12} parent=31 // pred_check
        %p950 = pneg %p100
      $region34: #{run.12} parent=31 // pred_check_branch
        %952 = sbr.rel (%p950) target = $region36
      $region35: #{run.12} parent=31 // pred_region
        %s953 = smul.u32 32, %s14
      $region36: #{run.12} parent=31 // pred_fallthru
        _
    $region32: #{run.12} parent=5 // pred_fallthru
      _
    %p954 = scmp.le.s32.totalorder 2, %s9
    // Predicated region
    $region37: #{run.12} parent=5 // pred_check
      %p955 = pneg %p954
    $region38: #{run.12} parent=5 // pred_check_branch
      %957 = sbr.rel (%p955) target = $region40
    $region39: #{run.12} parent=5 // pred_region
      %s958 = ssub.s32 %s9, 2
      // Predicated region
      $region41: #{run.12} parent=39 // pred_check
        %p959 = pneg %p106
      $region42: #{run.12} parent=39 // pred_check_branch
        %961 = sbr.rel (%p959) target = $region44
      $region43: #{run.12} parent=39 // pred_region
        %s962 = smul.u32 32, %s15
        %p963 = scmp.lt.s32.totalorder %s962, 63
        %s964 = scalar_select %p963, %s962, 63
        %s965 = smul.addr %s964, 8
        %s966 = scalar_lea.vmem %s3, %s965
      $region44: #{run.12} parent=39 // pred_fallthru
        _
    $region40: #{run.12} parent=5 // pred_fallthru
      _
  $region6: #{run.12} parent=0 // loop_footer
    %s13 = sadd.s32 1, %s9
  $region7: #{run.12} parent=0 // loop_footer_branch
    %8 = sbr.rel target = $region3
  $region8: #{run.12} parent=0 // loop_exit
    _

// kernel: run.13
$region0: #{run.13}
  #allocation0 [shape = 'u32[]', space=smem, size = 0x4, offset = 0x4, fixed_abs, tag = 'smem constant byte address 0x4 - core index']
  #allocation1 [shape = 'u32[72,128]{1,0:T(1,128)}', space=vmem, size = 0x9000, scoped, tag = 'internal scratch']
  %s0 = inlined_call_operand.vmem [shape: bf16[128,144], index: 0, kind: input, shape index: {}]
  %s1 = inlined_call_operand.vmem [shape: bf16[144,32], index: 1, kind: input, shape index: {}]
  %s2 = inlined_call_operand.vmem [shape: f32[1,32], index: 2, kind: input, shape index: {}]
  %s3 = inlined_call_operand.vmem [shape: f32[128,32], index: 3, kind: output, shape index: {}]
  %s4 = sld [smem:[#allocation0]]
  $region22: #{run.13} parent=0
    _
  %s6 = ssub.s32 1, %s4
  %s7 = scalar_select 0, %s6, %s4
  // Predicated region
  $region2: #{run.13} parent=0 // pred_check
    _
  $region3: #{run.13} parent=0 // pred_check_branch
    %9 = sbr.rel (0) target = $region5
  $region4: #{run.13} parent=0 // pred_region
    _
  $region5: #{run.13} parent=0 // pred_fallthru
    _
  // Predicated region
  $region6: #{run.13} parent=0 // pred_check
    _
  $region7: #{run.13} parent=0 // pred_check_branch
    %11 = sbr.rel (0) target = $region9
  $region8: #{run.13} parent=0 // pred_region
    _
  $region9: #{run.13} parent=0 // pred_fallthru
    _
  // Predicated region
  $region10: #{run.13} parent=0 // pred_check
    _
  $region11: #{run.13} parent=0 // pred_check_branch
    %13 = sbr.rel (0) target = $region13
  $region12: #{run.13} parent=0 // pred_region
    _
  $region13: #{run.13} parent=0 // pred_fallthru
    _
  %v15 = vld [vmem:[%s0] sm:$0xff]
  %v16 = vld [vmem:[%s0 + $0x8] sm:$0xff]
  %v17 = vld [vmem:[%s0 + $0x10] sm:$0xff]
  %v18 = vld [vmem:[%s0 + $0x18] sm:$0xff]
  %v19 = vld [vmem:[%s0 + $0x20] sm:$0xff]
  %v20 = vld [vmem:[%s0 + $0x28] sm:$0xff]
  %v21 = vld [vmem:[%s0 + $0x30] sm:$0xff]
  %v22 = vld [vmem:[%s0 + $0x38] sm:$0xff]
  %v23 = vld [vmem:[%s0 + $0x40] sm:$0xff]
  %v24 = vld [vmem:[%s0 + $0x48] sm:$0xff]
  %v25 = vld [vmem:[%s0 + $0x50] sm:$0xff]
  %v26 = vld [vmem:[%s0 + $0x58] sm:$0xff]
  %v27 = vld [vmem:[%s0 + $0x60] sm:$0xff]
  %v28 = vld [vmem:[%s0 + $0x68] sm:$0xff]
  %v29 = vld [vmem:[%s0 + $0x70] sm:$0xff]
  %v30 = vld [vmem:[%s0 + $0x78] sm:$0xff]
  %v31 = vld [vmem:[%s1] sm:$0xf]
  %v32 = vld [vmem:[%s1 + $0x4] sm:$0xf]
  %v33 = vld [vmem:[%s1 + $0x8] sm:$0xf]
  %v34 = vld [vmem:[%s1 + $0xc] sm:$0xf]
  %v35 = vld [vmem:[%s1 + $0x10] sm:$0xf]
  %v36 = vld [vmem:[%s1 + $0x14] sm:$0xf]
  %v37 = vld [vmem:[%s1 + $0x18] sm:$0xf]
  %v38 = vld [vmem:[%s1 + $0x1c] sm:$0xf]
  %v39 = vld [vmem:[%s1 + $0x20] sm:$0xf]
  %v40 = vld [vmem:[%s1 + $0x24] sm:$0xf]
  %v41 = vld [vmem:[%s1 + $0x28] sm:$0xf]
  %v42 = vld [vmem:[%s1 + $0x2c] sm:$0xf]
  %v43 = vld [vmem:[%s1 + $0x30] sm:$0xf]
  %v44 = vld [vmem:[%s1 + $0x34] sm:$0xf]
  %v45 = vld [vmem:[%s1 + $0x38] sm:$0xf]
  %v46 = vld [vmem:[%s1 + $0x3c] sm:$0xf]
  %v47 = vld [vmem:[%s1 + $0x40] sm:$0xf]
  %v48 = vld [vmem:[%s1 + $0x44] sm:$0xf]
  %v65 = vunpack.c.l.b16 %v15
  %v66 = vunpack.c.h.b16 %v15
  %v67 = vunpack.c.l.b16 %v16
  %v68 = vunpack.c.h.b16 %v16
  %v69 = vunpack.c.l.b16 %v17
  %v70 = vunpack.c.h.b16 %v17
  %v71 = vunpack.c.l.b16 %v18
  %v72 = vunpack.c.h.b16 %v18
  %v73 = vunpack.c.l.b16 %v19
  %v74 = vunpack.c.h.b16 %v19
  %v75 = vunpack.c.l.b16 %v20
  %v76 = vunpack.c.h.b16 %v20
  %v77 = vunpack.c.l.b16 %v21
  %v78 = vunpack.c.h.b16 %v21
  %v79 = vunpack.c.l.b16 %v22
  %v80 = vunpack.c.h.b16 %v22
  %v81 = vunpack.c.l.b16 %v23
  %v82 = vunpack.c.h.b16 %v23
  %v83 = vunpack.c.l.b16 %v24
  %v84 = vunpack.c.h.b16 %v24
  %v85 = vunpack.c.l.b16 %v25
  %v86 = vunpack.c.h.b16 %v25
  %v87 = vunpack.c.l.b16 %v26
  %v88 = vunpack.c.h.b16 %v26
  %v89 = vunpack.c.l.b16 %v27
  %v90 = vunpack.c.h.b16 %v27
  %v91 = vunpack.c.l.b16 %v28
  %v92 = vunpack.c.h.b16 %v28
  %v93 = vunpack.c.l.b16 %v29
  %v94 = vunpack.c.h.b16 %v29
  %v95 = vunpack.c.l.b16 %v30
  %v96 = vunpack.c.h.b16 %v30
  %v97 = vpack.c.b16 %v67, %v65
  %v98 = vpack.c.b16 %v68, %v66
  %v99 = vpack.c.b16 %v71, %v69
  %v100 = vpack.c.b16 %v72, %v70
  %v101 = vpack.c.b16 %v75, %v73
  %v102 = vpack.c.b16 %v76, %v74
  %v103 = vpack.c.b16 %v79, %v77
  %v104 = vpack.c.b16 %v80, %v78
  %v105 = vpack.c.b16 %v83, %v81
  %v106 = vpack.c.b16 %v84, %v82
  %v107 = vpack.c.b16 %v87, %v85
  %v108 = vpack.c.b16 %v88, %v86
  %v109 = vpack.c.b16 %v91, %v89
  %v110 = vpack.c.b16 %v92, %v90
  %v111 = vpack.c.b16 %v95, %v93
  %v112 = vpack.c.b16 %v96, %v94
  %v139 = vunpack.c.l.b16 %v31
  %v140 = vunpack.c.l.b16 %v32
  %v141 = vunpack.c.l.b16 %v33
  %v142 = vunpack.c.l.b16 %v34
  %v143 = vunpack.c.l.b16 %v35
  %v144 = vunpack.c.l.b16 %v36
  %v145 = vunpack.c.l.b16 %v37
  %v146 = vunpack.c.l.b16 %v38
  %v147 = vunpack.c.l.b16 %v39
  %v148 = vunpack.c.l.b16 %v40
  %v149 = vunpack.c.l.b16 %v41
  %v150 = vunpack.c.l.b16 %v42
  %v151 = vunpack.c.l.b16 %v43
  %v152 = vunpack.c.l.b16 %v44
  %v153 = vunpack.c.l.b16 %v45
  %v154 = vunpack.c.l.b16 %v46
  %v155 = vunpack.c.l.b16 %v47
  %v156 = vunpack.c.l.b16 %v48
  %v157 = vpack.c.b16 %v140, %v139
  %v158 = vpack.c.b16 %v142, %v141
  %v159 = vpack.c.b16 %v144, %v143
  %v160 = vpack.c.b16 %v146, %v145
  %v161 = vpack.c.b16 %v148, %v147
  %v162 = vpack.c.b16 %v150, %v149
  %v163 = vpack.c.b16 %v152, %v151
  %v164 = vpack.c.b16 %v154, %v153
  %v165 = vpack.c.b16 %v156, %v155
  %vm175 = vcmask 130048
  %v177 = vsel %vm175, %v98, 0
  %v180 = vsel %vm175, %v100, 0
  %v183 = vsel %vm175, %v102, 0
  %v186 = vsel %vm175, %v104, 0
  %v189 = vsel %vm175, %v106, 0
  %v192 = vsel %vm175, %v108, 0
  %v195 = vsel %vm175, %v110, 0
  %v198 = vsel %vm175, %v112, 0
  %200 = vmatpush.bf16.msra.mxu0 %v164
  %201 = vmatpush.bf16.msra.mxu0 %v163
  %202 = vmatpush.bf16.msra.mxu0 %v162
  %203 = vmatpush.bf16.msra.mxu0 %v161
  %204 = vmatpush.bf16.msra.mxu0 %v160
  %205 = vmatpush.bf16.msra.mxu0 %v159
  %206 = vmatpush.bf16.msra.mxu0 %v158
  %207 = vmatpush.bf16.msra.mxu0 %v157
  %208 = vmatmul.bf16.gmra.mxu0 %v97
  %v209 = vpop.f32.mrf.mxu0
  %v210 = vadd.f32 0.0, %v209
  %v211 = vpop.f32.mrf.mxu0
  %v212 = vadd.f32 0.0, %v211
  %213 = vmatmul.bf16.gmra.mxu0 %v99
  %v214 = vpop.f32.mrf.mxu0
  %v215 = vadd.f32 0.0, %v214
  %v216 = vpop.f32.mrf.mxu0
  %v217 = vadd.f32 0.0, %v216
  %218 = vmatmul.bf16.gmra.mxu0 %v101
  %v219 = vpop.f32.mrf.mxu0
  %v220 = vadd.f32 0.0, %v219
  %v221 = vpop.f32.mrf.mxu0
  %v222 = vadd.f32 0.0, %v221
  %223 = vmatmul.bf16.gmra.mxu0 %v103
  %v224 = vpop.f32.mrf.mxu0
  %v225 = vadd.f32 0.0, %v224
  %v226 = vpop.f32.mrf.mxu0
  %v227 = vadd.f32 0.0, %v226
  %228 = vmatmul.bf16.gmra.mxu0 %v105
  %v229 = vpop.f32.mrf.mxu0
  %v230 = vadd.f32 0.0, %v229
  %v231 = vpop.f32.mrf.mxu0
  %v232 = vadd.f32 0.0, %v231
  %233 = vmatmul.bf16.gmra.mxu0 %v107
  %v234 = vpop.f32.mrf.mxu0
  %v235 = vadd.f32 0.0, %v234
  %v236 = vpop.f32.mrf.mxu0
  %v237 = vadd.f32 0.0, %v236
  %238 = vmatmul.bf16.gmra.mxu0 %v109
  %v239 = vpop.f32.mrf.mxu0
  %v240 = vadd.f32 0.0, %v239
  %v241 = vpop.f32.mrf.mxu0
  %v242 = vadd.f32 0.0, %v241
  %243 = vmatmul.bf16.gmra.mxu0 %v111
  %v244 = vpop.f32.mrf.mxu0
  %v245 = vadd.f32 0.0, %v244
  %v246 = vpop.f32.mrf.mxu0
  %v247 = vadd.f32 0.0, %v246
  %248 = vdwg.mxu0
  %249 = vmatpush.bf16.msra.mxu0 0
  %250 = vmatpush.bf16.msra.mxu0 0
  %251 = vmatpush.bf16.msra.mxu0 0
  %252 = vmatpush.bf16.msra.mxu0 0
  %253 = vmatpush.bf16.msra.mxu0 0
  %254 = vmatpush.bf16.msra.mxu0 0
  %255 = vmatpush.bf16.msra.mxu0 0
  %256 = vmatpush.bf16.msra.mxu0 %v165
  %257 = vmatmul.bf16.gmra.mxu0 %v177
  %v258 = vpop.f32.mrf.mxu0
  %v259 = vadd.f32 %v210, %v258
  %v260 = vpop.f32.mrf.mxu0
  %v261 = vadd.f32 %v212, %v260
  %262 = vmatmul.bf16.gmra.mxu0 %v180
  %v263 = vpop.f32.mrf.mxu0
  %v264 = vadd.f32 %v215, %v263
  %v265 = vpop.f32.mrf.mxu0
  %v266 = vadd.f32 %v217, %v265
  %267 = vmatmul.bf16.gmra.mxu0 %v183
  %v268 = vpop.f32.mrf.mxu0
  %v269 = vadd.f32 %v220, %v268
  %v270 = vpop.f32.mrf.mxu0
  %v271 = vadd.f32 %v222, %v270
  %272 = vmatmul.bf16.gmra.mxu0 %v186
  %v273 = vpop.f32.mrf.mxu0
  %v274 = vadd.f32 %v225, %v273
  %v275 = vpop.f32.mrf.mxu0
  %v276 = vadd.f32 %v227, %v275
  %277 = vmatmul.bf16.gmra.mxu0 %v189
  %v278 = vpop.f32.mrf.mxu0
  %v279 = vadd.f32 %v230, %v278
  %v280 = vpop.f32.mrf.mxu0
  %v281 = vadd.f32 %v232, %v280
  %282 = vmatmul.bf16.gmra.mxu0 %v192
  %v283 = vpop.f32.mrf.mxu0
  %v284 = vadd.f32 %v235, %v283
  %v285 = vpop.f32.mrf.mxu0
  %v286 = vadd.f32 %v237, %v285
  %287 = vmatmul.bf16.gmra.mxu0 %v195
  %v288 = vpop.f32.mrf.mxu0
  %v289 = vadd.f32 %v240, %v288
  %v290 = vpop.f32.mrf.mxu0
  %v291 = vadd.f32 %v242, %v290
  %292 = vmatmul.bf16.gmra.mxu0 %v198
  %v293 = vpop.f32.mrf.mxu0
  %v294 = vadd.f32 %v245, %v293
  %v295 = vpop.f32.mrf.mxu0
  %v296 = vadd.f32 %v247, %v295
  %297 = vdwg.mxu0
  %v298 = vmul.f32 %v259, 0.083333336
  %v299 = vmul.f32 %v261, 0.083333336
  %v300 = vmul.f32 %v264, 0.083333336
  %v301 = vmul.f32 %v266, 0.083333336
  %v302 = vmul.f32 %v269, 0.083333336
  %v303 = vmul.f32 %v271, 0.083333336
  %v304 = vmul.f32 %v274, 0.083333336
  %v305 = vmul.f32 %v276, 0.083333336
  %v306 = vmul.f32 %v279, 0.083333336
  %v307 = vmul.f32 %v281, 0.083333336
  %v308 = vmul.f32 %v284, 0.083333336
  %v309 = vmul.f32 %v286, 0.083333336
  %v310 = vmul.f32 %v289, 0.083333336
  %v311 = vmul.f32 %v291, 0.083333336
  %v312 = vmul.f32 %v294, 0.083333336
  %v313 = vmul.f32 %v296, 0.083333336
  %v314 = vld [vmem:[%s2] sm:$0x1]
  %v316 = vperm.slane %v314, 0
  %v318 = vadd.f32 %v298, %v316
  %v319 = vadd.f32 %v299, %v316
  %v320 = vadd.f32 %v300, %v316
  %v321 = vadd.f32 %v301, %v316
  %v322 = vadd.f32 %v302, %v316
  %v323 = vadd.f32 %v303, %v316
  %v324 = vadd.f32 %v304, %v316
  %v325 = vadd.f32 %v305, %v316
  %v326 = vadd.f32 %v306, %v316
  %v327 = vadd.f32 %v307, %v316
  %v328 = vadd.f32 %v308, %v316
  %v329 = vadd.f32 %v309, %v316
  %v330 = vadd.f32 %v310, %v316
  %v331 = vadd.f32 %v311, %v316
  %v332 = vadd.f32 %v312, %v316
  %v333 = vadd.f32 %v313, %v316
  %vm334 = vcmp.ge.f32.partialorder %v318, 0.0
  %vm335 = vcmp.ge.f32.partialorder %v319, 0.0
  %vm336 = vcmp.ge.f32.partialorder %v320, 0.0
  %vm337 = vcmp.ge.f32.partialorder %v321, 0.0
  %vm338 = vcmp.ge.f32.partialorder %v322, 0.0
  %vm339 = vcmp.ge.f32.partialorder %v323, 0.0
  %vm340 = vcmp.ge.f32.partialorder %v324, 0.0
  %vm341 = vcmp.ge.f32.partialorder %v325, 0.0
  %vm342 = vcmp.ge.f32.partialorder %v326, 0.0
  %vm343 = vcmp.ge.f32.partialorder %v327, 0.0
  %vm344 = vcmp.ge.f32.partialorder %v328, 0.0
  %vm345 = vcmp.ge.f32.partialorder %v329, 0.0
  %vm346 = vcmp.ge.f32.partialorder %v330, 0.0
  %vm347 = vcmp.ge.f32.partialorder %v331, 0.0
  %vm348 = vcmp.ge.f32.partialorder %v332, 0.0
  %vm349 = vcmp.ge.f32.partialorder %v333, 0.0
  %v350 = vmul.f32 %v318, 0.2
  %v351 = vmul.f32 %v319, 0.2
  %v352 = vmul.f32 %v320, 0.2
  %v353 = vmul.f32 %v321, 0.2
  %v354 = vmul.f32 %v322, 0.2
  %v355 = vmul.f32 %v323, 0.2
  %v356 = vmul.f32 %v324, 0.2
  %v357 = vmul.f32 %v325, 0.2
  %v358 = vmul.f32 %v326, 0.2
  %v359 = vmul.f32 %v327, 0.2
  %v360 = vmul.f32 %v328, 0.2
  %v361 = vmul.f32 %v329, 0.2
  %v362 = vmul.f32 %v330, 0.2
  %v363 = vmul.f32 %v331, 0.2
  %v364 = vmul.f32 %v332, 0.2
  %v365 = vmul.f32 %v333, 0.2
  %v366 = vsel %vm334, %v318, %v350
  %v367 = vsel %vm335, %v319, %v351
  %v368 = vsel %vm336, %v320, %v352
  %v369 = vsel %vm337, %v321, %v353
  %v370 = vsel %vm338, %v322, %v354
  %v371 = vsel %vm339, %v323, %v355
  %v372 = vsel %vm340, %v324, %v356
  %v373 = vsel %vm341, %v325, %v357
  %v374 = vsel %vm342, %v326, %v358
  %v375 = vsel %vm343, %v327, %v359
  %v376 = vsel %vm344, %v328, %v360
  %v377 = vsel %vm345, %v329, %v361
  %v378 = vsel %vm346, %v330, %v362
  %v379 = vsel %vm347, %v331, %v363
  %v380 = vsel %vm348, %v332, %v364
  %v381 = vsel %vm349, %v333, %v365
  %v382 = vmax.f32 %v366, -181.01933
  %v383 = vmax.f32 %v367, -181.01933
  %v384 = vmax.f32 %v368, -181.01933
  %v385 = vmax.f32 %v369, -181.01933
  %v386 = vmax.f32 %v370, -181.01933
  %v387 = vmax.f32 %v371, -181.01933
  %v388 = vmax.f32 %v372, -181.01933
  %v389 = vmax.f32 %v373, -181.01933
  %v390 = vmax.f32 %v374, -181.01933
  %v391 = vmax.f32 %v375, -181.01933
  %v392 = vmax.f32 %v376, -181.01933
  %v393 = vmax.f32 %v377, -181.01933
  %v394 = vmax.f32 %v378, -181.01933
  %v395 = vmax.f32 %v379, -181.01933
  %v396 = vmax.f32 %v380, -181.01933
  %v397 = vmax.f32 %v381, -181.01933
  %v398 = vmin.f32 %v382, 181.01933
  %v399 = vmin.f32 %v383, 181.01933
  %v400 = vmin.f32 %v384, 181.01933
  %v401 = vmin.f32 %v385, 181.01933
  %v402 = vmin.f32 %v386, 181.01933
  %v403 = vmin.f32 %v387, 181.01933
  %v404 = vmin.f32 %v388, 181.01933
  %v405 = vmin.f32 %v389, 181.01933
  %v406 = vmin.f32 %v390, 181.01933
  %v407 = vmin.f32 %v391, 181.01933
  %v408 = vmin.f32 %v392, 181.01933
  %v409 = vmin.f32 %v393, 181.01933
  %v410 = vmin.f32 %v394, 181.01933
  %v411 = vmin.f32 %v395, 181.01933
  %v412 = vmin.f32 %v396, 181.01933
  %v413 = vmin.f32 %v397, 181.01933
  %vm414 = vcmask 261120
  %415 = vst.msk [vmem:[%s3] sm:$0xff] %vm414, %v398
  %416 = vst.msk [vmem:[%s3 + $0x8] sm:$0xff] %vm414, %v399
  %417 = vst.msk [vmem:[%s3 + $0x10] sm:$0xff] %vm414, %v400
  %418 = vst.msk [vmem:[%s3 + $0x18] sm:$0xff] %vm414, %v401
  %419 = vst.msk [vmem:[%s3 + $0x20] sm:$0xff] %vm414, %v402
  %420 = vst.msk [vmem:[%s3 + $0x28] sm:$0xff] %vm414, %v403
  %421 = vst.msk [vmem:[%s3 + $0x30] sm:$0xff] %vm414, %v404
  %422 = vst.msk [vmem:[%s3 + $0x38] sm:$0xff] %vm414, %v405
  %423 = vst.msk [vmem:[%s3 + $0x40] sm:$0xff] %vm414, %v406
  %424 = vst.msk [vmem:[%s3 + $0x48] sm:$0xff] %vm414, %v407
  %425 = vst.msk [vmem:[%s3 + $0x50] sm:$0xff] %vm414, %v408
  %426 = vst.msk [vmem:[%s3 + $0x58] sm:$0xff] %vm414, %v409
  %427 = vst.msk [vmem:[%s3 + $0x60] sm:$0xff] %vm414, %v410
  %428 = vst.msk [vmem:[%s3 + $0x68] sm:$0xff] %vm414, %v411
  %429 = vst.msk [vmem:[%s3 + $0x70] sm:$0xff] %vm414, %v412
  %430 = vst.msk [vmem:[%s3 + $0x78] sm:$0xff] %vm414, %v413
  // Predicated region
  $region14: #{run.13} parent=0 // pred_check
    _
  $region15: #{run.13} parent=0 // pred_check_branch
    %432 = sbr.rel (0) target = $region17
  $region16: #{run.13} parent=0 // pred_region
    _
  $region17: #{run.13} parent=0 // pred_fallthru
    _
  // Predicated region
  $region18: #{run.13} parent=0 // pred_check
    _
  $region19: #{run.13} parent=0 // pred_check_branch
    %434 = sbr.rel (0) target = $region21
  $region20: #{run.13} parent=0 // pred_region
    _
  $region21: #{run.13} parent=0 // pred_fallthru
    _

// kernel: run.14
$region0: #{run.14}
  #allocation0 [shape = 'u32[]', space=smem, size = 0x4, offset = 0x4, fixed_abs, tag = 'smem constant byte address 0x4 - core index']
  #allocation1 [shape = 'u32[72,128]{1,0:T(1,128)}', space=vmem, size = 0x9000, scoped, tag = 'internal scratch']
  %s0 = inlined_call_operand.vmem [shape: bf16[32,32], index: 0, kind: input, shape index: {}]
  %s1 = inlined_call_operand.vmem [shape: bf16[32,64], index: 1, kind: input, shape index: {}]
  %s2 = inlined_call_operand.vmem [shape: f32[1,64], index: 2, kind: input, shape index: {}]
  %s3 = inlined_call_operand.vmem [shape: f32[32,64], index: 3, kind: output, shape index: {}]
  %s4 = sld [smem:[#allocation0]]
  $region22: #{run.14} parent=0
    _
  %s6 = ssub.s32 1, %s4
  %s7 = scalar_select 0, %s6, %s4
  // Predicated region
  $region2: #{run.14} parent=0 // pred_check
    _
  $region3: #{run.14} parent=0 // pred_check_branch
    %9 = sbr.rel (0) target = $region5
  $region4: #{run.14} parent=0 // pred_region
    _
  $region5: #{run.14} parent=0 // pred_fallthru
    _
  // Predicated region
  $region6: #{run.14} parent=0 // pred_check
    _
  $region7: #{run.14} parent=0 // pred_check_branch
    %11 = sbr.rel (0) target = $region9
  $region8: #{run.14} parent=0 // pred_region
    _
  $region9: #{run.14} parent=0 // pred_fallthru
    _
  // Predicated region
  $region10: #{run.14} parent=0 // pred_check
    _
  $region11: #{run.14} parent=0 // pred_check_branch
    %13 = sbr.rel (0) target = $region13
  $region12: #{run.14} parent=0 // pred_region
    _
  $region13: #{run.14} parent=0 // pred_fallthru
    _
  %v15 = vld [vmem:[%s0] sm:$0xf]
  %v16 = vld [vmem:[%s0 + $0x4] sm:$0xf]
  %v17 = vld [vmem:[%s0 + $0x8] sm:$0xf]
  %v18 = vld [vmem:[%s0 + $0xc] sm:$0xf]
  %v19 = vld [vmem:[%s1] sm:$0xf]
  %v20 = vld [vmem:[%s1 + $0x4] sm:$0xf]
  %v21 = vld [vmem:[%s1 + $0x8] sm:$0xf]
  %v22 = vld [vmem:[%s1 + $0xc] sm:$0xf]
  %v27 = vunpack.c.l.b16 %v15
  %v28 = vunpack.c.l.b16 %v16
  %v29 = vunpack.c.l.b16 %v17
  %v30 = vunpack.c.l.b16 %v18
  %v31 = vpack.c.b16 %v28, %v27
  %v32 = vpack.c.b16 %v30, %v29
  %v37 = vunpack.c.l.b16 %v19
  %v38 = vunpack.c.l.b16 %v20
  %v39 = vunpack.c.l.b16 %v21
  %v40 = vunpack.c.l.b16 %v22
  %v41 = vpack.c.b16 %v38, %v37
  %v42 = vpack.c.b16 %v40, %v39
  %vm45 = vcmask 261120
  %v47 = vsel %vm45, %v31, 0
  %v50 = vsel %vm45, %v32, 0
  %52 = vmatpush.bf16.msra.mxu0 0
  %53 = vmatpush.bf16.msra.mxu0 0
  %54 = vmatpush.bf16.msra.mxu0 0
  %55 = vmatpush.bf16.msra.mxu0 0
  %56 = vmatpush.bf16.msra.mxu0 0
  %57 = vmatpush.bf16.msra.mxu0 0
  %58 = vmatpush.bf16.msra.mxu0 %v42
  %59 = vmatpush.bf16.msra.mxu0 %v41
  %60 = vmatmul.bf16.gmra.mxu0 %v47
  %v61 = vpop.f32.mrf.mxu0
  %v62 = vadd.f32 0.0, %v61
  %v63 = vpop.f32.mrf.mxu0
  %v64 = vadd.f32 0.0, %v63
  %65 = vmatmul.bf16.gmra.mxu0 %v50
  %v66 = vpop.f32.mrf.mxu0
  %v67 = vadd.f32 0.0, %v66
  %v68 = vpop.f32.mrf.mxu0
  %v69 = vadd.f32 0.0, %v68
  %70 = vdwg.mxu0
  %v71 = vmul.f32 %v62, 0.17677669
  %v72 = vmul.f32 %v64, 0.17677669
  %v73 = vmul.f32 %v67, 0.17677669
  %v74 = vmul.f32 %v69, 0.17677669
  %v75 = vld [vmem:[%s2] sm:$0x1]
  %v77 = vperm.slane %v75, 0
  %v79 = vadd.f32 %v71, %v77
  %v80 = vadd.f32 %v72, %v77
  %v81 = vadd.f32 %v73, %v77
  %v82 = vadd.f32 %v74, %v77
  %v83 = vmul.f32 %v79, 0.70710677
  %v84 = vmul.f32 %v80, 0.70710677
  %v85 = vmul.f32 %v81, 0.70710677
  %v86 = vmul.f32 %v82, 0.70710677
  %vm87 = vcmask 523264
  %88 = vst.msk [vmem:[%s3] sm:$0xff] %vm87, %v83
  %89 = vst.msk [vmem:[%s3 + $0x8] sm:$0xff] %vm87, %v84
  %90 = vst.msk [vmem:[%s3 + $0x10] sm:$0xff] %vm87, %v85
  %91 = vst.msk [vmem:[%s3 + $0x18] sm:$0xff] %vm87, %v86
  // Predicated region
  $region14: #{run.14} parent=0 // pred_check
    _
  $region15: #{run.14} parent=0 // pred_check_branch
    %93 = sbr.rel (0) target = $region17
  $region16: #{run.14} parent=0 // pred_region
    _
  $region17: #{run.14} parent=0 // pred_fallthru
    _
  // Predicated region
  $region18: #{run.14} parent=0 // pred_check
    _
  $region19: #{run.14} parent=0 // pred_check_branch
    %95 = sbr.rel (0) target = $region21
  $region20: #{run.14} parent=0 // pred_region
    _
  $region21: #{run.14} parent=0 // pred_fallthru
    _

// kernel: run.15
$region0: #{run.15}
  #allocation0 [shape = 'u32[]', space=smem, size = 0x4, offset = 0x4, fixed_abs, tag = 'smem constant byte address 0x4 - core index']
  #allocation1 [shape = 'u32[72,128]{1,0:T(1,128)}', space=vmem, size = 0x9000, scoped, tag = 'internal scratch']
  %s0 = inlined_call_operand.vmem [shape: bf16[128,288], index: 0, kind: input, shape index: {}]
  %s1 = inlined_call_operand.vmem [shape: bf16[288,32], index: 1, kind: input, shape index: {}]
  %s2 = inlined_call_operand.vmem [shape: f32[1,32], index: 2, kind: input, shape index: {}]
  %s3 = inlined_call_operand.vmem [shape: f32[128,32], index: 3, kind: output, shape index: {}]
  %s4 = sld [smem:[#allocation0]]
  $region22: #{run.15} parent=0
    _
  %s6 = ssub.s32 1, %s4
  %s7 = scalar_select 0, %s6, %s4
  // Predicated region
  $region2: #{run.15} parent=0 // pred_check
    _
  $region3: #{run.15} parent=0 // pred_check_branch
    %9 = sbr.rel (0) target = $region5
  $region4: #{run.15} parent=0 // pred_region
    _
  $region5: #{run.15} parent=0 // pred_fallthru
    _
  // Predicated region
  $region6: #{run.15} parent=0 // pred_check
    _
  $region7: #{run.15} parent=0 // pred_check_branch
    %11 = sbr.rel (0) target = $region9
  $region8: #{run.15} parent=0 // pred_region
    _
  $region9: #{run.15} parent=0 // pred_fallthru
    _
  // Predicated region
  $region10: #{run.15} parent=0 // pred_check
    _
  $region11: #{run.15} parent=0 // pred_check_branch
    %13 = sbr.rel (0) target = $region13
  $region12: #{run.15} parent=0 // pred_region
    _
  $region13: #{run.15} parent=0 // pred_fallthru
    _
  %v15 = vld [vmem:[%s0] sm:$0xff]
  %v16 = vld [vmem:[%s0 + $0x8] sm:$0xf]
  %v17 = vld [vmem:[%s0 + $0xc] sm:$0xff]
  %v18 = vld [vmem:[%s0 + $0x14] sm:$0xf]
  %v19 = vld [vmem:[%s0 + $0x18] sm:$0xff]
  %v20 = vld [vmem:[%s0 + $0x20] sm:$0xf]
  %v21 = vld [vmem:[%s0 + $0x24] sm:$0xff]
  %v22 = vld [vmem:[%s0 + $0x2c] sm:$0xf]
  %v23 = vld [vmem:[%s0 + $0x30] sm:$0xff]
  %v24 = vld [vmem:[%s0 + $0x38] sm:$0xf]
  %v25 = vld [vmem:[%s0 + $0x3c] sm:$0xff]
  %v26 = vld [vmem:[%s0 + $0x44] sm:$0xf]
  %v27 = vld [vmem:[%s0 + $0x48] sm:$0xff]
  %v28 = vld [vmem:[%s0 + $0x50] sm:$0xf]
  %v29 = vld [vmem:[%s0 + $0x54] sm:$0xff]
  %v30 = vld [vmem:[%s0 + $0x5c] sm:$0xf]
  %v31 = vld [vmem:[%s0 + $0x60] sm:$0xff]
  %v32 = vld [vmem:[%s0 + $0x68] sm:$0xf]
  %v33 = vld [vmem:[%s0 + $0x6c] sm:$0xff]
  %v34 = vld [vmem:[%s0 + $0x74] sm:$0xf]
  %v35 = vld [vmem:[%s0 + $0x78] sm:$0xff]
  %v36 = vld [vmem:[%s0 + $0x80] sm:$0xf]
  %v37 = vld [vmem:[%s0 + $0x84] sm:$0xff]
  %v38 = vld [vmem:[%s0 + $0x8c] sm:$0xf]
  %v39 = vld [vmem:[%s0 + $0x90] sm:$0xff]
  %v40 = vld [vmem:[%s0 + $0x98] sm:$0xf]
  %v41 = vld [vmem:[%s0 + $0x9c] sm:$0xff]
  %v42 = vld [vmem:[%s0 + $0xa4] sm:$0xf]
  %v43 = vld [vmem:[%s0 + $0xa8] sm:$0xff]
  %v44 = vld [vmem:[%s0 + $0xb0] sm:$0xf]
  %v45 = vld [vmem:[%s0 + $0xb4] sm:$0xff]
  %v46 = vld [vmem:[%s0 + $0xbc] sm:$0xf]
  %v47 = vld [vmem:[%s1] sm:$0xf]
  %v48 = vld [vmem:[%s1 + $0x4] sm:$0xf]
  %v49 = vld [vmem:[%s1 + $0x8] sm:$0xf]
  %v50 = vld [vmem:[%s1 + $0xc] sm:$0xf]
  %v51 = vld [vmem:[%s1 + $0x10] sm:$0xf]
  %v52 = vld [vmem:[%s1 + $0x14] sm:$0xf]
  %v53 = vld [vmem:[%s1 + $0x18] sm:$0xf]
  %v54 = vld [vmem:[%s1 + $0x1c] sm:$0xf]
  %v55 = vld [vmem:[%s1 + $0x20] sm:$0xf]
  %v56 = vld [vmem:[%s1 + $0x24] sm:$0xf]
  %v57 = vld [vmem:[%s1 + $0x28] sm:$0xf]
  %v58 = vld [vmem:[%s1 + $0x2c] sm:$0xf]
  %v59 = vld [vmem:[%s1 + $0x30] sm:$0xf]
  %v60 = vld [vmem:[%s1 + $0x34] sm:$0xf]
  %v61 = vld [vmem:[%s1 + $0x38] sm:$0xf]
  %v62 = vld [vmem:[%s1 + $0x3c] sm:$0xf]
  %v63 = vld [vmem:[%s1 + $0x40] sm:$0xf]
  %v64 = vld [vmem:[%s1 + $0x44] sm:$0xf]
  %v65 = vld [vmem:[%s1 + $0x48] sm:$0xf]
  %v66 = vld [vmem:[%s1 + $0x4c] sm:$0xf]
  %v67 = vld [vmem:[%s1 + $0x50] sm:$0xf]
  %v68 = vld [vmem:[%s1 + $0x54] sm:$0xf]
  %v69 = vld [vmem:[%s1 + $0x58] sm:$0xf]
  %v70 = vld [vmem:[%s1 + $0x5c] sm:$0xf]
  %v71 = vld [vmem:[%s1 + $0x60] sm:$0xf]
  %v72 = vld [vmem:[%s1 + $0x64] sm:$0xf]
  %v73 = vld [vmem:[%s1 + $0x68] sm:$0xf]
  %v74 = vld [vmem:[%s1 + $0x6c] sm:$0xf]
  %v75 = vld [vmem:[%s1 + $0x70] sm:$0xf]
  %v76 = vld [vmem:[%s1 + $0x74] sm:$0xf]
  %v77 = vld [vmem:[%s1 + $0x78] sm:$0xf]
  %v78 = vld [vmem:[%s1 + $0x7c] sm:$0xf]
  %v79 = vld [vmem:[%s1 + $0x80] sm:$0xf]
  %v80 = vld [vmem:[%s1 + $0x84] sm:$0xf]
  %v81 = vld [vmem:[%s1 + $0x88] sm:$0xf]
  %v82 = vld [vmem:[%s1 + $0x8c] sm:$0xf]
  %v115 = vunpack.c.l.b16 %v15
  %v116 = vunpack.c.h.b16 %v15
  %v117 = vunpack.c.l.b16 %v16
  %v118 = vunpack.c.l.b16 %v17
  %v119 = vunpack.c.h.b16 %v17
  %v120 = vunpack.c.l.b16 %v18
  %v121 = vunpack.c.l.b16 %v19
  %v122 = vunpack.c.h.b16 %v19
  %v123 = vunpack.c.l.b16 %v20
  %v124 = vunpack.c.l.b16 %v21
  %v125 = vunpack.c.h.b16 %v21
  %v126 = vunpack.c.l.b16 %v22
  %v127 = vunpack.c.l.b16 %v23
  %v128 = vunpack.c.h.b16 %v23
  %v129 = vunpack.c.l.b16 %v24
  %v130 = vunpack.c.l.b16 %v25
  %v131 = vunpack.c.h.b16 %v25
  %v132 = vunpack.c.l.b16 %v26
  %v133 = vunpack.c.l.b16 %v27
  %v134 = vunpack.c.h.b16 %v27
  %v135 = vunpack.c.l.b16 %v28
  %v136 = vunpack.c.l.b16 %v29
  %v137 = vunpack.c.h.b16 %v29
  %v138 = vunpack.c.l.b16 %v30
  %v139 = vunpack.c.l.b16 %v31
  %v140 = vunpack.c.h.b16 %v31
  %v141 = vunpack.c.l.b16 %v32
  %v142 = vunpack.c.l.b16 %v33
  %v143 = vunpack.c.h.b16 %v33
  %v144 = vunpack.c.l.b16 %v34
  %v145 = vunpack.c.l.b16 %v35
  %v146 = vunpack.c.h.b16 %v35
  %v147 = vunpack.c.l.b16 %v36
  %v148 = vunpack.c.l.b16 %v37
  %v149 = vunpack.c.h.b16 %v37
  %v150 = vunpack.c.l.b16 %v38
  %v151 = vunpack.c.l.b16 %v39
  %v152 = vunpack.c.h.b16 %v39
  %v153 = vunpack.c.l.b16 %v40
  %v154 = vunpack.c.l.b16 %v41
  %v155 = vunpack.c.h.b16 %v41
  %v156 = vunpack.c.l.b16 %v42
  %v157 = vunpack.c.l.b16 %v43
  %v158 = vunpack.c.h.b16 %v43
  %v159 = vunpack.c.l.b16 %v44
  %v160 = vunpack.c.l.b16 %v45
  %v161 = vunpack.c.h.b16 %v45
  %v162 = vunpack.c.l.b16 %v46
  %v163 = vpack.c.b16 %v118, %v115
  %v164 = vpack.c.b16 %v119, %v116
  %v165 = vpack.c.b16 %v120, %v117
  %v166 = vpack.c.b16 %v124, %v121
  %v167 = vpack.c.b16 %v125, %v122
  %v168 = vpack.c.b16 %v126, %v123
  %v169 = vpack.c.b16 %v130, %v127
  %v170 = vpack.c.b16 %v131, %v128
  %v171 = vpack.c.b16 %v132, %v129
  %v172 = vpack.c.b16 %v136, %v133
  %v173 = vpack.c.b16 %v137, %v134
  %v174 = vpack.c.b16 %v138, %v135
  %v175 = vpack.c.b16 %v142, %v139
  %v176 = vpack.c.b16 %v143, %v140
  %v177 = vpack.c.b16 %v144, %v141
  %v178 = vpack.c.b16 %v148, %v145
  %v179 = vpack.c.b16 %v149, %v146
  %v180 = vpack.c.b16 %v150, %v147
  %v181 = vpack.c.b16 %v154, %v151
  %v182 = vpack.c.b16 %v155, %v152
  %v183 = vpack.c.b16 %v156, %v153
  %v184 = vpack.c.b16 %v160, %v157
  %v185 = vpack.c.b16 %v161, %v158
  %v186 = vpack.c.b16 %v162, %v159
  %v239 = vunpack.c.l.b16 %v47
  %v240 = vunpack.c.l.b16 %v48
  %v241 = vunpack.c.l.b16 %v49
  %v242 = vunpack.c.l.b16 %v50
  %v243 = vunpack.c.l.b16 %v51
  %v244 = vunpack.c.l.b16 %v52
  %v245 = vunpack.c.l.b16 %v53
  %v246 = vunpack.c.l.b16 %v54
  %v247 = vunpack.c.l.b16 %v55
  %v248 = vunpack.c.l.b16 %v56
  %v249 = vunpack.c.l.b16 %v57
  %v250 = vunpack.c.l.b16 %v58
  %v251 = vunpack.c.l.b16 %v59
  %v252 = vunpack.c.l.b16 %v60
  %v253 = vunpack.c.l.b16 %v61
  %v254 = vunpack.c.l.b16 %v62
  %v255 = vunpack.c.l.b16 %v63
  %v256 = vunpack.c.l.b16 %v64
  %v257 = vunpack.c.l.b16 %v65
  %v258 = vunpack.c.l.b16 %v66
  %v259 = vunpack.c.l.b16 %v67
  %v260 = vunpack.c.l.b16 %v68
  %v261 = vunpack.c.l.b16 %v69
  %v262 = vunpack.c.l.b16 %v70
  %v263 = vunpack.c.l.b16 %v71
  %v264 = vunpack.c.l.b16 %v72
  %v265 = vunpack.c.l.b16 %v73
  %v266 = vunpack.c.l.b16 %v74
  %v267 = vunpack.c.l.b16 %v75
  %v268 = vunpack.c.l.b16 %v76
  %v269 = vunpack.c.l.b16 %v77
  %v270 = vunpack.c.l.b16 %v78
  %v271 = vunpack.c.l.b16 %v79
  %v272 = vunpack.c.l.b16 %v80
  %v273 = vunpack.c.l.b16 %v81
  %v274 = vunpack.c.l.b16 %v82
  %v275 = vpack.c.b16 %v240, %v239
  %v276 = vpack.c.b16 %v242, %v241
  %v277 = vpack.c.b16 %v244, %v243
  %v278 = vpack.c.b16 %v246, %v245
  %v279 = vpack.c.b16 %v248, %v247
  %v280 = vpack.c.b16 %v250, %v249
  %v281 = vpack.c.b16 %v252, %v251
  %v282 = vpack.c.b16 %v254, %v253
  %v283 = vpack.c.b16 %v256, %v255
  %v284 = vpack.c.b16 %v258, %v257
  %v285 = vpack.c.b16 %v260, %v259
  %v286 = vpack.c.b16 %v262, %v261
  %v287 = vpack.c.b16 %v264, %v263
  %v288 = vpack.c.b16 %v266, %v265
  %v289 = vpack.c.b16 %v268, %v267
  %v290 = vpack.c.b16 %v270, %v269
  %v291 = vpack.c.b16 %v272, %v271
  %v292 = vpack.c.b16 %v274, %v273
  %vm311 = vcmask 261120
  %v313 = vsel %vm311, %v165, 0
  %v316 = vsel %vm311, %v168, 0
  %v319 = vsel %vm311, %v171, 0
  %v322 = vsel %vm311, %v174, 0
  %v325 = vsel %vm311, %v177, 0
  %v328 = vsel %vm311, %v180, 0
  %v331 = vsel %vm311, %v183, 0
  %v334 = vsel %vm311, %v186, 0
  %336 = vmatpush.bf16.msra.mxu0 %v282
  %337 = vmatpush.bf16.msra.mxu0 %v281
  %338 = vmatpush.bf16.msra.mxu0 %v280
  %339 = vmatpush.bf16.msra.mxu0 %v279
  %340 = vmatpush.bf16.msra.mxu0 %v278
  %341 = vmatpush.bf16.msra.mxu0 %v277
  %342 = vmatpush.bf16.msra.mxu0 %v276
  %343 = vmatpush.bf16.msra.mxu0 %v275
  %344 = vmatmul.bf16.gmra.mxu0 %v163
  %v345 = vpop.f32.mrf.mxu0
  %v346 = vadd.f32 0.0, %v345
  %v347 = vpop.f32.mrf.mxu0
  %v348 = vadd.f32 0.0, %v347
  %349 = vmatmul.bf16.gmra.mxu0 %v166
  %v350 = vpop.f32.mrf.mxu0
  %v351 = vadd.f32 0.0, %v350
  %v352 = vpop.f32.mrf.mxu0
  %v353 = vadd.f32 0.0, %v352
  %354 = vmatmul.bf16.gmra.mxu0 %v169
  %v355 = vpop.f32.mrf.mxu0
  %v356 = vadd.f32 0.0, %v355
  %v357 = vpop.f32.mrf.mxu0
  %v358 = vadd.f32 0.0, %v357
  %359 = vmatmul.bf16.gmra.mxu0 %v172
  %v360 = vpop.f32.mrf.mxu0
  %v361 = vadd.f32 0.0, %v360
  %v362 = vpop.f32.mrf.mxu0
  %v363 = vadd.f32 0.0, %v362
  %364 = vmatmul.bf16.gmra.mxu0 %v175
  %v365 = vpop.f32.mrf.mxu0
  %v366 = vadd.f32 0.0, %v365
  %v367 = vpop.f32.mrf.mxu0
  %v368 = vadd.f32 0.0, %v367
  %369 = vmatmul.bf16.gmra.mxu0 %v178
  %v370 = vpop.f32.mrf.mxu0
  %v371 = vadd.f32 0.0, %v370
  %v372 = vpop.f32.mrf.mxu0
  %v373 = vadd.f32 0.0, %v372
  %374 = vmatmul.bf16.gmra.mxu0 %v181
  %v375 = vpop.f32.mrf.mxu0
  %v376 = vadd.f32 0.0, %v375
  %v377 = vpop.f32.mrf.mxu0
  %v378 = vadd.f32 0.0, %v377
  %379 = vmatmul.bf16.gmra.mxu0 %v184
  %v380 = vpop.f32.mrf.mxu0
  %v381 = vadd.f32 0.0, %v380
  %v382 = vpop.f32.mrf.mxu0
  %v383 = vadd.f32 0.0, %v382
  %384 = vdwg.mxu0
  %385 = vmatpush.bf16.msra.mxu0 %v290
  %386 = vmatpush.bf16.msra.mxu0 %v289
  %387 = vmatpush.bf16.msra.mxu0 %v288
  %388 = vmatpush.bf16.msra.mxu0 %v287
  %389 = vmatpush.bf16.msra.mxu0 %v286
  %390 = vmatpush.bf16.msra.mxu0 %v285
  %391 = vmatpush.bf16.msra.mxu0 %v284
  %392 = vmatpush.bf16.msra.mxu0 %v283
  %393 = vmatmul.bf16.gmra.mxu0 %v164
  %v394 = vpop.f32.mrf.mxu0
  %v395 = vadd.f32 %v346, %v394
  %v396 = vpop.f32.mrf.mxu0
  %v397 = vadd.f32 %v348, %v396
  %398 = vmatmul.bf16.gmra.mxu0 %v167
  %v399 = vpop.f32.mrf.mxu0
  %v400 = vadd.f32 %v351, %v399
  %v401 = vpop.f32.mrf.mxu0
  %v402 = vadd.f32 %v353, %v401
  %403 = vmatmul.bf16.gmra.mxu0 %v170
  %v404 = vpop.f32.mrf.mxu0
  %v405 = vadd.f32 %v356, %v404
  %v406 = vpop.f32.mrf.mxu0
  %v407 = vadd.f32 %v358, %v406
  %408 = vmatmul.bf16.gmra.mxu0 %v173
  %v409 = vpop.f32.mrf.mxu0
  %v410 = vadd.f32 %v361, %v409
  %v411 = vpop.f32.mrf.mxu0
  %v412 = vadd.f32 %v363, %v411
  %413 = vmatmul.bf16.gmra.mxu0 %v176
  %v414 = vpop.f32.mrf.mxu0
  %v415 = vadd.f32 %v366, %v414
  %v416 = vpop.f32.mrf.mxu0
  %v417 = vadd.f32 %v368, %v416
  %418 = vmatmul.bf16.gmra.mxu0 %v179
  %v419 = vpop.f32.mrf.mxu0
  %v420 = vadd.f32 %v371, %v419
  %v421 = vpop.f32.mrf.mxu0
  %v422 = vadd.f32 %v373, %v421
  %423 = vmatmul.bf16.gmra.mxu0 %v182
  %v424 = vpop.f32.mrf.mxu0
  %v425 = vadd.f32 %v376, %v424
  %v426 = vpop.f32.mrf.mxu0
  %v427 = vadd.f32 %v378, %v426
  %428 = vmatmul.bf16.gmra.mxu0 %v185
  %v429 = vpop.f32.mrf.mxu0
  %v430 = vadd.f32 %v381, %v429
  %v431 = vpop.f32.mrf.mxu0
  %v432 = vadd.f32 %v383, %v431
  %433 = vdwg.mxu0
  %434 = vmatpush.bf16.msra.mxu0 0
  %435 = vmatpush.bf16.msra.mxu0 0
  %436 = vmatpush.bf16.msra.mxu0 0
  %437 = vmatpush.bf16.msra.mxu0 0
  %438 = vmatpush.bf16.msra.mxu0 0
  %439 = vmatpush.bf16.msra.mxu0 0
  %440 = vmatpush.bf16.msra.mxu0 %v292
  %441 = vmatpush.bf16.msra.mxu0 %v291
  %442 = vmatmul.bf16.gmra.mxu0 %v313
  %v443 = vpop.f32.mrf.mxu0
  %v444 = vadd.f32 %v395, %v443
  %v445 = vpop.f32.mrf.mxu0
  %v446 = vadd.f32 %v397, %v445
  %447 = vmatmul.bf16.gmra.mxu0 %v316
  %v448 = vpop.f32.mrf.mxu0
  %v449 = vadd.f32 %v400, %v448
  %v450 = vpop.f32.mrf.mxu0
  %v451 = vadd.f32 %v402, %v450
  %452 = vmatmul.bf16.gmra.mxu0 %v319
  %v453 = vpop.f32.mrf.mxu0
  %v454 = vadd.f32 %v405, %v453
  %v455 = vpop.f32.mrf.mxu0
  %v456 = vadd.f32 %v407, %v455
  %457 = vmatmul.bf16.gmra.mxu0 %v322
  %v458 = vpop.f32.mrf.mxu0
  %v459 = vadd.f32 %v410, %v458
  %v460 = vpop.f32.mrf.mxu0
  %v461 = vadd.f32 %v412, %v460
  %462 = vmatmul.bf16.gmra.mxu0 %v325
  %v463 = vpop.f32.mrf.mxu0
  %v464 = vadd.f32 %v415, %v463
  %v465 = vpop.f32.mrf.mxu0
  %v466 = vadd.f32 %v417, %v465
  %467 = vmatmul.bf16.gmra.mxu0 %v328
  %v468 = vpop.f32.mrf.mxu0
  %v469 = vadd.f32 %v420, %v468
  %v470 = vpop.f32.mrf.mxu0
  %v471 = vadd.f32 %v422, %v470
  %472 = vmatmul.bf16.gmra.mxu0 %v331
  %v473 = vpop.f32.mrf.mxu0
  %v474 = vadd.f32 %v425, %v473
  %v475 = vpop.f32.mrf.mxu0
  %v476 = vadd.f32 %v427, %v475
  %477 = vmatmul.bf16.gmra.mxu0 %v334
  %v478 = vpop.f32.mrf.mxu0
  %v479 = vadd.f32 %v430, %v478
  %v480 = vpop.f32.mrf.mxu0
  %v481 = vadd.f32 %v432, %v480
  %482 = vdwg.mxu0
  %v483 = vmul.f32 %v444, 0.058925565
  %v484 = vmul.f32 %v446, 0.058925565
  %v485 = vmul.f32 %v449, 0.058925565
  %v486 = vmul.f32 %v451, 0.058925565
  %v487 = vmul.f32 %v454, 0.058925565
  %v488 = vmul.f32 %v456, 0.058925565
  %v489 = vmul.f32 %v459, 0.058925565
  %v490 = vmul.f32 %v461, 0.058925565
  %v491 = vmul.f32 %v464, 0.058925565
  %v492 = vmul.f32 %v466, 0.058925565
  %v493 = vmul.f32 %v469, 0.058925565
  %v494 = vmul.f32 %v471, 0.058925565
  %v495 = vmul.f32 %v474, 0.058925565
  %v496 = vmul.f32 %v476, 0.058925565
  %v497 = vmul.f32 %v479, 0.058925565
  %v498 = vmul.f32 %v481, 0.058925565
  %v499 = vld [vmem:[%s2] sm:$0x1]
  %v501 = vperm.slane %v499, 0
  %v503 = vadd.f32 %v483, %v501
  %v504 = vadd.f32 %v484, %v501
  %v505 = vadd.f32 %v485, %v501
  %v506 = vadd.f32 %v486, %v501
  %v507 = vadd.f32 %v487, %v501
  %v508 = vadd.f32 %v488, %v501
  %v509 = vadd.f32 %v489, %v501
  %v510 = vadd.f32 %v490, %v501
  %v511 = vadd.f32 %v491, %v501
  %v512 = vadd.f32 %v492, %v501
  %v513 = vadd.f32 %v493, %v501
  %v514 = vadd.f32 %v494, %v501
  %v515 = vadd.f32 %v495, %v501
  %v516 = vadd.f32 %v496, %v501
  %v517 = vadd.f32 %v497, %v501
  %v518 = vadd.f32 %v498, %v501
  %vm519 = vcmp.ge.f32.partialorder %v503, 0.0
  %vm520 = vcmp.ge.f32.partialorder %v504, 0.0
  %vm521 = vcmp.ge.f32.partialorder %v505, 0.0
  %vm522 = vcmp.ge.f32.partialorder %v506, 0.0
  %vm523 = vcmp.ge.f32.partialorder %v507, 0.0
  %vm524 = vcmp.ge.f32.partialorder %v508, 0.0
  %vm525 = vcmp.ge.f32.partialorder %v509, 0.0
  %vm526 = vcmp.ge.f32.partialorder %v510, 0.0
  %vm527 = vcmp.ge.f32.partialorder %v511, 0.0
  %vm528 = vcmp.ge.f32.partialorder %v512, 0.0
  %vm529 = vcmp.ge.f32.partialorder %v513, 0.0
  %vm530 = vcmp.ge.f32.partialorder %v514, 0.0
  %vm531 = vcmp.ge.f32.partialorder %v515, 0.0
  %vm532 = vcmp.ge.f32.partialorder %v516, 0.0
  %vm533 = vcmp.ge.f32.partialorder %v517, 0.0
  %vm534 = vcmp.ge.f32.partialorder %v518, 0.0
  %v535 = vmul.f32 %v503, 0.2
  %v536 = vmul.f32 %v504, 0.2
  %v537 = vmul.f32 %v505, 0.2
  %v538 = vmul.f32 %v506, 0.2
  %v539 = vmul.f32 %v507, 0.2
  %v540 = vmul.f32 %v508, 0.2
  %v541 = vmul.f32 %v509, 0.2
  %v542 = vmul.f32 %v510, 0.2
  %v543 = vmul.f32 %v511, 0.2
  %v544 = vmul.f32 %v512, 0.2
  %v545 = vmul.f32 %v513, 0.2
  %v546 = vmul.f32 %v514, 0.2
  %v547 = vmul.f32 %v515, 0.2
  %v548 = vmul.f32 %v516, 0.2
  %v549 = vmul.f32 %v517, 0.2
  %v550 = vmul.f32 %v518, 0.2
  %v551 = vsel %vm519, %v503, %v535
  %v552 = vsel %vm520, %v504, %v536
  %v553 = vsel %vm521, %v505, %v537
  %v554 = vsel %vm522, %v506, %v538
  %v555 = vsel %vm523, %v507, %v539
  %v556 = vsel %vm524, %v508, %v540
  %v557 = vsel %vm525, %v509, %v541
  %v558 = vsel %vm526, %v510, %v542
  %v559 = vsel %vm527, %v511, %v543
  %v560 = vsel %vm528, %v512, %v544
  %v561 = vsel %vm529, %v513, %v545
  %v562 = vsel %vm530, %v514, %v546
  %v563 = vsel %vm531, %v515, %v547
  %v564 = vsel %vm532, %v516, %v548
  %v565 = vsel %vm533, %v517, %v549
  %v566 = vsel %vm534, %v518, %v550
  %v567 = vmul.f32 %v551, 1.4142135
  %v568 = vmul.f32 %v552, 1.4142135
  %v569 = vmul.f32 %v553, 1.4142135
  %v570 = vmul.f32 %v554, 1.4142135
  %v571 = vmul.f32 %v555, 1.4142135
  %v572 = vmul.f32 %v556, 1.4142135
  %v573 = vmul.f32 %v557, 1.4142135
  %v574 = vmul.f32 %v558, 1.4142135
  %v575 = vmul.f32 %v559, 1.4142135
  %v576 = vmul.f32 %v560, 1.4142135
  %v577 = vmul.f32 %v561, 1.4142135
  %v578 = vmul.f32 %v562, 1.4142135
  %v579 = vmul.f32 %v563, 1.4142135
  %v580 = vmul.f32 %v564, 1.4142135
  %v581 = vmul.f32 %v565, 1.4142135
  %v582 = vmul.f32 %v566, 1.4142135
  %v583 = vmax.f32 %v567, -256.0
  %v584 = vmax.f32 %v568, -256.0
  %v585 = vmax.f32 %v569, -256.0
  %v586 = vmax.f32 %v570, -256.0
  %v587 = vmax.f32 %v571, -256.0
  %v588 = vmax.f32 %v572, -256.0
  %v589 = vmax.f32 %v573, -256.0
  %v590 = vmax.f32 %v574, -256.0
  %v591 = vmax.f32 %v575, -256.0
  %v592 = vmax.f32 %v576, -256.0
  %v593 = vmax.f32 %v577, -256.0
  %v594 = vmax.f32 %v578, -256.0
  %v595 = vmax.f32 %v579, -256.0
  %v596 = vmax.f32 %v580, -256.0
  %v597 = vmax.f32 %v581, -256.0
  %v598 = vmax.f32 %v582, -256.0
  %v599 = vmin.f32 %v583, 256.0
  %v600 = vmin.f32 %v584, 256.0
  %v601 = vmin.f32 %v585, 256.0
  %v602 = vmin.f32 %v586, 256.0
  %v603 = vmin.f32 %v587, 256.0
  %v604 = vmin.f32 %v588, 256.0
  %v605 = vmin.f32 %v589, 256.0
  %v606 = vmin.f32 %v590, 256.0
  %v607 = vmin.f32 %v591, 256.0
  %v608 = vmin.f32 %v592, 256.0
  %v609 = vmin.f32 %v593, 256.0
  %v610 = vmin.f32 %v594, 256.0
  %v611 = vmin.f32 %v595, 256.0
  %v612 = vmin.f32 %v596, 256.0
  %v613 = vmin.f32 %v597, 256.0
  %v614 = vmin.f32 %v598, 256.0
  %615 = vst.msk [vmem:[%s3] sm:$0xff] %vm311, %v599
  %616 = vst.msk [vmem:[%s3 + $0x8] sm:$0xff] %vm311, %v600
  %617 = vst.msk [vmem:[%s3 + $0x10] sm:$0xff] %vm311, %v601
  %618 = vst.msk [vmem:[%s3 + $0x18] sm:$0xff] %vm311, %v602
  %619 = vst.msk [vmem:[%s3 + $0x20] sm:$0xff] %vm311, %v603
  %620 = vst.msk [vmem:[%s3 + $0x28] sm:$0xff] %vm311, %v604
  %621 = vst.msk [vmem:[%s3 + $0x30] sm:$0xff] %vm311, %v605
  %622 = vst.msk [vmem:[%s3 + $0x38] sm:$0xff] %vm311, %v606
  %623 = vst.msk [vmem:[%s3 + $0x40] sm:$0xff] %vm311, %v607
  %624 = vst.msk [vmem:[%s3 + $0x48] sm:$0xff] %vm311, %v608
  %625 = vst.msk [vmem:[%s3 + $0x50] sm:$0xff] %vm311, %v609
  %626 = vst.msk [vmem:[%s3 + $0x58] sm:$0xff] %vm311, %v610
  %627 = vst.msk [vmem:[%s3 + $0x60] sm:$0xff] %vm311, %v611
  %628 = vst.msk [vmem:[%s3 + $0x68] sm:$0xff] %vm311, %v612
  %629 = vst.msk [vmem:[%s3 + $0x70] sm:$0xff] %vm311, %v613
  %630 = vst.msk [vmem:[%s3 + $0x78] sm:$0xff] %vm311, %v614
  // Predicated region
  $region14: #{run.15} parent=0 // pred_check
    _
  $region15: #{run.15} parent=0 // pred_check_branch
    %632 = sbr.rel (0) target = $region17
  $region16: #{run.15} parent=0 // pred_region
    _
  $region17: #{run.15} parent=0 // pred_fallthru
    _
  // Predicated region
  $region18: #{run.15} parent=0 // pred_check
    _
  $region19: #{run.15} parent=0 // pred_check_branch
    %634 = sbr.rel (0) target = $region21
  $region20: #{run.15} parent=0 // pred_region
    _
  $region21: #{run.15} parent=0 // pred_fallthru
    _

// kernel: run.16
$region0: #{run.16}
  #allocation0 [shape = 'u32[]', space=smem, size = 0x4, offset = 0x4, fixed_abs, tag = 'smem constant byte address 0x4 - core index']
  #allocation1 [shape = 'u32[72,128]{1,0:T(1,128)}', space=vmem, size = 0x9000, scoped, tag = 'internal scratch']
  %s0 = inlined_call_operand.vmem [shape: bf16[32,288], index: 0, kind: input, shape index: {}]
  %s1 = inlined_call_operand.vmem [shape: bf16[288,64], index: 1, kind: input, shape index: {}]
  %s2 = inlined_call_operand.vmem [shape: f32[1,64], index: 2, kind: input, shape index: {}]
  %s3 = inlined_call_operand.vmem [shape: f32[32,64], index: 3, kind: output, shape index: {}]
  %s4 = sld [smem:[#allocation0]]
  $region22: #{run.16} parent=0
    _
  %s6 = ssub.s32 1, %s4
  %s7 = scalar_select 0, %s6, %s4
  // Predicated region
  $region2: #{run.16} parent=0 // pred_check
    _
  $region3: #{run.16} parent=0 // pred_check_branch
    %9 = sbr.rel (0) target = $region5
  $region4: #{run.16} parent=0 // pred_region
    _
  $region5: #{run.16} parent=0 // pred_fallthru
    _
  // Predicated region
  $region6: #{run.16} parent=0 // pred_check
    _
  $region7: #{run.16} parent=0 // pred_check_branch
    %11 = sbr.rel (0) target = $region9
  $region8: #{run.16} parent=0 // pred_region
    _
  $region9: #{run.16} parent=0 // pred_fallthru
    _
  // Predicated region
  $region10: #{run.16} parent=0 // pred_check
    _
  $region11: #{run.16} parent=0 // pred_check_branch
    %13 = sbr.rel (0) target = $region13
  $region12: #{run.16} parent=0 // pred_region
    _
  $region13: #{run.16} parent=0 // pred_fallthru
    _
  %v15 = vld [vmem:[%s0] sm:$0xff]
  %v16 = vld [vmem:[%s0 + $0x8] sm:$0xf]
  %v17 = vld [vmem:[%s0 + $0xc] sm:$0xff]
  %v18 = vld [vmem:[%s0 + $0x14] sm:$0xf]
  %v19 = vld [vmem:[%s0 + $0x18] sm:$0xff]
  %v20 = vld [vmem:[%s0 + $0x20] sm:$0xf]
  %v21 = vld [vmem:[%s0 + $0x24] sm:$0xff]
  %v22 = vld [vmem:[%s0 + $0x2c] sm:$0xf]
  %v23 = vld [vmem:[%s1] sm:$0xf]
  %v24 = vld [vmem:[%s1 + $0x4] sm:$0xf]
  %v25 = vld [vmem:[%s1 + $0x8] sm:$0xf]
  %v26 = vld [vmem:[%s1 + $0xc] sm:$0xf]
  %v27 = vld [vmem:[%s1 + $0x10] sm:$0xf]
  %v28 = vld [vmem:[%s1 + $0x14] sm:$0xf]
  %v29 = vld [vmem:[%s1 + $0x18] sm:$0xf]
  %v30 = vld [vmem:[%s1 + $0x1c] sm:$0xf]
  %v31 = vld [vmem:[%s1 + $0x20] sm:$0xf]
  %v32 = vld [vmem:[%s1 + $0x24] sm:$0xf]
  %v33 = vld [vmem:[%s1 + $0x28] sm:$0xf]
  %v34 = vld [vmem:[%s1 + $0x2c] sm:$0xf]
  %v35 = vld [vmem:[%s1 + $0x30] sm:$0xf]
  %v36 = vld [vmem:[%s1 + $0x34] sm:$0xf]
  %v37 = vld [vmem:[%s1 + $0x38] sm:$0xf]
  %v38 = vld [vmem:[%s1 + $0x3c] sm:$0xf]
  %v39 = vld [vmem:[%s1 + $0x40] sm:$0xf]
  %v40 = vld [vmem:[%s1 + $0x44] sm:$0xf]
  %v41 = vld [vmem:[%s1 + $0x48] sm:$0xf]
  %v42 = vld [vmem:[%s1 + $0x4c] sm:$0xf]
  %v43 = vld [vmem:[%s1 + $0x50] sm:$0xf]
  %v44 = vld [vmem:[%s1 + $0x54] sm:$0xf]
  %v45 = vld [vmem:[%s1 + $0x58] sm:$0xf]
  %v46 = vld [vmem:[%s1 + $0x5c] sm:$0xf]
  %v47 = vld [vmem:[%s1 + $0x60] sm:$0xf]
  %v48 = vld [vmem:[%s1 + $0x64] sm:$0xf]
  %v49 = vld [vmem:[%s1 + $0x68] sm:$0xf]
  %v50 = vld [vmem:[%s1 + $0x6c] sm:$0xf]
  %v51 = vld [vmem:[%s1 + $0x70] sm:$0xf]
  %v52 = vld [vmem:[%s1 + $0x74] sm:$0xf]
  %v53 = vld [vmem:[%s1 + $0x78] sm:$0xf]
  %v54 = vld [vmem:[%s1 + $0x7c] sm:$0xf]
  %v55 = vld [vmem:[%s1 + $0x80] sm:$0xf]
  %v56 = vld [vmem:[%s1 + $0x84] sm:$0xf]
  %v57 = vld [vmem:[%s1 + $0x88] sm:$0xf]
  %v58 = vld [vmem:[%s1 + $0x8c] sm:$0xf]
  %v67 = vunpack.c.l.b16 %v15
  %v68 = vunpack.c.h.b16 %v15
  %v69 = vunpack.c.l.b16 %v16
  %v70 = vunpack.c.l.b16 %v17
  %v71 = vunpack.c.h.b16 %v17
  %v72 = vunpack.c.l.b16 %v18
  %v73 = vunpack.c.l.b16 %v19
  %v74 = vunpack.c.h.b16 %v19
  %v75 = vunpack.c.l.b16 %v20
  %v76 = vunpack.c.l.b16 %v21
  %v77 = vunpack.c.h.b16 %v21
  %v78 = vunpack.c.l.b16 %v22
  %v79 = vpack.c.b16 %v70, %v67
  %v80 = vpack.c.b16 %v71, %v68
  %v81 = vpack.c.b16 %v72, %v69
  %v82 = vpack.c.b16 %v76, %v73
  %v83 = vpack.c.b16 %v77, %v74
  %v84 = vpack.c.b16 %v78, %v75
  %v125 = vunpack.c.l.b16 %v23
  %v126 = vunpack.c.l.b16 %v24
  %v127 = vunpack.c.l.b16 %v25
  %v128 = vunpack.c.l.b16 %v26
  %v129 = vunpack.c.l.b16 %v27
  %v130 = vunpack.c.l.b16 %v28
  %v131 = vunpack.c.l.b16 %v29
  %v132 = vunpack.c.l.b16 %v30
  %v133 = vunpack.c.l.b16 %v31
  %v134 = vunpack.c.l.b16 %v32
  %v135 = vunpack.c.l.b16 %v33
  %v136 = vunpack.c.l.b16 %v34
  %v137 = vunpack.c.l.b16 %v35
  %v138 = vunpack.c.l.b16 %v36
  %v139 = vunpack.c.l.b16 %v37
  %v140 = vunpack.c.l.b16 %v38
  %v141 = vunpack.c.l.b16 %v39
  %v142 = vunpack.c.l.b16 %v40
  %v143 = vunpack.c.l.b16 %v41
  %v144 = vunpack.c.l.b16 %v42
  %v145 = vunpack.c.l.b16 %v43
  %v146 = vunpack.c.l.b16 %v44
  %v147 = vunpack.c.l.b16 %v45
  %v148 = vunpack.c.l.b16 %v46
  %v149 = vunpack.c.l.b16 %v47
  %v150 = vunpack.c.l.b16 %v48
  %v151 = vunpack.c.l.b16 %v49
  %v152 = vunpack.c.l.b16 %v50
  %v153 = vunpack.c.l.b16 %v51
  %v154 = vunpack.c.l.b16 %v52
  %v155 = vunpack.c.l.b16 %v53
  %v156 = vunpack.c.l.b16 %v54
  %v157 = vunpack.c.l.b16 %v55
  %v158 = vunpack.c.l.b16 %v56
  %v159 = vunpack.c.l.b16 %v57
  %v160 = vunpack.c.l.b16 %v58
  %v161 = vpack.c.b16 %v126, %v125
  %v162 = vpack.c.b16 %v128, %v127
  %v163 = vpack.c.b16 %v130, %v129
  %v164 = vpack.c.b16 %v132, %v131
  %v165 = vpack.c.b16 %v134, %v133
  %v166 = vpack.c.b16 %v136, %v135
  %v167 = vpack.c.b16 %v138, %v137
  %v168 = vpack.c.b16 %v140, %v139
  %v169 = vpack.c.b16 %v142, %v141
  %v170 = vpack.c.b16 %v144, %v143
  %v171 = vpack.c.b16 %v146, %v145
  %v172 = vpack.c.b16 %v148, %v147
  %v173 = vpack.c.b16 %v150, %v149
  %v174 = vpack.c.b16 %v152, %v151
  %v175 = vpack.c.b16 %v154, %v153
  %v176 = vpack.c.b16 %v156, %v155
  %v177 = vpack.c.b16 %v158, %v157
  %v178 = vpack.c.b16 %v160, %v159
  %vm197 = vcmask 261120
  %v199 = vsel %vm197, %v81, 0
  %v202 = vsel %vm197, %v84, 0
  %204 = vmatpush.bf16.msra.mxu0 %v168
  %205 = vmatpush.bf16.msra.mxu0 %v167
  %206 = vmatpush.bf16.msra.mxu0 %v166
  %207 = vmatpush.bf16.msra.mxu0 %v165
  %208 = vmatpush.bf16.msra.mxu0 %v164
  %209 = vmatpush.bf16.msra.mxu0 %v163
  %210 = vmatpush.bf16.msra.mxu0 %v162
  %211 = vmatpush.bf16.msra.mxu0 %v161
  %212 = vmatmul.bf16.gmra.mxu0 %v79
  %v213 = vpop.f32.mrf.mxu0
  %v214 = vadd.f32 0.0, %v213
  %v215 = vpop.f32.mrf.mxu0
  %v216 = vadd.f32 0.0, %v215
  %217 = vmatmul.bf16.gmra.mxu0 %v82
  %v218 = vpop.f32.mrf.mxu0
  %v219 = vadd.f32 0.0, %v218
  %v220 = vpop.f32.mrf.mxu0
  %v221 = vadd.f32 0.0, %v220
  %222 = vdwg.mxu0
  %223 = vmatpush.bf16.msra.mxu0 %v176
  %224 = vmatpush.bf16.msra.mxu0 %v175
  %225 = vmatpush.bf16.msra.mxu0 %v174
  %226 = vmatpush.bf16.msra.mxu0 %v173
  %227 = vmatpush.bf16.msra.mxu0 %v172
  %228 = vmatpush.bf16.msra.mxu0 %v171
  %229 = vmatpush.bf16.msra.mxu0 %v170
  %230 = vmatpush.bf16.msra.mxu0 %v169
  %231 = vmatmul.bf16.gmra.mxu0 %v80
  %v232 = vpop.f32.mrf.mxu0
  %v233 = vadd.f32 %v214, %v232
  %v234 = vpop.f32.mrf.mxu0
  %v235 = vadd.f32 %v216, %v234
  %236 = vmatmul.bf16.gmra.mxu0 %v83
  %v237 = vpop.f32.mrf.mxu0
  %v238 = vadd.f32 %v219, %v237
  %v239 = vpop.f32.mrf.mxu0
  %v240 = vadd.f32 %v221, %v239
  %241 = vdwg.mxu0
  %242 = vmatpush.bf16.msra.mxu0 0
  %243 = vmatpush.bf16.msra.mxu0 0
  %244 = vmatpush.bf16.msra.mxu0 0
  %245 = vmatpush.bf16.msra.mxu0 0
  %246 = vmatpush.bf16.msra.mxu0 0
  %247 = vmatpush.bf16.msra.mxu0 0
  %248 = vmatpush.bf16.msra.mxu0 %v178
  %249 = vmatpush.bf16.msra.mxu0 %v177
  %250 = vmatmul.bf16.gmra.mxu0 %v199
  %v251 = vpop.f32.mrf.mxu0
  %v252 = vadd.f32 %v233, %v251
  %v253 = vpop.f32.mrf.mxu0
  %v254 = vadd.f32 %v235, %v253
  %255 = vmatmul.bf16.gmra.mxu0 %v202
  %v256 = vpop.f32.mrf.mxu0
  %v257 = vadd.f32 %v238, %v256
  %v258 = vpop.f32.mrf.mxu0
  %v259 = vadd.f32 %v240, %v258
  %260 = vdwg.mxu0
  %v261 = vmul.f32 %v252, 0.058925565
  %v262 = vmul.f32 %v254, 0.058925565
  %v263 = vmul.f32 %v257, 0.058925565
  %v264 = vmul.f32 %v259, 0.058925565
  %v265 = vld [vmem:[%s2] sm:$0x1]
  %v267 = vperm.slane %v265, 0
  %v269 = vadd.f32 %v261, %v267
  %v270 = vadd.f32 %v262, %v267
  %v271 = vadd.f32 %v263, %v267
  %v272 = vadd.f32 %v264, %v267
  %vm273 = vcmp.ge.f32.partialorder %v269, 0.0
  %vm274 = vcmp.ge.f32.partialorder %v270, 0.0
  %vm275 = vcmp.ge.f32.partialorder %v271, 0.0
  %vm276 = vcmp.ge.f32.partialorder %v272, 0.0
  %v277 = vmul.f32 %v269, 0.2
  %v278 = vmul.f32 %v270, 0.2
  %v279 = vmul.f32 %v271, 0.2
  %v280 = vmul.f32 %v272, 0.2
  %v281 = vsel %vm273, %v269, %v277
  %v282 = vsel %vm274, %v270, %v278
  %v283 = vsel %vm275, %v271, %v279
  %v284 = vsel %vm276, %v272, %v280
  %v285 = vmax.f32 %v281, -181.01933
  %v286 = vmax.f32 %v282, -181.01933
  %v287 = vmax.f32 %v283, -181.01933
  %v288 = vmax.f32 %v284, -181.01933
  %v289 = vmin.f32 %v285, 181.01933
  %v290 = vmin.f32 %v286, 181.01933
  %v291 = vmin.f32 %v287, 181.01933
  %v292 = vmin.f32 %v288, 181.01933
  %vm293 = vcmask 523264
  %294 = vst.msk [vmem:[%s3] sm:$0xff] %vm293, %v289
  %295 = vst.msk [vmem:[%s3 + $0x8] sm:$0xff] %vm293, %v290
  %296 = vst.msk [vmem:[%s3 + $0x10] sm:$0xff] %vm293, %v291
  %297 = vst.msk [vmem:[%s3 + $0x18] sm:$0xff] %vm293, %v292
  // Predicated region
  $region14: #{run.16} parent=0 // pred_check
    _
  $region15: #{run.16} parent=0 // pred_check_branch
    %299 = sbr.rel (0) target = $region17
  $region16: #{run.16} parent=0 // pred_region
    _
  $region17: #{run.16} parent=0 // pred_fallthru
    _
  // Predicated region
  $region18: #{run.16} parent=0 // pred_check
    _
  $region19: #{run.16} parent=0 // pred_check_branch
    %301 = sbr.rel (0) target = $region21
  $region20: #{run.16} parent=0 // pred_region
    _
  $region21: #{run.16} parent=0 // pred_fallthru
    _

// kernel: run.18
$region0: #{run.18}
  #allocation0 [shape = 'u32[]', space=smem, size = 0x4, offset = 0x4, fixed_abs, tag = 'smem constant byte address 0x4 - core index']
  #allocation1 [shape = 'u32[72,128]{1,0:T(1,128)}', space=vmem, size = 0x9000, scoped, tag = 'internal scratch']
  %s0 = inlined_call_operand.vmem [shape: bf16[32,585], index: 0, kind: input, shape index: {}]
  %s1 = inlined_call_operand.vmem [shape: bf16[585,64], index: 1, kind: input, shape index: {}]
  %s2 = inlined_call_operand.vmem [shape: f32[1,64], index: 2, kind: input, shape index: {}]
  %s3 = inlined_call_operand.vmem [shape: f32[32,64], index: 3, kind: output, shape index: {}]
  %s4 = sld [smem:[#allocation0]]
  $region22: #{run.18} parent=0
    _
  %s6 = ssub.s32 1, %s4
  %s7 = scalar_select 0, %s6, %s4
  // Predicated region
  $region2: #{run.18} parent=0 // pred_check
    _
  $region3: #{run.18} parent=0 // pred_check_branch
    %9 = sbr.rel (0) target = $region5
  $region4: #{run.18} parent=0 // pred_region
    _
  $region5: #{run.18} parent=0 // pred_fallthru
    _
  // Predicated region
  $region6: #{run.18} parent=0 // pred_check
    _
  $region7: #{run.18} parent=0 // pred_check_branch
    %11 = sbr.rel (0) target = $region9
  $region8: #{run.18} parent=0 // pred_region
    _
  $region9: #{run.18} parent=0 // pred_fallthru
    _
  // Predicated region
  $region10: #{run.18} parent=0 // pred_check
    _
  $region11: #{run.18} parent=0 // pred_check_branch
    %13 = sbr.rel (0) target = $region13
  $region12: #{run.18} parent=0 // pred_region
    _
  $region13: #{run.18} parent=0 // pred_fallthru
    _
  %v15 = vld [vmem:[%s0] sm:$0xff]
  %v16 = vld [vmem:[%s0 + $0x8] sm:$0xff]
  %v17 = vld [vmem:[%s0 + $0x10] sm:$0xf]
  %v18 = vld [vmem:[%s0 + $0x14] sm:$0xff]
  %v19 = vld [vmem:[%s0 + $0x1c] sm:$0xff]
  %v20 = vld [vmem:[%s0 + $0x24] sm:$0xf]
  %v21 = vld [vmem:[%s0 + $0x28] sm:$0xff]
  %v22 = vld [vmem:[%s0 + $0x30] sm:$0xff]
  %v23 = vld [vmem:[%s0 + $0x38] sm:$0xf]
  %v24 = vld [vmem:[%s0 + $0x3c] sm:$0xff]
  %v25 = vld [vmem:[%s0 + $0x44] sm:$0xff]
  %v26 = vld [vmem:[%s0 + $0x4c] sm:$0xf]
  %v27 = vld [vmem:[%s1] sm:$0xf]
  %v28 = vld [vmem:[%s1 + $0x4] sm:$0xf]
  %v29 = vld [vmem:[%s1 + $0x8] sm:$0xf]
  %v30 = vld [vmem:[%s1 + $0xc] sm:$0xf]
  %v31 = vld [vmem:[%s1 + $0x10] sm:$0xf]
  %v32 = vld [vmem:[%s1 + $0x14] sm:$0xf]
  %v33 = vld [vmem:[%s1 + $0x18] sm:$0xf]
  %v34 = vld [vmem:[%s1 + $0x1c] sm:$0xf]
  %v35 = vld [vmem:[%s1 + $0x20] sm:$0xf]
  %v36 = vld [vmem:[%s1 + $0x24] sm:$0xf]
  %v37 = vld [vmem:[%s1 + $0x28] sm:$0xf]
  %v38 = vld [vmem:[%s1 + $0x2c] sm:$0xf]
  %v39 = vld [vmem:[%s1 + $0x30] sm:$0xf]
  %v40 = vld [vmem:[%s1 + $0x34] sm:$0xf]
  %v41 = vld [vmem:[%s1 + $0x38] sm:$0xf]
  %v42 = vld [vmem:[%s1 + $0x3c] sm:$0xf]
  %v43 = vld [vmem:[%s1 + $0x40] sm:$0xf]
  %v44 = vld [vmem:[%s1 + $0x44] sm:$0xf]
  %v45 = vld [vmem:[%s1 + $0x48] sm:$0xf]
  %v46 = vld [vmem:[%s1 + $0x4c] sm:$0xf]
  %v47 = vld [vmem:[%s1 + $0x50] sm:$0xf]
  %v48 = vld [vmem:[%s1 + $0x54] sm:$0xf]
  %v49 = vld [vmem:[%s1 + $0x58] sm:$0xf]
  %v50 = vld [vmem:[%s1 + $0x5c] sm:$0xf]
  %v51 = vld [vmem:[%s1 + $0x60] sm:$0xf]
  %v52 = vld [vmem:[%s1 + $0x64] sm:$0xf]
  %v53 = vld [vmem:[%s1 + $0x68] sm:$0xf]
  %v54 = vld [vmem:[%s1 + $0x6c] sm:$0xf]
  %v55 = vld [vmem:[%s1 + $0x70] sm:$0xf]
  %v56 = vld [vmem:[%s1 + $0x74] sm:$0xf]
  %v57 = vld [vmem:[%s1 + $0x78] sm:$0xf]
  %v58 = vld [vmem:[%s1 + $0x7c] sm:$0xf]
  %v59 = vld [vmem:[%s1 + $0x80] sm:$0xf]
  %v60 = vld [vmem:[%s1 + $0x84] sm:$0xf]
  %v61 = vld [vmem:[%s1 + $0x88] sm:$0xf]
  %v62 = vld [vmem:[%s1 + $0x8c] sm:$0xf]
  %v63 = vld [vmem:[%s1 + $0x90] sm:$0xf]
  %v64 = vld [vmem:[%s1 + $0x94] sm:$0xf]
  %v65 = vld [vmem:[%s1 + $0x98] sm:$0xf]
  %v66 = vld [vmem:[%s1 + $0x9c] sm:$0xf]
  %v67 = vld [vmem:[%s1 + $0xa0] sm:$0xf]
  %v68 = vld [vmem:[%s1 + $0xa4] sm:$0xf]
  %v69 = vld [vmem:[%s1 + $0xa8] sm:$0xf]
  %v70 = vld [vmem:[%s1 + $0xac] sm:$0xf]
  %v71 = vld [vmem:[%s1 + $0xb0] sm:$0xf]
  %v72 = vld [vmem:[%s1 + $0xb4] sm:$0xf]
  %v73 = vld [vmem:[%s1 + $0xb8] sm:$0xf]
  %v74 = vld [vmem:[%s1 + $0xbc] sm:$0xf]
  %v75 = vld [vmem:[%s1 + $0xc0] sm:$0xf]
  %v76 = vld [vmem:[%s1 + $0xc4] sm:$0xf]
  %v77 = vld [vmem:[%s1 + $0xc8] sm:$0xf]
  %v78 = vld [vmem:[%s1 + $0xcc] sm:$0xf]
  %v79 = vld [vmem:[%s1 + $0xd0] sm:$0xf]
  %v80 = vld [vmem:[%s1 + $0xd4] sm:$0xf]
  %v81 = vld [vmem:[%s1 + $0xd8] sm:$0xf]
  %v82 = vld [vmem:[%s1 + $0xdc] sm:$0xf]
  %v83 = vld [vmem:[%s1 + $0xe0] sm:$0xf]
  %v84 = vld [vmem:[%s1 + $0xe4] sm:$0xf]
  %v85 = vld [vmem:[%s1 + $0xe8] sm:$0xf]
  %v86 = vld [vmem:[%s1 + $0xec] sm:$0xf]
  %v87 = vld [vmem:[%s1 + $0xf0] sm:$0xf]
  %v88 = vld [vmem:[%s1 + $0xf4] sm:$0xf]
  %v89 = vld [vmem:[%s1 + $0xf8] sm:$0xf]
  %v90 = vld [vmem:[%s1 + $0xfc] sm:$0xf]
  %v91 = vld [vmem:[%s1 + $0x100] sm:$0xf]
  %v92 = vld [vmem:[%s1 + $0x104] sm:$0xf]
  %v93 = vld [vmem:[%s1 + $0x108] sm:$0xf]
  %v94 = vld [vmem:[%s1 + $0x10c] sm:$0xf]
  %v95 = vld [vmem:[%s1 + $0x110] sm:$0xf]
  %v96 = vld [vmem:[%s1 + $0x114] sm:$0xf]
  %v97 = vld [vmem:[%s1 + $0x118] sm:$0xf]
  %v98 = vld [vmem:[%s1 + $0x11c] sm:$0xf]
  %v99 = vld [vmem:[%s1 + $0x120] sm:$0xf]
  %v100 = vld [vmem:[%s1 + $0x124] sm:$0x1]
  %v113 = vunpack.c.l.b16 %v15
  %v114 = vunpack.c.h.b16 %v15
  %v115 = vunpack.c.l.b16 %v16
  %v116 = vunpack.c.h.b16 %v16
  %v117 = vunpack.c.l.b16 %v17
  %v118 = vunpack.c.l.b16 %v18
  %v119 = vunpack.c.h.b16 %v18
  %v120 = vunpack.c.l.b16 %v19
  %v121 = vunpack.c.h.b16 %v19
  %v122 = vunpack.c.l.b16 %v20
  %v123 = vunpack.c.l.b16 %v21
  %v124 = vunpack.c.h.b16 %v21
  %v125 = vunpack.c.l.b16 %v22
  %v126 = vunpack.c.h.b16 %v22
  %v127 = vunpack.c.l.b16 %v23
  %v128 = vunpack.c.l.b16 %v24
  %v129 = vunpack.c.h.b16 %v24
  %v130 = vunpack.c.l.b16 %v25
  %v131 = vunpack.c.h.b16 %v25
  %v132 = vunpack.c.l.b16 %v26
  %v133 = vpack.c.b16 %v118, %v113
  %v134 = vpack.c.b16 %v119, %v114
  %v135 = vpack.c.b16 %v120, %v115
  %v136 = vpack.c.b16 %v121, %v116
  %v137 = vpack.c.b16 %v122, %v117
  %v138 = vpack.c.b16 %v128, %v123
  %v139 = vpack.c.b16 %v129, %v124
  %v140 = vpack.c.b16 %v130, %v125
  %v141 = vpack.c.b16 %v131, %v126
  %v142 = vpack.c.b16 %v132, %v127
  %v225 = vunpack.c.l.b16 %v27
  %v226 = vunpack.c.l.b16 %v28
  %v227 = vunpack.c.l.b16 %v29
  %v228 = vunpack.c.l.b16 %v30
  %v229 = vunpack.c.l.b16 %v31
  %v230 = vunpack.c.l.b16 %v32
  %v231 = vunpack.c.l.b16 %v33
  %v232 = vunpack.c.l.b16 %v34
  %v233 = vunpack.c.l.b16 %v35
  %v234 = vunpack.c.l.b16 %v36
  %v235 = vunpack.c.l.b16 %v37
  %v236 = vunpack.c.l.b16 %v38
  %v237 = vunpack.c.l.b16 %v39
  %v238 = vunpack.c.l.b16 %v40
  %v239 = vunpack.c.l.b16 %v41
  %v240 = vunpack.c.l.b16 %v42
  %v241 = vunpack.c.l.b16 %v43
  %v242 = vunpack.c.l.b16 %v44
  %v243 = vunpack.c.l.b16 %v45
  %v244 = vunpack.c.l.b16 %v46
  %v245 = vunpack.c.l.b16 %v47
  %v246 = vunpack.c.l.b16 %v48
  %v247 = vunpack.c.l.b16 %v49
  %v248 = vunpack.c.l.b16 %v50
  %v249 = vunpack.c.l.b16 %v51
  %v250 = vunpack.c.l.b16 %v52
  %v251 = vunpack.c.l.b16 %v53
  %v252 = vunpack.c.l.b16 %v54
  %v253 = vunpack.c.l.b16 %v55
  %v254 = vunpack.c.l.b16 %v56
  %v255 = vunpack.c.l.b16 %v57
  %v256 = vunpack.c.l.b16 %v58
  %v257 = vunpack.c.l.b16 %v59
  %v258 = vunpack.c.l.b16 %v60
  %v259 = vunpack.c.l.b16 %v61
  %v260 = vunpack.c.l.b16 %v62
  %v261 = vunpack.c.l.b16 %v63
  %v262 = vunpack.c.l.b16 %v64
  %v263 = vunpack.c.l.b16 %v65
  %v264 = vunpack.c.l.b16 %v66
  %v265 = vunpack.c.l.b16 %v67
  %v266 = vunpack.c.l.b16 %v68
  %v267 = vunpack.c.l.b16 %v69
  %v268 = vunpack.c.l.b16 %v70
  %v269 = vunpack.c.l.b16 %v71
  %v270 = vunpack.c.l.b16 %v72
  %v271 = vunpack.c.l.b16 %v73
  %v272 = vunpack.c.l.b16 %v74
  %v273 = vunpack.c.l.b16 %v75
  %v274 = vunpack.c.l.b16 %v76
  %v275 = vunpack.c.l.b16 %v77
  %v276 = vunpack.c.l.b16 %v78
  %v277 = vunpack.c.l.b16 %v79
  %v278 = vunpack.c.l.b16 %v80
  %v279 = vunpack.c.l.b16 %v81
  %v280 = vunpack.c.l.b16 %v82
  %v281 = vunpack.c.l.b16 %v83
  %v282 = vunpack.c.l.b16 %v84
  %v283 = vunpack.c.l.b16 %v85
  %v284 = vunpack.c.l.b16 %v86
  %v285 = vunpack.c.l.b16 %v87
  %v286 = vunpack.c.l.b16 %v88
  %v287 = vunpack.c.l.b16 %v89
  %v288 = vunpack.c.l.b16 %v90
  %v289 = vunpack.c.l.b16 %v91
  %v290 = vunpack.c.l.b16 %v92
  %v291 = vunpack.c.l.b16 %v93
  %v292 = vunpack.c.l.b16 %v94
  %v293 = vunpack.c.l.b16 %v95
  %v294 = vunpack.c.l.b16 %v96
  %v295 = vunpack.c.l.b16 %v97
  %v296 = vunpack.c.l.b16 %v98
  %v297 = vunpack.c.l.b16 %v99
  %v298 = vunpack.c.l.b16 %v100
  %v299 = vpack.c.b16 %v226, %v225
  %v300 = vpack.c.b16 %v228, %v227
  %v301 = vpack.c.b16 %v230, %v229
  %v302 = vpack.c.b16 %v232, %v231
  %v303 = vpack.c.b16 %v234, %v233
  %v304 = vpack.c.b16 %v236, %v235
  %v305 = vpack.c.b16 %v238, %v237
  %v306 = vpack.c.b16 %v240, %v239
  %v307 = vpack.c.b16 %v242, %v241
  %v308 = vpack.c.b16 %v244, %v243
  %v309 = vpack.c.b16 %v246, %v245
  %v310 = vpack.c.b16 %v248, %v247
  %v311 = vpack.c.b16 %v250, %v249
  %v312 = vpack.c.b16 %v252, %v251
  %v313 = vpack.c.b16 %v254, %v253
  %v314 = vpack.c.b16 %v256, %v255
  %v315 = vpack.c.b16 %v258, %v257
  %v316 = vpack.c.b16 %v260, %v259
  %v317 = vpack.c.b16 %v262, %v261
  %v318 = vpack.c.b16 %v264, %v263
  %v319 = vpack.c.b16 %v266, %v265
  %v320 = vpack.c.b16 %v268, %v267
  %v321 = vpack.c.b16 %v270, %v269
  %v322 = vpack.c.b16 %v272, %v271
  %v323 = vpack.c.b16 %v274, %v273
  %v324 = vpack.c.b16 %v276, %v275
  %v325 = vpack.c.b16 %v278, %v277
  %v326 = vpack.c.b16 %v280, %v279
  %v327 = vpack.c.b16 %v282, %v281
  %v328 = vpack.c.b16 %v284, %v283
  %v329 = vpack.c.b16 %v286, %v285
  %v330 = vpack.c.b16 %v288, %v287
  %v331 = vpack.c.b16 %v290, %v289
  %v332 = vpack.c.b16 %v292, %v291
  %v333 = vpack.c.b16 %v294, %v293
  %v334 = vpack.c.b16 %v296, %v295
  %v335 = vpack.c.b16 %v298, %v297
  %vm372 = vcmask 596992
  %v374 = vsel %vm372, %v137, 0
  %v377 = vsel %vm372, %v142, 0
  %vm379 = vcmask 1043456
  %vm380 = vcmask 1044480
  %v381 = vsel %vm379, 4294967295, 65535
  %v382 = vsel %vm380, %v381, 0
  %v384 = vand.u32 %v335, %v382
  %386 = vmatpush.bf16.msra.mxu0 %v306
  %387 = vmatpush.bf16.msra.mxu0 %v305
  %388 = vmatpush.bf16.msra.mxu0 %v304
  %389 = vmatpush.bf16.msra.mxu0 %v303
  %390 = vmatpush.bf16.msra.mxu0 %v302
  %391 = vmatpush.bf16.msra.mxu0 %v301
  %392 = vmatpush.bf16.msra.mxu0 %v300
  %393 = vmatpush.bf16.msra.mxu0 %v299
  %394 = vmatmul.bf16.gmra.mxu0 %v133
  %v395 = vpop.f32.mrf.mxu0
  %v396 = vadd.f32 0.0, %v395
  %v397 = vpop.f32.mrf.mxu0
  %v398 = vadd.f32 0.0, %v397
  %399 = vmatmul.bf16.gmra.mxu0 %v138
  %v400 = vpop.f32.mrf.mxu0
  %v401 = vadd.f32 0.0, %v400
  %v402 = vpop.f32.mrf.mxu0
  %v403 = vadd.f32 0.0, %v402
  %404 = vdwg.mxu0
  %405 = vmatpush.bf16.msra.mxu0 %v314
  %406 = vmatpush.bf16.msra.mxu0 %v313
  %407 = vmatpush.bf16.msra.mxu0 %v312
  %408 = vmatpush.bf16.msra.mxu0 %v311
  %409 = vmatpush.bf16.msra.mxu0 %v310
  %410 = vmatpush.bf16.msra.mxu0 %v309
  %411 = vmatpush.bf16.msra.mxu0 %v308
  %412 = vmatpush.bf16.msra.mxu0 %v307
  %413 = vmatmul.bf16.gmra.mxu0 %v134
  %v414 = vpop.f32.mrf.mxu0
  %v415 = vadd.f32 %v396, %v414
  %v416 = vpop.f32.mrf.mxu0
  %v417 = vadd.f32 %v398, %v416
  %418 = vmatmul.bf16.gmra.mxu0 %v139
  %v419 = vpop.f32.mrf.mxu0
  %v420 = vadd.f32 %v401, %v419
  %v421 = vpop.f32.mrf.mxu0
  %v422 = vadd.f32 %v403, %v421
  %423 = vdwg.mxu0
  %424 = vmatpush.bf16.msra.mxu0 %v322
  %425 = vmatpush.bf16.msra.mxu0 %v321
  %426 = vmatpush.bf16.msra.mxu0 %v320
  %427 = vmatpush.bf16.msra.mxu0 %v319
  %428 = vmatpush.bf16.msra.mxu0 %v318
  %429 = vmatpush.bf16.msra.mxu0 %v317
  %430 = vmatpush.bf16.msra.mxu0 %v316
  %431 = vmatpush.bf16.msra.mxu0 %v315
  %432 = vmatmul.bf16.gmra.mxu0 %v135
  %v433 = vpop.f32.mrf.mxu0
  %v434 = vadd.f32 %v415, %v433
  %v435 = vpop.f32.mrf.mxu0
  %v436 = vadd.f32 %v417, %v435
  %437 = vmatmul.bf16.gmra.mxu0 %v140
  %v438 = vpop.f32.mrf.mxu0
  %v439 = vadd.f32 %v420, %v438
  %v440 = vpop.f32.mrf.mxu0
  %v441 = vadd.f32 %v422, %v440
  %442 = vdwg.mxu0
  %443 = vmatpush.bf16.msra.mxu0 %v330
  %444 = vmatpush.bf16.msra.mxu0 %v329
  %445 = vmatpush.bf16.msra.mxu0 %v328
  %446 = vmatpush.bf16.msra.mxu0 %v327
  %447 = vmatpush.bf16.msra.mxu0 %v326
  %448 = vmatpush.bf16.msra.mxu0 %v325
  %449 = vmatpush.bf16.msra.mxu0 %v324
  %450 = vmatpush.bf16.msra.mxu0 %v323
  %451 = vmatmul.bf16.gmra.mxu0 %v136
  %v452 = vpop.f32.mrf.mxu0
  %v453 = vadd.f32 %v434, %v452
  %v454 = vpop.f32.mrf.mxu0
  %v455 = vadd.f32 %v436, %v454
  %456 = vmatmul.bf16.gmra.mxu0 %v141
  %v457 = vpop.f32.mrf.mxu0
  %v458 = vadd.f32 %v439, %v457
  %v459 = vpop.f32.mrf.mxu0
  %v460 = vadd.f32 %v441, %v459
  %461 = vdwg.mxu0
  %462 = vmatpush.bf16.msra.mxu0 0
  %463 = vmatpush.bf16.msra.mxu0 0
  %464 = vmatpush.bf16.msra.mxu0 0
  %465 = vmatpush.bf16.msra.mxu0 %v384
  %466 = vmatpush.bf16.msra.mxu0 %v334
  %467 = vmatpush.bf16.msra.mxu0 %v333
  %468 = vmatpush.bf16.msra.mxu0 %v332
  %469 = vmatpush.bf16.msra.mxu0 %v331
  %470 = vmatmul.bf16.gmra.mxu0 %v374
  %v471 = vpop.f32.mrf.mxu0
  %v472 = vadd.f32 %v453, %v471
  %v473 = vpop.f32.mrf.mxu0
  %v474 = vadd.f32 %v455, %v473
  %475 = vmatmul.bf16.gmra.mxu0 %v377
  %v476 = vpop.f32.mrf.mxu0
  %v477 = vadd.f32 %v458, %v476
  %v478 = vpop.f32.mrf.mxu0
  %v479 = vadd.f32 %v460, %v478
  %480 = vdwg.mxu0
  %v481 = vmul.f32 %v472, 0.04134491
  %v482 = vmul.f32 %v474, 0.04134491
  %v483 = vmul.f32 %v477, 0.04134491
  %v484 = vmul.f32 %v479, 0.04134491
  %v485 = vld [vmem:[%s2] sm:$0x1]
  %v487 = vperm.slane %v485, 0
  %v489 = vadd.f32 %v481, %v487
  %v490 = vadd.f32 %v482, %v487
  %v491 = vadd.f32 %v483, %v487
  %v492 = vadd.f32 %v484, %v487
  %vm493 = vcmp.ge.f32.partialorder %v489, 0.0
  %vm494 = vcmp.ge.f32.partialorder %v490, 0.0
  %vm495 = vcmp.ge.f32.partialorder %v491, 0.0
  %vm496 = vcmp.ge.f32.partialorder %v492, 0.0
  %v497 = vmul.f32 %v489, 0.2
  %v498 = vmul.f32 %v490, 0.2
  %v499 = vmul.f32 %v491, 0.2
  %v500 = vmul.f32 %v492, 0.2
  %v501 = vsel %vm493, %v489, %v497
  %v502 = vsel %vm494, %v490, %v498
  %v503 = vsel %vm495, %v491, %v499
  %v504 = vsel %vm496, %v492, %v500
  %v505 = vmul.f32 %v501, 1.4142135
  %v506 = vmul.f32 %v502, 1.4142135
  %v507 = vmul.f32 %v503, 1.4142135
  %v508 = vmul.f32 %v504, 1.4142135
  %v509 = vmax.f32 %v505, -256.0
  %v510 = vmax.f32 %v506, -256.0
  %v511 = vmax.f32 %v507, -256.0
  %v512 = vmax.f32 %v508, -256.0
  %v513 = vmin.f32 %v509, 256.0
  %v514 = vmin.f32 %v510, 256.0
  %v515 = vmin.f32 %v511, 256.0
  %v516 = vmin.f32 %v512, 256.0
  %vm517 = vcmask 523264
  %518 = vst.msk [vmem:[%s3] sm:$0xff] %vm517, %v513
  %519 = vst.msk [vmem:[%s3 + $0x8] sm:$0xff] %vm517, %v514
  %520 = vst.msk [vmem:[%s3 + $0x10] sm:$0xff] %vm517, %v515
  %521 = vst.msk [vmem:[%s3 + $0x18] sm:$0xff] %vm517, %v516
  // Predicated region
  $region14: #{run.18} parent=0 // pred_check
    _
  $region15: #{run.18} parent=0 // pred_check_branch
    %523 = sbr.rel (0) target = $region17
  $region16: #{run.18} parent=0 // pred_region
    _
  $region17: #{run.18} parent=0 // pred_fallthru
    _
  // Predicated region
  $region18: #{run.18} parent=0 // pred_check
    _
  $region19: #{run.18} parent=0 // pred_check_branch
    %525 = sbr.rel (0) target = $region21
  $region20: #{run.18} parent=0 // pred_region
    _
  $region21: #{run.18} parent=0 // pred_fallthru
    _

// kernel: run.17
$region0: #{run.17}
  #allocation0 [shape = 'u32[]', space=smem, size = 0x4, offset = 0x4, fixed_abs, tag = 'smem constant byte address 0x4 - core index']
  #allocation1 [shape = 'u32[72,128]{1,0:T(1,128)}', space=vmem, size = 0x9000, scoped, tag = 'internal scratch']
  %s0 = inlined_call_operand.vmem [shape: bf16[2,8], index: 0, kind: input, shape index: {}]
  %s1 = inlined_call_operand.vmem [shape: bf16[8,64], index: 1, kind: input, shape index: {}]
  %s2 = inlined_call_operand.vmem [shape: f32[1,64], index: 2, kind: input, shape index: {}]
  %s3 = inlined_call_operand.vmem [shape: bf16[8,64,64], index: 3, kind: input, shape index: {}]
  %s4 = inlined_call_operand.vmem [shape: f32[8,1,64], index: 4, kind: input, shape index: {}]
  %s5 = inlined_call_operand.vmem [shape: f32[2,64], index: 5, kind: output, shape index: {}]
  %s6 = sld [smem:[#allocation0]]
  $region30: #{run.17} parent=0
    _
  %s8 = ssub.s32 1, %s6
  %s9 = scalar_select 0, %s8, %s6
  // Predicated region
  $region2: #{run.17} parent=0 // pred_check
    _
  $region3: #{run.17} parent=0 // pred_check_branch
    %11 = sbr.rel (0) target = $region5
  $region4: #{run.17} parent=0 // pred_region
    _
  $region5: #{run.17} parent=0 // pred_fallthru
    _
  // Predicated region
  $region6: #{run.17} parent=0 // pred_check
    _
  $region7: #{run.17} parent=0 // pred_check_branch
    %13 = sbr.rel (0) target = $region9
  $region8: #{run.17} parent=0 // pred_region
    _
  $region9: #{run.17} parent=0 // pred_fallthru
    _
  // Predicated region
  $region10: #{run.17} parent=0 // pred_check
    _
  $region11: #{run.17} parent=0 // pred_check_branch
    %15 = sbr.rel (0) target = $region13
  $region12: #{run.17} parent=0 // pred_region
    _
  $region13: #{run.17} parent=0 // pred_fallthru
    _
  // Predicated region
  $region14: #{run.17} parent=0 // pred_check
    _
  $region15: #{run.17} parent=0 // pred_check_branch
    %17 = sbr.rel (0) target = $region17
  $region16: #{run.17} parent=0 // pred_region
    _
  $region17: #{run.17} parent=0 // pred_fallthru
    _
  // Predicated region
  $region18: #{run.17} parent=0 // pred_check
    _
  $region19: #{run.17} parent=0 // pred_check_branch
    %19 = sbr.rel (0) target = $region21
  $region20: #{run.17} parent=0 // pred_region
    _
  $region21: #{run.17} parent=0 // pred_fallthru
    _
  %v21 = vld [vmem:[%s0] sm:$0x1]
  %v22 = vld [vmem:[%s1] sm:$0xf]
  %vm23 = vcmask 64512
  %v25 = vsel %vm23, %v21, 0
  %vm27 = vcmask 1043456
  %v29 = vsel %vm27, %v22, 0
  %31 = vmatpush.bf16.msra.mxu0 0
  %32 = vmatpush.bf16.msra.mxu0 0
  %33 = vmatpush.bf16.msra.mxu0 0
  %34 = vmatpush.bf16.msra.mxu0 0
  %35 = vmatpush.bf16.msra.mxu0 0
  %36 = vmatpush.bf16.msra.mxu0 0
  %37 = vmatpush.bf16.msra.mxu0 0
  %38 = vmatpush.bf16.msra.mxu0 %v29
  %39 = vmatmul.bf16.gmra.mxu0 %v25
  %v40 = vpop.f32.mrf.mxu0
  %v41 = vadd.f32 0.0, %v40
  %v42 = vpop.f32.mrf.mxu0
  %43 = vdwg.mxu0
  %v44 = vmul.f32 %v41, 0.35355338
  %v45 = vld [vmem:[%s2] sm:$0x1]
  %v47 = vperm.slane %v45, 0
  %v49 = vadd.f32 %v44, %v47
  %v50 = vmul.f32 %v49, %v49
  %vm51 = vcmask 517120
  %v52 = vsel %vm51, %v50, 0.0
  %53 = vadd.xlane.f32.xlu0 %v52
  %v54 = vpop.xlane.xlu0 %53
  %v55 = vrcp.pop 64.0
  %v56 = vmul.f32 64.0, %v55
  %v57 = vsub.f32 1.0, %v56
  %v58 = vmul.f32 %v55, %v57
  %v59 = vadd.f32 %v55, %v58
  %vm60 = vweird.f32 %v55
  %v61 = vsel %vm60, %v55, %v59
  %v62 = vmul.f32 %v54, %v61
  %v63 = vadd.f32 %v62, 1e-08
  %v64 = vrsqrt.pop %v63
  %v65 = vmul.f32 %v64, %v63
  %v66 = vmul.f32 %v65, %v64
  %v67 = vmul.f32 0.5, %v66
  %v68 = vsub.f32 1.5, %v67
  %v69 = vmul.f32 %v64, %v68
  %vm70 = vweird.f32 %v63
  %vm71 = vweird.f32 %v64
  %vm72 = vmor %vm70, %vm71
  %v73 = vsel %vm72, %v64, %v69
  %v74 = vmul.f32 %v49, %v73
  %v75 = vpack.c.bf16 %v74, %v74
  %v76 = vld [vmem:[%s3] sm:$0xf]
  %v77 = vld [vmem:[%s3 + $0x4] sm:$0xf]
  %v78 = vld [vmem:[%s3 + $0x8] sm:$0xf]
  %v79 = vld [vmem:[%s3 + $0xc] sm:$0xf]
  %v80 = vld [vmem:[%s3 + $0x10] sm:$0xf]
  %v81 = vld [vmem:[%s3 + $0x14] sm:$0xf]
  %v82 = vld [vmem:[%s3 + $0x18] sm:$0xf]
  %v83 = vld [vmem:[%s3 + $0x1c] sm:$0xf]
  %v92 = vunpack.c.l.b16 %v76
  %v93 = vunpack.c.l.b16 %v77
  %v94 = vunpack.c.l.b16 %v78
  %v95 = vunpack.c.l.b16 %v79
  %v96 = vunpack.c.l.b16 %v80
  %v97 = vunpack.c.l.b16 %v81
  %v98 = vunpack.c.l.b16 %v82
  %v99 = vunpack.c.l.b16 %v83
  %v100 = vpack.c.b16 %v93, %v92
  %v101 = vpack.c.b16 %v95, %v94
  %v102 = vpack.c.b16 %v97, %v96
  %v103 = vpack.c.b16 %v99, %v98
  %vm108 = vcmask 523264
  %v110 = vsel %vm108, %v75, 0
  %112 = vmatpush.bf16.msra.mxu0 0
  %113 = vmatpush.bf16.msra.mxu0 0
  %114 = vmatpush.bf16.msra.mxu0 0
  %115 = vmatpush.bf16.msra.mxu0 0
  %116 = vmatpush.bf16.msra.mxu0 %v103
  %117 = vmatpush.bf16.msra.mxu0 %v102
  %118 = vmatpush.bf16.msra.mxu0 %v101
  %119 = vmatpush.bf16.msra.mxu0 %v100
  %120 = vmatmul.bf16.gmra.mxu0 %v110
  %v121 = vpop.f32.mrf.mxu0
  %v122 = vadd.f32 0.0, %v121
  %v123 = vpop.f32.mrf.mxu0
  %124 = vdwg.mxu0
  %v125 = vmul.f32 %v122, 0.125
  %v126 = vld [vmem:[%s4] sm:$0x1]
  %v128 = vperm.slane %v126, 0
  %v130 = vadd.f32 %v125, %v128
  %vm131 = vcmp.ge.f32.partialorder %v130, 0.0
  %v132 = vmul.f32 %v130, 0.2
  %v133 = vsel %vm131, %v130, %v132
  %v134 = vmul.f32 %v133, 1.4142135
  %v135 = vpack.c.bf16 %v134, %v134
  %s136 = scalar_lea.vmem %s3, 32
  %v137 = vld [vmem:[%s136] sm:$0xf]
  %v138 = vld [vmem:[%s136 + $0x4] sm:$0xf]
  %v139 = vld [vmem:[%s136 + $0x8] sm:$0xf]
  %v140 = vld [vmem:[%s136 + $0xc] sm:$0xf]
  %v141 = vld [vmem:[%s136 + $0x10] sm:$0xf]
  %v142 = vld [vmem:[%s136 + $0x14] sm:$0xf]
  %v143 = vld [vmem:[%s136 + $0x18] sm:$0xf]
  %v144 = vld [vmem:[%s136 + $0x1c] sm:$0xf]
  %v153 = vunpack.c.l.b16 %v137
  %v154 = vunpack.c.l.b16 %v138
  %v155 = vunpack.c.l.b16 %v139
  %v156 = vunpack.c.l.b16 %v140
  %v157 = vunpack.c.l.b16 %v141
  %v158 = vunpack.c.l.b16 %v142
  %v159 = vunpack.c.l.b16 %v143
  %v160 = vunpack.c.l.b16 %v144
  %v161 = vpack.c.b16 %v154, %v153
  %v162 = vpack.c.b16 %v156, %v155
  %v163 = vpack.c.b16 %v158, %v157
  %v164 = vpack.c.b16 %v160, %v159
  %v170 = vsel %vm108, %v135, 0
  %172 = vmatpush.bf16.msra.mxu0 0
  %173 = vmatpush.bf16.msra.mxu0 0
  %174 = vmatpush.bf16.msra.mxu0 0
  %175 = vmatpush.bf16.msra.mxu0 0
  %176 = vmatpush.bf16.msra.mxu0 %v164
  %177 = vmatpush.bf16.msra.mxu0 %v163
  %178 = vmatpush.bf16.msra.mxu0 %v162
  %179 = vmatpush.bf16.msra.mxu0 %v161
  %180 = vmatmul.bf16.gmra.mxu0 %v170
  %v181 = vpop.f32.mrf.mxu0
  %v182 = vadd.f32 0.0, %v181
  %v183 = vpop.f32.mrf.mxu0
  %184 = vdwg.mxu0
  %v185 = vmul.f32 %v182, 0.125
  %s186 = scalar_lea.vmem %s4, 1
  %v187 = vld [vmem:[%s186] sm:$0x1]
  %v189 = vperm.slane %v187, 0
  %v191 = vadd.f32 %v185, %v189
  %vm192 = vcmp.ge.f32.partialorder %v191, 0.0
  %v193 = vmul.f32 %v191, 0.2
  %v194 = vsel %vm192, %v191, %v193
  %v195 = vmul.f32 %v194, 1.4142135
  %v196 = vpack.c.bf16 %v195, %v195
  %s197 = scalar_lea.vmem %s3, 64
  %v198 = vld [vmem:[%s197] sm:$0xf]
  %v199 = vld [vmem:[%s197 + $0x4] sm:$0xf]
  %v200 = vld [vmem:[%s197 + $0x8] sm:$0xf]
  %v201 = vld [vmem:[%s197 + $0xc] sm:$0xf]
  %v202 = vld [vmem:[%s197 + $0x10] sm:$0xf]
  %v203 = vld [vmem:[%s197 + $0x14] sm:$0xf]
  %v204 = vld [vmem:[%s197 + $0x18] sm:$0xf]
  %v205 = vld [vmem:[%s197 + $0x1c] sm:$0xf]
  %v214 = vunpack.c.l.b16 %v198
  %v215 = vunpack.c.l.b16 %v199
  %v216 = vunpack.c.l.b16 %v200
  %v217 = vunpack.c.l.b16 %v201
  %v218 = vunpack.c.l.b16 %v202
  %v219 = vunpack.c.l.b16 %v203
  %v220 = vunpack.c.l.b16 %v204
  %v221 = vunpack.c.l.b16 %v205
  %v222 = vpack.c.b16 %v215, %v214
  %v223 = vpack.c.b16 %v217, %v216
  %v224 = vpack.c.b16 %v219, %v218
  %v225 = vpack.c.b16 %v221, %v220
  %v231 = vsel %vm108, %v196, 0
  %233 = vmatpush.bf16.msra.mxu0 0
  %234 = vmatpush.bf16.msra.mxu0 0
  %235 = vmatpush.bf16.msra.mxu0 0
  %236 = vmatpush.bf16.msra.mxu0 0
  %237 = vmatpush.bf16.msra.mxu0 %v225
  %238 = vmatpush.bf16.msra.mxu0 %v224
  %239 = vmatpush.bf16.msra.mxu0 %v223
  %240 = vmatpush.bf16.msra.mxu0 %v222
  %241 = vmatmul.bf16.gmra.mxu0 %v231
  %v242 = vpop.f32.mrf.mxu0
  %v243 = vadd.f32 0.0, %v242
  %v244 = vpop.f32.mrf.mxu0
  %245 = vdwg.mxu0
  %v246 = vmul.f32 %v243, 0.125
  %s247 = scalar_lea.vmem %s4, 2
  %v248 = vld [vmem:[%s247] sm:$0x1]
  %v250 = vperm.slane %v248, 0
  %v252 = vadd.f32 %v246, %v250
  %vm253 = vcmp.ge.f32.partialorder %v252, 0.0
  %v254 = vmul.f32 %v252, 0.2
  %v255 = vsel %vm253, %v252, %v254
  %v256 = vmul.f32 %v255, 1.4142135
  %v257 = vpack.c.bf16 %v256, %v256
  %s258 = scalar_lea.vmem %s3, 96
  %v259 = vld [vmem:[%s258] sm:$0xf]
  %v260 = vld [vmem:[%s258 + $0x4] sm:$0xf]
  %v261 = vld [vmem:[%s258 + $0x8] sm:$0xf]
  %v262 = vld [vmem:[%s258 + $0xc] sm:$0xf]
  %v263 = vld [vmem:[%s258 + $0x10] sm:$0xf]
  %v264 = vld [vmem:[%s258 + $0x14] sm:$0xf]
  %v265 = vld [vmem:[%s258 + $0x18] sm:$0xf]
  %v266 = vld [vmem:[%s258 + $0x1c] sm:$0xf]
  %v275 = vunpack.c.l.b16 %v259
  %v276 = vunpack.c.l.b16 %v260
  %v277 = vunpack.c.l.b16 %v261
  %v278 = vunpack.c.l.b16 %v262
  %v279 = vunpack.c.l.b16 %v263
  %v280 = vunpack.c.l.b16 %v264
  %v281 = vunpack.c.l.b16 %v265
  %v282 = vunpack.c.l.b16 %v266
  %v283 = vpack.c.b16 %v276, %v275
  %v284 = vpack.c.b16 %v278, %v277
  %v285 = vpack.c.b16 %v280, %v279
  %v286 = vpack.c.b16 %v282, %v281
  %v292 = vsel %vm108, %v257, 0
  %294 = vmatpush.bf16.msra.mxu0 0
  %295 = vmatpush.bf16.msra.mxu0 0
  %296 = vmatpush.bf16.msra.mxu0 0
  %297 = vmatpush.bf16.msra.mxu0 0
  %298 = vmatpush.bf16.msra.mxu0 %v286
  %299 = vmatpush.bf16.msra.mxu0 %v285
  %300 = vmatpush.bf16.msra.mxu0 %v284
  %301 = vmatpush.bf16.msra.mxu0 %v283
  %302 = vmatmul.bf16.gmra.mxu0 %v292
  %v303 = vpop.f32.mrf.mxu0
  %v304 = vadd.f32 0.0, %v303
  %v305 = vpop.f32.mrf.mxu0
  %306 = vdwg.mxu0
  %v307 = vmul.f32 %v304, 0.125
  %s308 = scalar_lea.vmem %s4, 3
  %v309 = vld [vmem:[%s308] sm:$0x1]
  %v311 = vperm.slane %v309, 0
  %v313 = vadd.f32 %v307, %v311
  %vm314 = vcmp.ge.f32.partialorder %v313, 0.0
  %v315 = vmul.f32 %v313, 0.2
  %v316 = vsel %vm314, %v313, %v315
  %v317 = vmul.f32 %v316, 1.4142135
  %v318 = vpack.c.bf16 %v317, %v317
  %s319 = scalar_lea.vmem %s3, 128
  %v320 = vld [vmem:[%s319] sm:$0xf]
  %v321 = vld [vmem:[%s319 + $0x4] sm:$0xf]
  %v322 = vld [vmem:[%s319 + $0x8] sm:$0xf]
  %v323 = vld [vmem:[%s319 + $0xc] sm:$0xf]
  %v324 = vld [vmem:[%s319 + $0x10] sm:$0xf]
  %v325 = vld [vmem:[%s319 + $0x14] sm:$0xf]
  %v326 = vld [vmem:[%s319 + $0x18] sm:$0xf]
  %v327 = vld [vmem:[%s319 + $0x1c] sm:$0xf]
  %v336 = vunpack.c.l.b16 %v320
  %v337 = vunpack.c.l.b16 %v321
  %v338 = vunpack.c.l.b16 %v322
  %v339 = vunpack.c.l.b16 %v323
  %v340 = vunpack.c.l.b16 %v324
  %v341 = vunpack.c.l.b16 %v325
  %v342 = vunpack.c.l.b16 %v326
  %v343 = vunpack.c.l.b16 %v327
  %v344 = vpack.c.b16 %v337, %v336
  %v345 = vpack.c.b16 %v339, %v338
  %v346 = vpack.c.b16 %v341, %v340
  %v347 = vpack.c.b16 %v343, %v342
  %v353 = vsel %vm108, %v318, 0
  %355 = vmatpush.bf16.msra.mxu0 0
  %356 = vmatpush.bf16.msra.mxu0 0
  %357 = vmatpush.bf16.msra.mxu0 0
  %358 = vmatpush.bf16.msra.mxu0 0
  %359 = vmatpush.bf16.msra.mxu0 %v347
  %360 = vmatpush.bf16.msra.mxu0 %v346
  %361 = vmatpush.bf16.msra.mxu0 %v345
  %362 = vmatpush.bf16.msra.mxu0 %v344
  %363 = vmatmul.bf16.gmra.mxu0 %v353
  %v364 = vpop.f32.mrf.mxu0
  %v365 = vadd.f32 0.0, %v364
  %v366 = vpop.f32.mrf.mxu0
  %367 = vdwg.mxu0
  %v368 = vmul.f32 %v365, 0.125
  %s369 = scalar_lea.vmem %s4, 4
  %v370 = vld [vmem:[%s369] sm:$0x1]
  %v372 = vperm.slane %v370, 0
  %v374 = vadd.f32 %v368, %v372
  %vm375 = vcmp.ge.f32.partialorder %v374, 0.0
  %v376 = vmul.f32 %v374, 0.2
  %v377 = vsel %vm375, %v374, %v376
  %v378 = vmul.f32 %v377, 1.4142135
  %v379 = vpack.c.bf16 %v378, %v378
  %s380 = scalar_lea.vmem %s3, 160
  %v381 = vld [vmem:[%s380] sm:$0xf]
  %v382 = vld [vmem:[%s380 + $0x4] sm:$0xf]
  %v383 = vld [vmem:[%s380 + $0x8] sm:$0xf]
  %v384 = vld [vmem:[%s380 + $0xc] sm:$0xf]
  %v385 = vld [vmem:[%s380 + $0x10] sm:$0xf]
  %v386 = vld [vmem:[%s380 + $0x14] sm:$0xf]
  %v387 = vld [vmem:[%s380 + $0x18] sm:$0xf]
  %v388 = vld [vmem:[%s380 + $0x1c] sm:$0xf]
  %v397 = vunpack.c.l.b16 %v381
  %v398 = vunpack.c.l.b16 %v382
  %v399 = vunpack.c.l.b16 %v383
  %v400 = vunpack.c.l.b16 %v384
  %v401 = vunpack.c.l.b16 %v385
  %v402 = vunpack.c.l.b16 %v386
  %v403 = vunpack.c.l.b16 %v387
  %v404 = vunpack.c.l.b16 %v388
  %v405 = vpack.c.b16 %v398, %v397
  %v406 = vpack.c.b16 %v400, %v399
  %v407 = vpack.c.b16 %v402, %v401
  %v408 = vpack.c.b16 %v404, %v403
  %v414 = vsel %vm108, %v379, 0
  %416 = vmatpush.bf16.msra.mxu0 0
  %417 = vmatpush.bf16.msra.mxu0 0
  %418 = vmatpush.bf16.msra.mxu0 0
  %419 = vmatpush.bf16.msra.mxu0 0
  %420 = vmatpush.bf16.msra.mxu0 %v408
  %421 = vmatpush.bf16.msra.mxu0 %v407
  %422 = vmatpush.bf16.msra.mxu0 %v406
  %423 = vmatpush.bf16.msra.mxu0 %v405
  %424 = vmatmul.bf16.gmra.mxu0 %v414
  %v425 = vpop.f32.mrf.mxu0
  %v426 = vadd.f32 0.0, %v425
  %v427 = vpop.f32.mrf.mxu0
  %428 = vdwg.mxu0
  %v429 = vmul.f32 %v426, 0.125
  %s430 = scalar_lea.vmem %s4, 5
  %v431 = vld [vmem:[%s430] sm:$0x1]
  %v433 = vperm.slane %v431, 0
  %v435 = vadd.f32 %v429, %v433
  %vm436 = vcmp.ge.f32.partialorder %v435, 0.0
  %v437 = vmul.f32 %v435, 0.2
  %v438 = vsel %vm436, %v435, %v437
  %v439 = vmul.f32 %v438, 1.4142135
  %v440 = vpack.c.bf16 %v439, %v439
  %s441 = scalar_lea.vmem %s3, 192
  %v442 = vld [vmem:[%s441] sm:$0xf]
  %v443 = vld [vmem:[%s441 + $0x4] sm:$0xf]
  %v444 = vld [vmem:[%s441 + $0x8] sm:$0xf]
  %v445 = vld [vmem:[%s441 + $0xc] sm:$0xf]
  %v446 = vld [vmem:[%s441 + $0x10] sm:$0xf]
  %v447 = vld [vmem:[%s441 + $0x14] sm:$0xf]
  %v448 = vld [vmem:[%s441 + $0x18] sm:$0xf]
  %v449 = vld [vmem:[%s441 + $0x1c] sm:$0xf]
  %v458 = vunpack.c.l.b16 %v442
  %v459 = vunpack.c.l.b16 %v443
  %v460 = vunpack.c.l.b16 %v444
  %v461 = vunpack.c.l.b16 %v445
  %v462 = vunpack.c.l.b16 %v446
  %v463 = vunpack.c.l.b16 %v447
  %v464 = vunpack.c.l.b16 %v448
  %v465 = vunpack.c.l.b16 %v449
  %v466 = vpack.c.b16 %v459, %v458
  %v467 = vpack.c.b16 %v461, %v460
  %v468 = vpack.c.b16 %v463, %v462
  %v469 = vpack.c.b16 %v465, %v464
  %v475 = vsel %vm108, %v440, 0
  %477 = vmatpush.bf16.msra.mxu0 0
  %478 = vmatpush.bf16.msra.mxu0 0
  %479 = vmatpush.bf16.msra.mxu0 0
  %480 = vmatpush.bf16.msra.mxu0 0
  %481 = vmatpush.bf16.msra.mxu0 %v469
  %482 = vmatpush.bf16.msra.mxu0 %v468
  %483 = vmatpush.bf16.msra.mxu0 %v467
  %484 = vmatpush.bf16.msra.mxu0 %v466
  %485 = vmatmul.bf16.gmra.mxu0 %v475
  %v486 = vpop.f32.mrf.mxu0
  %v487 = vadd.f32 0.0, %v486
  %v488 = vpop.f32.mrf.mxu0
  %489 = vdwg.mxu0
  %v490 = vmul.f32 %v487, 0.125
  %s491 = scalar_lea.vmem %s4, 6
  %v492 = vld [vmem:[%s491] sm:$0x1]
  %v494 = vperm.slane %v492, 0
  %v496 = vadd.f32 %v490, %v494
  %vm497 = vcmp.ge.f32.partialorder %v496, 0.0
  %v498 = vmul.f32 %v496, 0.2
  %v499 = vsel %vm497, %v496, %v498
  %v500 = vmul.f32 %v499, 1.4142135
  %v501 = vpack.c.bf16 %v500, %v500
  %s502 = scalar_lea.vmem %s3, 224
  %v503 = vld [vmem:[%s502] sm:$0xf]
  %v504 = vld [vmem:[%s502 + $0x4] sm:$0xf]
  %v505 = vld [vmem:[%s502 + $0x8] sm:$0xf]
  %v506 = vld [vmem:[%s502 + $0xc] sm:$0xf]
  %v507 = vld [vmem:[%s502 + $0x10] sm:$0xf]
  %v508 = vld [vmem:[%s502 + $0x14] sm:$0xf]
  %v509 = vld [vmem:[%s502 + $0x18] sm:$0xf]
  %v510 = vld [vmem:[%s502 + $0x1c] sm:$0xf]
  %v519 = vunpack.c.l.b16 %v503
  %v520 = vunpack.c.l.b16 %v504
  %v521 = vunpack.c.l.b16 %v505
  %v522 = vunpack.c.l.b16 %v506
  %v523 = vunpack.c.l.b16 %v507
  %v524 = vunpack.c.l.b16 %v508
  %v525 = vunpack.c.l.b16 %v509
  %v526 = vunpack.c.l.b16 %v510
  %v527 = vpack.c.b16 %v520, %v519
  %v528 = vpack.c.b16 %v522, %v521
  %v529 = vpack.c.b16 %v524, %v523
  %v530 = vpack.c.b16 %v526, %v525
  %v536 = vsel %vm108, %v501, 0
  %538 = vmatpush.bf16.msra.mxu0 0
  %539 = vmatpush.bf16.msra.mxu0 0
  %540 = vmatpush.bf16.msra.mxu0 0
  %541 = vmatpush.bf16.msra.mxu0 0
  %542 = vmatpush.bf16.msra.mxu0 %v530
  %543 = vmatpush.bf16.msra.mxu0 %v529
  %544 = vmatpush.bf16.msra.mxu0 %v528
  %545 = vmatpush.bf16.msra.mxu0 %v527
  %546 = vmatmul.bf16.gmra.mxu0 %v536
  %v547 = vpop.f32.mrf.mxu0
  %v548 = vadd.f32 0.0, %v547
  %v549 = vpop.f32.mrf.mxu0
  %550 = vdwg.mxu0
  %v551 = vmul.f32 %v548, 0.125
  %s552 = scalar_lea.vmem %s4, 7
  %v553 = vld [vmem:[%s552] sm:$0x1]
  %v555 = vperm.slane %v553, 0
  %v557 = vadd.f32 %v551, %v555
  %vm558 = vcmp.ge.f32.partialorder %v557, 0.0
  %v559 = vmul.f32 %v557, 0.2
  %v560 = vsel %vm558, %v557, %v559
  %v561 = vmul.f32 %v560, 1.4142135
  %562 = vst.msk [vmem:[%s5] sm:$0x3] %vm51, %v561
  // Predicated region
  $region22: #{run.17} parent=0 // pred_check
    _
  $region23: #{run.17} parent=0 // pred_check_branch
    %564 = sbr.rel (0) target = $region25
  $region24: #{run.17} parent=0 // pred_region
    _
  $region25: #{run.17} parent=0 // pred_fallthru
    _
  // Predicated region
  $region26: #{run.17} parent=0 // pred_check
    _
  $region27: #{run.17} parent=0 // pred_check_branch
    %566 = sbr.rel (0) target = $region29
  $region28: #{run.17} parent=0 // pred_region
    _
  $region29: #{run.17} parent=0 // pred_fallthru
    _

// kernel: run.19
$region0: #{run.19}
  #allocation0 [shape = 'u32[]', space=smem, size = 0x4, offset = 0x4, fixed_abs, tag = 'smem constant byte address 0x4 - core index']
  #allocation1 [shape = 'u32[72,128]{1,0:T(1,128)}', space=vmem, size = 0x9000, scoped, tag = 'internal scratch']
  %s0 = inlined_call_operand.vmem [shape: bf16[2,1024], index: 0, kind: input, shape index: {}]
  %s1 = inlined_call_operand.vmem [shape: bf16[1024,64], index: 1, kind: input, shape index: {}]
  %s2 = inlined_call_operand.vmem [shape: f32[1,64], index: 2, kind: input, shape index: {}, may-alias: {2,4}]
  %s3 = inlined_call_operand.vmem [shape: bf16[64,64], index: 3, kind: input, shape index: {}]
  %s4 = inlined_call_operand.vmem [shape: f32[1,64], index: 4, kind: input, shape index: {}, may-alias: {2,4}]
  %s5 = inlined_call_operand.vmem [shape: f32[2,64], index: 5, kind: input, shape index: {}]
  %s6 = inlined_call_operand.vmem [shape: f32[2,1], index: 6, kind: output, shape index: {}]
  %s7 = sld [smem:[#allocation0]]
  $region34: #{run.19} parent=0
    _
  %s9 = ssub.s32 1, %s7
  %s10 = scalar_select 0, %s9, %s7
  // Predicated region
  $region2: #{run.19} parent=0 // pred_check
    _
  $region3: #{run.19} parent=0 // pred_check_branch
    %12 = sbr.rel (0) target = $region5
  $region4: #{run.19} parent=0 // pred_region
    _
  $region5: #{run.19} parent=0 // pred_fallthru
    _
  // Predicated region
  $region6: #{run.19} parent=0 // pred_check
    _
  $region7: #{run.19} parent=0 // pred_check_branch
    %14 = sbr.rel (0) target = $region9
  $region8: #{run.19} parent=0 // pred_region
    _
  $region9: #{run.19} parent=0 // pred_fallthru
    _
  // Predicated region
  $region10: #{run.19} parent=0 // pred_check
    _
  $region11: #{run.19} parent=0 // pred_check_branch
    %16 = sbr.rel (0) target = $region13
  $region12: #{run.19} parent=0 // pred_region
    _
  $region13: #{run.19} parent=0 // pred_fallthru
    _
  // Predicated region
  $region14: #{run.19} parent=0 // pred_check
    _
  $region15: #{run.19} parent=0 // pred_check_branch
    %18 = sbr.rel (0) target = $region17
  $region16: #{run.19} parent=0 // pred_region
    _
  $region17: #{run.19} parent=0 // pred_fallthru
    _
  // Predicated region
  $region18: #{run.19} parent=0 // pred_check
    _
  $region19: #{run.19} parent=0 // pred_check_branch
    %20 = sbr.rel (0) target = $region21
  $region20: #{run.19} parent=0 // pred_region
    _
  $region21: #{run.19} parent=0 // pred_fallthru
    _
  // Predicated region
  $region22: #{run.19} parent=0 // pred_check
    _
  $region23: #{run.19} parent=0 // pred_check_branch
    %22 = sbr.rel (0) target = $region25
  $region24: #{run.19} parent=0 // pred_region
    _
  $region25: #{run.19} parent=0 // pred_fallthru
    _
  %v24 = vld [vmem:[%s0] sm:$0xff]
  %v25 = vld [vmem:[%s1] sm:$0xf]
  %v26 = vld [vmem:[%s1 + $0x4] sm:$0xf]
  %v27 = vld [vmem:[%s1 + $0x8] sm:$0xf]
  %v28 = vld [vmem:[%s1 + $0xc] sm:$0xf]
  %v29 = vld [vmem:[%s1 + $0x10] sm:$0xf]
  %v30 = vld [vmem:[%s1 + $0x14] sm:$0xf]
  %v31 = vld [vmem:[%s1 + $0x18] sm:$0xf]
  %v32 = vld [vmem:[%s1 + $0x1c] sm:$0xf]
  %v33 = vld [vmem:[%s1 + $0x20] sm:$0xf]
  %v34 = vld [vmem:[%s1 + $0x24] sm:$0xf]
  %v35 = vld [vmem:[%s1 + $0x28] sm:$0xf]
  %v36 = vld [vmem:[%s1 + $0x2c] sm:$0xf]
  %v37 = vld [vmem:[%s1 + $0x30] sm:$0xf]
  %v38 = vld [vmem:[%s1 + $0x34] sm:$0xf]
  %v39 = vld [vmem:[%s1 + $0x38] sm:$0xf]
  %v40 = vld [vmem:[%s1 + $0x3c] sm:$0xf]
  %v41 = vld [vmem:[%s1 + $0x40] sm:$0xf]
  %v42 = vld [vmem:[%s1 + $0x44] sm:$0xf]
  %v43 = vld [vmem:[%s1 + $0x48] sm:$0xf]
  %v44 = vld [vmem:[%s1 + $0x4c] sm:$0xf]
  %v45 = vld [vmem:[%s1 + $0x50] sm:$0xf]
  %v46 = vld [vmem:[%s1 + $0x54] sm:$0xf]
  %v47 = vld [vmem:[%s1 + $0x58] sm:$0xf]
  %v48 = vld [vmem:[%s1 + $0x5c] sm:$0xf]
  %v49 = vld [vmem:[%s1 + $0x60] sm:$0xf]
  %v50 = vld [vmem:[%s1 + $0x64] sm:$0xf]
  %v51 = vld [vmem:[%s1 + $0x68] sm:$0xf]
  %v52 = vld [vmem:[%s1 + $0x6c] sm:$0xf]
  %v53 = vld [vmem:[%s1 + $0x70] sm:$0xf]
  %v54 = vld [vmem:[%s1 + $0x74] sm:$0xf]
  %v55 = vld [vmem:[%s1 + $0x78] sm:$0xf]
  %v56 = vld [vmem:[%s1 + $0x7c] sm:$0xf]
  %v57 = vld [vmem:[%s1 + $0x80] sm:$0xf]
  %v58 = vld [vmem:[%s1 + $0x84] sm:$0xf]
  %v59 = vld [vmem:[%s1 + $0x88] sm:$0xf]
  %v60 = vld [vmem:[%s1 + $0x8c] sm:$0xf]
  %v61 = vld [vmem:[%s1 + $0x90] sm:$0xf]
  %v62 = vld [vmem:[%s1 + $0x94] sm:$0xf]
  %v63 = vld [vmem:[%s1 + $0x98] sm:$0xf]
  %v64 = vld [vmem:[%s1 + $0x9c] sm:$0xf]
  %v65 = vld [vmem:[%s1 + $0xa0] sm:$0xf]
  %v66 = vld [vmem:[%s1 + $0xa4] sm:$0xf]
  %v67 = vld [vmem:[%s1 + $0xa8] sm:$0xf]
  %v68 = vld [vmem:[%s1 + $0xac] sm:$0xf]
  %v69 = vld [vmem:[%s1 + $0xb0] sm:$0xf]
  %v70 = vld [vmem:[%s1 + $0xb4] sm:$0xf]
  %v71 = vld [vmem:[%s1 + $0xb8] sm:$0xf]
  %v72 = vld [vmem:[%s1 + $0xbc] sm:$0xf]
  %v73 = vld [vmem:[%s1 + $0xc0] sm:$0xf]
  %v74 = vld [vmem:[%s1 + $0xc4] sm:$0xf]
  %v75 = vld [vmem:[%s1 + $0xc8] sm:$0xf]
  %v76 = vld [vmem:[%s1 + $0xcc] sm:$0xf]
  %v77 = vld [vmem:[%s1 + $0xd0] sm:$0xf]
  %v78 = vld [vmem:[%s1 + $0xd4] sm:$0xf]
  %v79 = vld [vmem:[%s1 + $0xd8] sm:$0xf]
  %v80 = vld [vmem:[%s1 + $0xdc] sm:$0xf]
  %v81 = vld [vmem:[%s1 + $0xe0] sm:$0xf]
  %v82 = vld [vmem:[%s1 + $0xe4] sm:$0xf]
  %v83 = vld [vmem:[%s1 + $0xe8] sm:$0xf]
  %v84 = vld [vmem:[%s1 + $0xec] sm:$0xf]
  %v85 = vld [vmem:[%s1 + $0xf0] sm:$0xf]
  %v86 = vld [vmem:[%s1 + $0xf4] sm:$0xf]
  %v87 = vld [vmem:[%s1 + $0xf8] sm:$0xf]
  %v88 = vld [vmem:[%s1 + $0xfc] sm:$0xf]
  %v89 = vld [vmem:[%s1 + $0x100] sm:$0xf]
  %v90 = vld [vmem:[%s1 + $0x104] sm:$0xf]
  %v91 = vld [vmem:[%s1 + $0x108] sm:$0xf]
  %v92 = vld [vmem:[%s1 + $0x10c] sm:$0xf]
  %v93 = vld [vmem:[%s1 + $0x110] sm:$0xf]
  %v94 = vld [vmem:[%s1 + $0x114] sm:$0xf]
  %v95 = vld [vmem:[%s1 + $0x118] sm:$0xf]
  %v96 = vld [vmem:[%s1 + $0x11c] sm:$0xf]
  %v97 = vld [vmem:[%s1 + $0x120] sm:$0xf]
  %v98 = vld [vmem:[%s1 + $0x124] sm:$0xf]
  %v99 = vld [vmem:[%s1 + $0x128] sm:$0xf]
  %v100 = vld [vmem:[%s1 + $0x12c] sm:$0xf]
  %v101 = vld [vmem:[%s1 + $0x130] sm:$0xf]
  %v102 = vld [vmem:[%s1 + $0x134] sm:$0xf]
  %v103 = vld [vmem:[%s1 + $0x138] sm:$0xf]
  %v104 = vld [vmem:[%s1 + $0x13c] sm:$0xf]
  %v105 = vld [vmem:[%s1 + $0x140] sm:$0xf]
  %v106 = vld [vmem:[%s1 + $0x144] sm:$0xf]
  %v107 = vld [vmem:[%s1 + $0x148] sm:$0xf]
  %v108 = vld [vmem:[%s1 + $0x14c] sm:$0xf]
  %v109 = vld [vmem:[%s1 + $0x150] sm:$0xf]
  %v110 = vld [vmem:[%s1 + $0x154] sm:$0xf]
  %v111 = vld [vmem:[%s1 + $0x158] sm:$0xf]
  %v112 = vld [vmem:[%s1 + $0x15c] sm:$0xf]
  %v113 = vld [vmem:[%s1 + $0x160] sm:$0xf]
  %v114 = vld [vmem:[%s1 + $0x164] sm:$0xf]
  %v115 = vld [vmem:[%s1 + $0x168] sm:$0xf]
  %v116 = vld [vmem:[%s1 + $0x16c] sm:$0xf]
  %v117 = vld [vmem:[%s1 + $0x170] sm:$0xf]
  %v118 = vld [vmem:[%s1 + $0x174] sm:$0xf]
  %v119 = vld [vmem:[%s1 + $0x178] sm:$0xf]
  %v120 = vld [vmem:[%s1 + $0x17c] sm:$0xf]
  %v121 = vld [vmem:[%s1 + $0x180] sm:$0xf]
  %v122 = vld [vmem:[%s1 + $0x184] sm:$0xf]
  %v123 = vld [vmem:[%s1 + $0x188] sm:$0xf]
  %v124 = vld [vmem:[%s1 + $0x18c] sm:$0xf]
  %v125 = vld [vmem:[%s1 + $0x190] sm:$0xf]
  %v126 = vld [vmem:[%s1 + $0x194] sm:$0xf]
  %v127 = vld [vmem:[%s1 + $0x198] sm:$0xf]
  %v128 = vld [vmem:[%s1 + $0x19c] sm:$0xf]
  %v129 = vld [vmem:[%s1 + $0x1a0] sm:$0xf]
  %v130 = vld [vmem:[%s1 + $0x1a4] sm:$0xf]
  %v131 = vld [vmem:[%s1 + $0x1a8] sm:$0xf]
  %v132 = vld [vmem:[%s1 + $0x1ac] sm:$0xf]
  %v133 = vld [vmem:[%s1 + $0x1b0] sm:$0xf]
  %v134 = vld [vmem:[%s1 + $0x1b4] sm:$0xf]
  %v135 = vld [vmem:[%s1 + $0x1b8] sm:$0xf]
  %v136 = vld [vmem:[%s1 + $0x1bc] sm:$0xf]
  %v137 = vld [vmem:[%s1 + $0x1c0] sm:$0xf]
  %v138 = vld [vmem:[%s1 + $0x1c4] sm:$0xf]
  %v139 = vld [vmem:[%s1 + $0x1c8] sm:$0xf]
  %v140 = vld [vmem:[%s1 + $0x1cc] sm:$0xf]
  %v141 = vld [vmem:[%s1 + $0x1d0] sm:$0xf]
  %v142 = vld [vmem:[%s1 + $0x1d4] sm:$0xf]
  %v143 = vld [vmem:[%s1 + $0x1d8] sm:$0xf]
  %v144 = vld [vmem:[%s1 + $0x1dc] sm:$0xf]
  %v145 = vld [vmem:[%s1 + $0x1e0] sm:$0xf]
  %v146 = vld [vmem:[%s1 + $0x1e4] sm:$0xf]
  %v147 = vld [vmem:[%s1 + $0x1e8] sm:$0xf]
  %v148 = vld [vmem:[%s1 + $0x1ec] sm:$0xf]
  %v149 = vld [vmem:[%s1 + $0x1f0] sm:$0xf]
  %v150 = vld [vmem:[%s1 + $0x1f4] sm:$0xf]
  %v151 = vld [vmem:[%s1 + $0x1f8] sm:$0xf]
  %v152 = vld [vmem:[%s1 + $0x1fc] sm:$0xf]
  %154 = vst [vmem:[#allocation1] ss:$9 sm:$0xff] %v24
  %v155 = vld [vmem:[#allocation1] sm:$0xff]
  %v156 = vld [vmem:[#allocation1 + $0x9] sm:$0xff]
  %v157 = vld [vmem:[#allocation1 + $0x12] sm:$0xff]
  %v158 = vld [vmem:[#allocation1 + $0x1b] sm:$0xff]
  %v159 = vld [vmem:[#allocation1 + $0x24] sm:$0xff]
  %v160 = vld [vmem:[#allocation1 + $0x2d] sm:$0xff]
  %v161 = vld [vmem:[#allocation1 + $0x36] sm:$0xff]
  %v162 = vld [vmem:[#allocation1 + $0x3f] sm:$0xff]
  %v299 = vunpack.c.l.b16 %v25
  %v300 = vunpack.c.l.b16 %v26
  %v301 = vunpack.c.l.b16 %v27
  %v302 = vunpack.c.l.b16 %v28
  %v303 = vunpack.c.l.b16 %v29
  %v304 = vunpack.c.l.b16 %v30
  %v305 = vunpack.c.l.b16 %v31
  %v306 = vunpack.c.l.b16 %v32
  %v307 = vunpack.c.l.b16 %v33
  %v308 = vunpack.c.l.b16 %v34
  %v309 = vunpack.c.l.b16 %v35
  %v310 = vunpack.c.l.b16 %v36
  %v311 = vunpack.c.l.b16 %v37
  %v312 = vunpack.c.l.b16 %v38
  %v313 = vunpack.c.l.b16 %v39
  %v314 = vunpack.c.l.b16 %v40
  %v315 = vunpack.c.l.b16 %v41
  %v316 = vunpack.c.l.b16 %v42
  %v317 = vunpack.c.l.b16 %v43
  %v318 = vunpack.c.l.b16 %v44
  %v319 = vunpack.c.l.b16 %v45
  %v320 = vunpack.c.l.b16 %v46
  %v321 = vunpack.c.l.b16 %v47
  %v322 = vunpack.c.l.b16 %v48
  %v323 = vunpack.c.l.b16 %v49
  %v324 = vunpack.c.l.b16 %v50
  %v325 = vunpack.c.l.b16 %v51
  %v326 = vunpack.c.l.b16 %v52
  %v327 = vunpack.c.l.b16 %v53
  %v328 = vunpack.c.l.b16 %v54
  %v329 = vunpack.c.l.b16 %v55
  %v330 = vunpack.c.l.b16 %v56
  %v331 = vunpack.c.l.b16 %v57
  %v332 = vunpack.c.l.b16 %v58
  %v333 = vunpack.c.l.b16 %v59
  %v334 = vunpack.c.l.b16 %v60
  %v335 = vunpack.c.l.b16 %v61
  %v336 = vunpack.c.l.b16 %v62
  %v337 = vunpack.c.l.b16 %v63
  %v338 = vunpack.c.l.b16 %v64
  %v339 = vunpack.c.l.b16 %v65
  %v340 = vunpack.c.l.b16 %v66
  %v341 = vunpack.c.l.b16 %v67
  %v342 = vunpack.c.l.b16 %v68
  %v343 = vunpack.c.l.b16 %v69
  %v344 = vunpack.c.l.b16 %v70
  %v345 = vunpack.c.l.b16 %v71
  %v346 = vunpack.c.l.b16 %v72
  %v347 = vunpack.c.l.b16 %v73
  %v348 = vunpack.c.l.b16 %v74
  %v349 = vunpack.c.l.b16 %v75
  %v350 = vunpack.c.l.b16 %v76
  %v351 = vunpack.c.l.b16 %v77
  %v352 = vunpack.c.l.b16 %v78
  %v353 = vunpack.c.l.b16 %v79
  %v354 = vunpack.c.l.b16 %v80
  %v355 = vunpack.c.l.b16 %v81
  %v356 = vunpack.c.l.b16 %v82
  %v357 = vunpack.c.l.b16 %v83
  %v358 = vunpack.c.l.b16 %v84
  %v359 = vunpack.c.l.b16 %v85
  %v360 = vunpack.c.l.b16 %v86
  %v361 = vunpack.c.l.b16 %v87
  %v362 = vunpack.c.l.b16 %v88
  %v363 = vunpack.c.l.b16 %v89
  %v364 = vunpack.c.l.b16 %v90
  %v365 = vunpack.c.l.b16 %v91
  %v366 = vunpack.c.l.b16 %v92
  %v367 = vunpack.c.l.b16 %v93
  %v368 = vunpack.c.l.b16 %v94
  %v369 = vunpack.c.l.b16 %v95
  %v370 = vunpack.c.l.b16 %v96
  %v371 = vunpack.c.l.b16 %v97
  %v372 = vunpack.c.l.b16 %v98
  %v373 = vunpack.c.l.b16 %v99
  %v374 = vunpack.c.l.b16 %v100
  %v375 = vunpack.c.l.b16 %v101
  %v376 = vunpack.c.l.b16 %v102
  %v377 = vunpack.c.l.b16 %v103
  %v378 = vunpack.c.l.b16 %v104
  %v379 = vunpack.c.l.b16 %v105
  %v380 = vunpack.c.l.b16 %v106
  %v381 = vunpack.c.l.b16 %v107
  %v382 = vunpack.c.l.b16 %v108
  %v383 = vunpack.c.l.b16 %v109
  %v384 = vunpack.c.l.b16 %v110
  %v385 = vunpack.c.l.b16 %v111
  %v386 = vunpack.c.l.b16 %v112
  %v387 = vunpack.c.l.b16 %v113
  %v388 = vunpack.c.l.b16 %v114
  %v389 = vunpack.c.l.b16 %v115
  %v390 = vunpack.c.l.b16 %v116
  %v391 = vunpack.c.l.b16 %v117
  %v392 = vunpack.c.l.b16 %v118
  %v393 = vunpack.c.l.b16 %v119
  %v394 = vunpack.c.l.b16 %v120
  %v395 = vunpack.c.l.b16 %v121
  %v396 = vunpack.c.l.b16 %v122
  %v397 = vunpack.c.l.b16 %v123
  %v398 = vunpack.c.l.b16 %v124
  %v399 = vunpack.c.l.b16 %v125
  %v400 = vunpack.c.l.b16 %v126
  %v401 = vunpack.c.l.b16 %v127
  %v402 = vunpack.c.l.b16 %v128
  %v403 = vunpack.c.l.b16 %v129
  %v404 = vunpack.c.l.b16 %v130
  %v405 = vunpack.c.l.b16 %v131
  %v406 = vunpack.c.l.b16 %v132
  %v407 = vunpack.c.l.b16 %v133
  %v408 = vunpack.c.l.b16 %v134
  %v409 = vunpack.c.l.b16 %v135
  %v410 = vunpack.c.l.b16 %v136
  %v411 = vunpack.c.l.b16 %v137
  %v412 = vunpack.c.l.b16 %v138
  %v413 = vunpack.c.l.b16 %v139
  %v414 = vunpack.c.l.b16 %v140
  %v415 = vunpack.c.l.b16 %v141
  %v416 = vunpack.c.l.b16 %v142
  %v417 = vunpack.c.l.b16 %v143
  %v418 = vunpack.c.l.b16 %v144
  %v419 = vunpack.c.l.b16 %v145
  %v420 = vunpack.c.l.b16 %v146
  %v421 = vunpack.c.l.b16 %v147
  %v422 = vunpack.c.l.b16 %v148
  %v423 = vunpack.c.l.b16 %v149
  %v424 = vunpack.c.l.b16 %v150
  %v425 = vunpack.c.l.b16 %v151
  %v426 = vunpack.c.l.b16 %v152
  %v427 = vpack.c.b16 %v300, %v299
  %v428 = vpack.c.b16 %v302, %v301
  %v429 = vpack.c.b16 %v304, %v303
  %v430 = vpack.c.b16 %v306, %v305
  %v431 = vpack.c.b16 %v308, %v307
  %v432 = vpack.c.b16 %v310, %v309
  %v433 = vpack.c.b16 %v312, %v311
  %v434 = vpack.c.b16 %v314, %v313
  %v435 = vpack.c.b16 %v316, %v315
  %v436 = vpack.c.b16 %v318, %v317
  %v437 = vpack.c.b16 %v320, %v319
  %v438 = vpack.c.b16 %v322, %v321
  %v439 = vpack.c.b16 %v324, %v323
  %v440 = vpack.c.b16 %v326, %v325
  %v441 = vpack.c.b16 %v328, %v327
  %v442 = vpack.c.b16 %v330, %v329
  %v443 = vpack.c.b16 %v332, %v331
  %v444 = vpack.c.b16 %v334, %v333
  %v445 = vpack.c.b16 %v336, %v335
  %v446 = vpack.c.b16 %v338, %v337
  %v447 = vpack.c.b16 %v340, %v339
  %v448 = vpack.c.b16 %v342, %v341
  %v449 = vpack.c.b16 %v344, %v343
  %v450 = vpack.c.b16 %v346, %v345
  %v451 = vpack.c.b16 %v348, %v347
  %v452 = vpack.c.b16 %v350, %v349
  %v453 = vpack.c.b16 %v352, %v351
  %v454 = vpack.c.b16 %v354, %v353
  %v455 = vpack.c.b16 %v356, %v355
  %v456 = vpack.c.b16 %v358, %v357
  %v457 = vpack.c.b16 %v360, %v359
  %v458 = vpack.c.b16 %v362, %v361
  %v459 = vpack.c.b16 %v364, %v363
  %v460 = vpack.c.b16 %v366, %v365
  %v461 = vpack.c.b16 %v368, %v367
  %v462 = vpack.c.b16 %v370, %v369
  %v463 = vpack.c.b16 %v372, %v371
  %v464 = vpack.c.b16 %v374, %v373
  %v465 = vpack.c.b16 %v376, %v375
  %v466 = vpack.c.b16 %v378, %v377
  %v467 = vpack.c.b16 %v380, %v379
  %v468 = vpack.c.b16 %v382, %v381
  %v469 = vpack.c.b16 %v384, %v383
  %v470 = vpack.c.b16 %v386, %v385
  %v471 = vpack.c.b16 %v388, %v387
  %v472 = vpack.c.b16 %v390, %v389
  %v473 = vpack.c.b16 %v392, %v391
  %v474 = vpack.c.b16 %v394, %v393
  %v475 = vpack.c.b16 %v396, %v395
  %v476 = vpack.c.b16 %v398, %v397
  %v477 = vpack.c.b16 %v400, %v399
  %v478 = vpack.c.b16 %v402, %v401
  %v479 = vpack.c.b16 %v404, %v403
  %v480 = vpack.c.b16 %v406, %v405
  %v481 = vpack.c.b16 %v408, %v407
  %v482 = vpack.c.b16 %v410, %v409
  %v483 = vpack.c.b16 %v412, %v411
  %v484 = vpack.c.b16 %v414, %v413
  %v485 = vpack.c.b16 %v416, %v415
  %v486 = vpack.c.b16 %v418, %v417
  %v487 = vpack.c.b16 %v420, %v419
  %v488 = vpack.c.b16 %v422, %v421
  %v489 = vpack.c.b16 %v424, %v423
  %v490 = vpack.c.b16 %v426, %v425
  %555 = vmatpush.bf16.msra.mxu0 %v434
  %556 = vmatpush.bf16.msra.mxu0 %v433
  %557 = vmatpush.bf16.msra.mxu0 %v432
  %558 = vmatpush.bf16.msra.mxu0 %v431
  %559 = vmatpush.bf16.msra.mxu0 %v430
  %560 = vmatpush.bf16.msra.mxu0 %v429
  %561 = vmatpush.bf16.msra.mxu0 %v428
  %562 = vmatpush.bf16.msra.mxu0 %v427
  %563 = vmatmul.bf16.gmra.mxu0 %v155
  %v564 = vpop.f32.mrf.mxu0
  %v565 = vadd.f32 0.0, %v564
  %v566 = vpop.f32.mrf.mxu0
  %567 = vdwg.mxu0
  %568 = vmatpush.bf16.msra.mxu0 %v442
  %569 = vmatpush.bf16.msra.mxu0 %v441
  %570 = vmatpush.bf16.msra.mxu0 %v440
  %571 = vmatpush.bf16.msra.mxu0 %v439
  %572 = vmatpush.bf16.msra.mxu0 %v438
  %573 = vmatpush.bf16.msra.mxu0 %v437
  %574 = vmatpush.bf16.msra.mxu0 %v436
  %575 = vmatpush.bf16.msra.mxu0 %v435
  %576 = vmatmul.bf16.gmra.mxu0 %v156
  %v577 = vpop.f32.mrf.mxu0
  %v578 = vadd.f32 %v565, %v577
  %v579 = vpop.f32.mrf.mxu0
  %580 = vdwg.mxu0
  %581 = vmatpush.bf16.msra.mxu0 %v450
  %582 = vmatpush.bf16.msra.mxu0 %v449
  %583 = vmatpush.bf16.msra.mxu0 %v448
  %584 = vmatpush.bf16.msra.mxu0 %v447
  %585 = vmatpush.bf16.msra.mxu0 %v446
  %586 = vmatpush.bf16.msra.mxu0 %v445
  %587 = vmatpush.bf16.msra.mxu0 %v444
  %588 = vmatpush.bf16.msra.mxu0 %v443
  %589 = vmatmul.bf16.gmra.mxu0 %v157
  %v590 = vpop.f32.mrf.mxu0
  %v591 = vadd.f32 %v578, %v590
  %v592 = vpop.f32.mrf.mxu0
  %593 = vdwg.mxu0
  %594 = vmatpush.bf16.msra.mxu0 %v458
  %595 = vmatpush.bf16.msra.mxu0 %v457
  %596 = vmatpush.bf16.msra.mxu0 %v456
  %597 = vmatpush.bf16.msra.mxu0 %v455
  %598 = vmatpush.bf16.msra.mxu0 %v454
  %599 = vmatpush.bf16.msra.mxu0 %v453
  %600 = vmatpush.bf16.msra.mxu0 %v452
  %601 = vmatpush.bf16.msra.mxu0 %v451
  %602 = vmatmul.bf16.gmra.mxu0 %v158
  %v603 = vpop.f32.mrf.mxu0
  %v604 = vadd.f32 %v591, %v603
  %v605 = vpop.f32.mrf.mxu0
  %606 = vdwg.mxu0
  %607 = vmatpush.bf16.msra.mxu0 %v466
  %608 = vmatpush.bf16.msra.mxu0 %v465
  %609 = vmatpush.bf16.msra.mxu0 %v464
  %610 = vmatpush.bf16.msra.mxu0 %v463
  %611 = vmatpush.bf16.msra.mxu0 %v462
  %612 = vmatpush.bf16.msra.mxu0 %v461
  %613 = vmatpush.bf16.msra.mxu0 %v460
  %614 = vmatpush.bf16.msra.mxu0 %v459
  %615 = vmatmul.bf16.gmra.mxu0 %v159
  %v616 = vpop.f32.mrf.mxu0
  %v617 = vadd.f32 %v604, %v616
  %v618 = vpop.f32.mrf.mxu0
  %619 = vdwg.mxu0
  %620 = vmatpush.bf16.msra.mxu0 %v474
  %621 = vmatpush.bf16.msra.mxu0 %v473
  %622 = vmatpush.bf16.msra.mxu0 %v472
  %623 = vmatpush.bf16.msra.mxu0 %v471
  %624 = vmatpush.bf16.msra.mxu0 %v470
  %625 = vmatpush.bf16.msra.mxu0 %v469
  %626 = vmatpush.bf16.msra.mxu0 %v468
  %627 = vmatpush.bf16.msra.mxu0 %v467
  %628 = vmatmul.bf16.gmra.mxu0 %v160
  %v629 = vpop.f32.mrf.mxu0
  %v630 = vadd.f32 %v617, %v629
  %v631 = vpop.f32.mrf.mxu0
  %632 = vdwg.mxu0
  %633 = vmatpush.bf16.msra.mxu0 %v482
  %634 = vmatpush.bf16.msra.mxu0 %v481
  %635 = vmatpush.bf16.msra.mxu0 %v480
  %636 = vmatpush.bf16.msra.mxu0 %v479
  %637 = vmatpush.bf16.msra.mxu0 %v478
  %638 = vmatpush.bf16.msra.mxu0 %v477
  %639 = vmatpush.bf16.msra.mxu0 %v476
  %640 = vmatpush.bf16.msra.mxu0 %v475
  %641 = vmatmul.bf16.gmra.mxu0 %v161
  %v642 = vpop.f32.mrf.mxu0
  %v643 = vadd.f32 %v630, %v642
  %v644 = vpop.f32.mrf.mxu0
  %645 = vdwg.mxu0
  %646 = vmatpush.bf16.msra.mxu0 %v490
  %647 = vmatpush.bf16.msra.mxu0 %v489
  %648 = vmatpush.bf16.msra.mxu0 %v488
  %649 = vmatpush.bf16.msra.mxu0 %v487
  %650 = vmatpush.bf16.msra.mxu0 %v486
  %651 = vmatpush.bf16.msra.mxu0 %v485
  %652 = vmatpush.bf16.msra.mxu0 %v484
  %653 = vmatpush.bf16.msra.mxu0 %v483
  %654 = vmatmul.bf16.gmra.mxu0 %v162
  %v655 = vpop.f32.mrf.mxu0
  %v656 = vadd.f32 %v643, %v655
  %v657 = vpop.f32.mrf.mxu0
  %658 = vdwg.mxu0
  %v659 = vmul.f32 %v656, 0.03125
  %v660 = vld [vmem:[%s2] sm:$0x1]
  %v662 = vperm.slane %v660, 0
  %v664 = vadd.f32 %v659, %v662
  %vm665 = vcmp.ge.f32.partialorder %v664, 0.0
  %v666 = vmul.f32 %v664, 0.2
  %v667 = vsel %vm665, %v664, %v666
  %v668 = vmul.f32 %v667, 1.4142135
  %v669 = vpack.c.bf16 %v668, %v668
  %v670 = vld [vmem:[%s3] sm:$0xf]
  %v671 = vld [vmem:[%s3 + $0x4] sm:$0xf]
  %v672 = vld [vmem:[%s3 + $0x8] sm:$0xf]
  %v673 = vld [vmem:[%s3 + $0xc] sm:$0xf]
  %v674 = vld [vmem:[%s3 + $0x10] sm:$0xf]
  %v675 = vld [vmem:[%s3 + $0x14] sm:$0xf]
  %v676 = vld [vmem:[%s3 + $0x18] sm:$0xf]
  %v677 = vld [vmem:[%s3 + $0x1c] sm:$0xf]
  %v686 = vunpack.c.l.b16 %v670
  %v687 = vunpack.c.l.b16 %v671
  %v688 = vunpack.c.l.b16 %v672
  %v689 = vunpack.c.l.b16 %v673
  %v690 = vunpack.c.l.b16 %v674
  %v691 = vunpack.c.l.b16 %v675
  %v692 = vunpack.c.l.b16 %v676
  %v693 = vunpack.c.l.b16 %v677
  %v694 = vpack.c.b16 %v687, %v686
  %v695 = vpack.c.b16 %v689, %v688
  %v696 = vpack.c.b16 %v691, %v690
  %v697 = vpack.c.b16 %v693, %v692
  %vm702 = vcmask 523264
  %v704 = vsel %vm702, %v669, 0
  %706 = vmatpush.bf16.msra.mxu0 0
  %707 = vmatpush.bf16.msra.mxu0 0
  %708 = vmatpush.bf16.msra.mxu0 0
  %709 = vmatpush.bf16.msra.mxu0 0
  %710 = vmatpush.bf16.msra.mxu0 %v697
  %711 = vmatpush.bf16.msra.mxu0 %v696
  %712 = vmatpush.bf16.msra.mxu0 %v695
  %713 = vmatpush.bf16.msra.mxu0 %v694
  %714 = vmatmul.bf16.gmra.mxu0 %v704
  %v715 = vpop.f32.mrf.mxu0
  %v716 = vadd.f32 0.0, %v715
  %v717 = vpop.f32.mrf.mxu0
  %718 = vdwg.mxu0
  %v719 = vmul.f32 %v716, 0.125
  %v720 = vld [vmem:[%s4] sm:$0x1]
  %v722 = vperm.slane %v720, 0
  %v724 = vadd.f32 %v719, %v722
  %v725 = vld [vmem:[%s5] sm:$0x3]
  %v726 = vmul.f32 %v724, %v725
  %vm727 = vcmask 517120
  %v728 = vsel %vm727, %v726, 0.0
  %729 = vadd.xlane.f32.xlu0 %v728
  %v730 = vpop.xlane.xlu0 %729
  %v731 = vmul.f32 %v730, 0.125
  %vm732 = vcmask 1024
  %733 = vst.msk [vmem:[%s6] sm:$0x3] %vm732, %v731
  // Predicated region
  $region26: #{run.19} parent=0 // pred_check
    _
  $region27: #{run.19} parent=0 // pred_check_branch
    %735 = sbr.rel (0) target = $region29
  $region28: #{run.19} parent=0 // pred_region
    _
  $region29: #{run.19} parent=0 // pred_fallthru
    _
  // Predicated region
  $region30: #{run.19} parent=0 // pred_check
    _
  $region31: #{run.19} parent=0 // pred_check_branch
    %737 = sbr.rel (0) target = $region33
  $region32: #{run.19} parent=0 // pred_region
    _
  $region33: #{run.19} parent=0 // pred_fallthru
    _

</llo_original>
